<compile_context>
chip_gen: v7x
topology: tpu7x:2x2x1
jax: 0.10.0
libtpu: 0.0.40
codegen_flags: <defaults>
</compile_context>

<pallas_src>
import functools

import jax
import jax.numpy as jnp
from jax.experimental import pallas as pl
from jax.experimental.pallas import tpu as pltpu


def _round_up(n, m):
    return ((n + m - 1) // m) * m


def _fold_conv3d_weights(w3, b3, cm, cm_pad):
    """Fold Conv3d(1->d, 3x3x3, pad=1) into 9 per-(kh,kw) matmul blocks.

    The depth axis of the 3-D conv runs over the Cm channels of the conv1
    output.  For output channel c' = dd*Cm + co (the index produced by
    `view(b, d*Cm, h, w)` in the PyTorch module) and spatial tap (kh, kw), the
    effective weight against input channel ci is
        W3[dd, 0, ci - co + 1, kh, kw]   (zero when the depth tap is out of
                                          range, i.e. the depth zero-padding).
    Returns:
      w3_taps: [9, d*Cm, cm_pad]   (tap index t = kh*3 + kw; ci zero-padded)
      b3_col : [d*Cm, 1]
    """
    d = w3.shape[0]
    nc = d * cm
    w3c = w3[:, 0]                                    # [dd, kd, kh, kw]
    w3t = jnp.transpose(w3c, (1, 2, 3, 0))            # [kd, kh, kw, dd]
    ci = jnp.arange(cm)[:, None]                      # input depth index
    co = jnp.arange(cm)[None, :]                      # output depth slot
    kd = ci - co + 1                                  # depth tap, valid in [0,3)
    valid = ((kd >= 0) & (kd < 3)).astype(w3.dtype)   # [ci, co]
    g = w3t[jnp.clip(kd, 0, 2)]                       # [ci, co, kh, kw, dd]
    g = g * valid[:, :, None, None, None]
    w3_taps = jnp.transpose(g, (2, 3, 4, 1, 0)).reshape(9, nc, cm)
    w3_taps = jnp.pad(w3_taps, ((0, 0), (0, 0), (0, cm_pad - cm)))
    b3_col = jnp.repeat(b3, cm).reshape(nc, 1)        # bias per c' = dd*Cm + co
    return w3_taps, b3_col


def unpack_layer_conv3d(x, params, *, kernel_size, r, d):
    """Forward pass of UnpackLayerConv3d.  x: [B, Cin, H, W] (NCHW), float32."""
    B, Cin, H, W = x.shape
    k = kernel_size
    p = k // 2
    w1 = params["conv_w"]            # [Cm, Cin, k, k]
    gamma = params["bn_gamma"]       # [Cm]
    beta = params["bn_beta"]         # [Cm]
    w3 = params["conv3d_w"]          # [d, 1, 3, 3, 3]
    b3 = params["conv3d_b"]          # [d]
    Cm = w1.shape[0]
    NC = d * Cm
    out_ch = NC // (r * r)
    M = B * H * W                    # lane axis of every kernel tensor (512)
    CMP = _round_up(Cm, 8)           # sublane-pad intermediate channels
    CINP = _round_up(Cin, 8)         # sublane-pad input channels

    # ---- static tap metadata shared by host prep and the traced kernel ------
    offs1 = [(kh - p, kw - p) for kh in range(k) for kw in range(k)]
    offs3 = [(kh - 1, kw - 1) for kh in range(3) for kw in range(3)]
    all_offs = sorted(set(offs1) | set(offs3))
    off_idx = {o: i for i, o in enumerate(all_offs)}
    n_off = len(all_offs)

    # ---- tiny host-side layout prep (weights + one transpose of x) ----------
    x_cm = jnp.transpose(x, (1, 0, 2, 3)).reshape(Cin, M)        # [Cin, M]
    x_cm = jnp.pad(x_cm, ((0, CINP - Cin), (0, 0)))
    w1_taps = jnp.transpose(w1, (2, 3, 0, 1)).reshape(k * k, Cm, Cin)
    w1_taps = jnp.pad(w1_taps, ((0, 0), (0, CMP - Cm), (0, CINP - Cin)))
    gamma_c = jnp.pad(gamma.reshape(Cm, 1), ((0, CMP - Cm), (0, 0)))
    beta_c = jnp.pad(beta.reshape(Cm, 1), ((0, CMP - Cm), (0, 0)))
    w3_taps, b3_col = _fold_conv3d_weights(w3, b3, Cm, CMP)

    # {0,1} halo masks (the conv zero-padding), one [1, M] row per distinct
    # (dh, dw) tap offset.  Shape-only, so XLA constant-folds them.
    m_ids = jnp.arange(M)
    h_flat = (m_ids // W) % H
    w_flat = m_ids % W
    mask_rows = [((h_flat + dh >= 0) & (h_flat + dh < H) &
                  (w_flat + dw >= 0) & (w_flat + dw < W))
                 for (dh, dw) in all_offs]
    mask_arr = jnp.stack(mask_rows).astype(jnp.float32).reshape(n_off, 1, M)

    def kernel(x_ref, w1_ref, g_ref, bt_ref, w3_ref, b3_ref, m_ref, o_ref):
        def shifted(a, dh, dw):
            # a[c, (b,h,w)] -> a[c, (b, h+dh, w+dw)] with zero halo.  The lane
            # roll uses the XLU slot; the halo mask is a cheap VPU multiply.
            if dh == 0 and dw == 0:
                return a
            s = (-(dh * W + dw)) % M
            a_s = pltpu.roll(a, shift=s, axis=1) if s else a
            return a_s * m_ref[off_idx[(dh, dw)]]

        # ---- conv1: per-tap accumulated matmuls, lane-dense [CMP, M] --------
        x_v = x_ref[...]
        y = jnp.zeros((CMP, M), jnp.float32)
        for kh in range(k):
            for kw in range(k):
                y = y + jnp.dot(w1_ref[kh * k + kw],
                                shifted(x_v, kh - p, kw - p),
                                preferred_element_type=jnp.float32)

        # ---- BatchNorm2d (training-mode batch stats over M) + ReLU ----------
        mean = jnp.mean(y, axis=1, keepdims=True)                 # [CMP, 1]
        var = jnp.mean((y - mean) * (y - mean), axis=1, keepdims=True)
        scale = jax.lax.rsqrt(var + 1e-5) * g_ref[...]
        yn = jnp.maximum((y - mean) * scale + bt_ref[...], 0.0)   # [CMP, M]

        # ---- Conv3d folded into 9 per-(kh,kw) matmuls (depth folded on host)
        z = jnp.zeros((NC, M), jnp.float32)
        for kh in range(3):
            for kw in range(3):
                z = z + jnp.dot(w3_ref[kh * 3 + kw],
                                shifted(yn, kh - 1, kw - 1),
                                preferred_element_type=jnp.float32)
        o_ref[...] = (z + b3_ref[...]).astype(o_ref.dtype)        # [NC, M]

    zz = pl.pallas_call(
        kernel,
        out_shape=jax.ShapeDtypeStruct((NC, M), jnp.float32),
        grid=(1,),
        in_specs=[
            pl.BlockSpec((CINP, M), lambda i: (0, 0)),
            pl.BlockSpec((k * k, CMP, CINP), lambda i: (0, 0, 0)),
            pl.BlockSpec((CMP, 1), lambda i: (0, 0)),
            pl.BlockSpec((CMP, 1), lambda i: (0, 0)),
            pl.BlockSpec((9, NC, CMP), lambda i: (0, 0, 0)),
            pl.BlockSpec((NC, 1), lambda i: (0, 0)),
            pl.BlockSpec((n_off, 1, M), lambda i: (0, 0, 0)),
        ],
        out_specs=pl.BlockSpec((NC, M), lambda i: (0, 0)),
        compiler_params=pltpu.CompilerParams(
            dimension_semantics=("arbitrary",)),
    )(x_cm, w1_taps, gamma_c, beta_c, w3_taps, b3_col, mask_arr)

    # ---- view(B, d*Cm, H, W) + PixelShuffle(r): pure reshape/transpose of the
    #      output-sized [NC, M] result; left to XLA (no large intermediate).
    out = zz.reshape(out_ch, r, r, B, H, W)           # [c, i, j, b, h, w]
    out = jnp.transpose(out, (3, 0, 4, 1, 5, 2))      # [b, c, h, i, w, j]
    return out.reshape(B, out_ch, H * r, W * r)


def reference(x, params, *, kernel_size, r, d):
    """Pure-XLA reference with identical semantics (correctness check only)."""
    k = kernel_size
    p = k // 2
    hi = jax.lax.Precision.HIGHEST
    y = jax.lax.conv_general_dilated(
        x, params["conv_w"], window_strides=(1, 1), padding=((p, p), (p, p)),
        dimension_numbers=("NCHW", "OIHW", "NCHW"), precision=hi)
    mean = jnp.mean(y, axis=(0, 2, 3), keepdims=True)
    var = jnp.mean((y - mean) ** 2, axis=(0, 2, 3), keepdims=True)
    y = (y - mean) * jax.lax.rsqrt(var + 1e-5)
    y = y * params["bn_gamma"][None, :, None, None] \
        + params["bn_beta"][None, :, None, None]
    y = jnp.maximum(y, 0.0)
    v = y[:, None]                                               # [B,1,Cm,H,W]
    z = jax.lax.conv_general_dilated(
        v, params["conv3d_w"], window_strides=(1, 1, 1),
        padding=((1, 1), (1, 1), (1, 1)),
        dimension_numbers=("NCDHW", "OIDHW", "NCDHW"), precision=hi)
    z = z + params["conv3d_b"][None, :, None, None, None]
    B, dd, Cm, H, W = z.shape
    z = z.reshape(B, dd * Cm, H, W)
    C = dd * Cm // (r * r)
    z = z.reshape(B, C, r, r, H, W).transpose(0, 1, 4, 2, 5, 3)
    return z.reshape(B, C, H * r, W * r)


if __name__ == "__main__":
    B, in_channels, H, W = 2, 4, 16, 16
    out_channels, kernel_size, r, d = 4, 3, 2, 8
    Cm = out_channels * r * r // d   # intermediate conv channels (= 2)

    key = jax.random.PRNGKey(0)
    k1, k2, k3, k4, k5, kx = jax.random.split(key, 6)
    params = {
        "conv_w": 0.1 * jax.random.normal(
            k1, (Cm, in_channels, kernel_size, kernel_size), jnp.float32),
        "bn_gamma": 1.0 + 0.1 * jax.random.normal(k2, (Cm,), jnp.float32),
        "bn_beta": 0.1 * jax.random.normal(k3, (Cm,), jnp.float32),
        "conv3d_w": 0.1 * jax.random.normal(k4, (d, 1, 3, 3, 3), jnp.float32),
        "conv3d_b": 0.1 * jax.random.normal(k5, (d,), jnp.float32),
    }
    x = jax.random.normal(kx, (B, in_channels, H, W), jnp.float32)

    fwd = jax.jit(functools.partial(unpack_layer_conv3d,
                                    kernel_size=kernel_size, r=r, d=d))
    out = jax.block_until_ready(fwd(x, params))
    assert out.shape == (B, out_channels, H * r, W * r), out.shape
    assert out.dtype == jnp.float32

    ref = jax.block_until_ready(
        reference(x, params, kernel_size=kernel_size, r=r, d=d))
    err = float(jnp.max(jnp.abs(out - ref)))
    assert err < 5e-2, f"max abs error vs reference: {err}"
    print("KERNEL_OK")
</pallas_src>

<mosaic_0001>
module attributes {stable_mosaic.version = 11 : i64} {
  func.func @kernel(%arg0: i32, %arg1: memref<8x512xf32, #tpu.memory_space<vmem>>, %arg2: memref<9x8x8xf32, #tpu.memory_space<vmem>>, %arg3: memref<8x1xf32, #tpu.memory_space<vmem>>, %arg4: memref<8x1xf32, #tpu.memory_space<vmem>>, %arg5: memref<9x16x8xf32, #tpu.memory_space<vmem>>, %arg6: memref<16x1xf32, #tpu.memory_space<vmem>>, %arg7: memref<9x1x512xf32, #tpu.memory_space<vmem>>, %arg8: memref<16x512xf32, #tpu.memory_space<vmem>>) attributes {dimension_semantics = [#tpu.dimension_semantics<arbitrary>], iteration_bounds = array<i64: 1>, scalar_prefetch = 0 : i64, scratch_operands = 0 : i64, tpu.core_type = #tpu.core_type<tc>, window_params = [{pipeline_mode = #tpu.pipeline_mode<synchronous>, transform_indices = @transform_0, window_bounds = array<i64: 8, 512>}, {pipeline_mode = #tpu.pipeline_mode<synchronous>, transform_indices = @transform_1, window_bounds = array<i64: 9, 8, 8>}, {pipeline_mode = #tpu.pipeline_mode<synchronous>, transform_indices = @transform_2, window_bounds = array<i64: 8, 1>}, {pipeline_mode = #tpu.pipeline_mode<synchronous>, transform_indices = @transform_3, window_bounds = array<i64: 8, 1>}, {pipeline_mode = #tpu.pipeline_mode<synchronous>, transform_indices = @transform_4, window_bounds = array<i64: 9, 16, 8>}, {pipeline_mode = #tpu.pipeline_mode<synchronous>, transform_indices = @transform_5, window_bounds = array<i64: 16, 1>}, {pipeline_mode = #tpu.pipeline_mode<synchronous>, transform_indices = @transform_6, window_bounds = array<i64: 9, 1, 512>}, {pipeline_mode = #tpu.pipeline_mode<synchronous>, transform_indices = @transform_7, window_bounds = array<i64: 16, 512>}]} {
    %c0 = arith.constant 0 : index
    %c0_0 = arith.constant 0 : index
    %0 = vector.load %arg1[%c0, %c0_0] : memref<8x512xf32, #tpu.memory_space<vmem>>, vector<8x512xf32>
    %cst = arith.constant 0.000000e+00 : f32
    %1 = vector.broadcast %cst : f32 to vector<8x512xf32>
    %c0_1 = arith.constant 0 : index
    %c0_2 = arith.constant 0 : index
    %c0_3 = arith.constant 0 : index
    %2 = vector.load %arg2[%c0_1, %c0_2, %c0_3] : memref<9x8x8xf32, #tpu.memory_space<vmem>>, vector<1x8x8xf32>
    %3 = vector.shape_cast %2 : vector<1x8x8xf32> to vector<8x8xf32>
    %c17_i32 = arith.constant 17 : i32
    %4 = tpu.dynamic_rotate %0 by %c17_i32 dim 1 : vector<8x512xf32>, i32 -> vector<8x512xf32>
    %c0_4 = arith.constant 0 : index
    %c0_5 = arith.constant 0 : index
    %c0_6 = arith.constant 0 : index
    %5 = vector.load %arg7[%c0_4, %c0_5, %c0_6] : memref<9x1x512xf32, #tpu.memory_space<vmem>>, vector<1x1x512xf32>
    %6 = vector.shape_cast %5 : vector<1x1x512xf32> to vector<1x512xf32>
    %7 = vector.broadcast %6 : vector<1x512xf32> to vector<8x512xf32>
    %8 = arith.mulf %4, %7 : vector<8x512xf32>
    %cst_7 = arith.constant dense<0.000000e+00> : vector<8x512xf32>
    %9 = tpu.matmul %3, %8, %cst_7 {dimension_numbers = #tpu.dot_dimension_numbers<[1], [0], [0], [1], [0, 0, 1, 1], [], []>} : vector<8x8xf32>, vector<8x512xf32>, vector<8x512xf32> -> vector<8x512xf32>
    %10 = arith.addf %1, %9 : vector<8x512xf32>
    %c1 = arith.constant 1 : index
    %c0_8 = arith.constant 0 : index
    %c0_9 = arith.constant 0 : index
    %11 = vector.load %arg2[%c1, %c0_8, %c0_9] : memref<9x8x8xf32, #tpu.memory_space<vmem>>, vector<1x8x8xf32>
    %12 = vector.shape_cast %11 : vector<1x8x8xf32> to vector<8x8xf32>
    %c16_i32 = arith.constant 16 : i32
    %13 = tpu.dynamic_rotate %0 by %c16_i32 dim 1 : vector<8x512xf32>, i32 -> vector<8x512xf32>
    %c1_10 = arith.constant 1 : index
    %c0_11 = arith.constant 0 : index
    %c0_12 = arith.constant 0 : index
    %14 = vector.load %arg7[%c1_10, %c0_11, %c0_12] : memref<9x1x512xf32, #tpu.memory_space<vmem>>, vector<1x1x512xf32>
    %15 = vector.shape_cast %14 : vector<1x1x512xf32> to vector<1x512xf32>
    %16 = vector.broadcast %15 : vector<1x512xf32> to vector<8x512xf32>
    %17 = arith.mulf %13, %16 : vector<8x512xf32>
    %cst_13 = arith.constant dense<0.000000e+00> : vector<8x512xf32>
    %18 = tpu.matmul %12, %17, %cst_13 {dimension_numbers = #tpu.dot_dimension_numbers<[1], [0], [0], [1], [0, 0, 1, 1], [], []>} : vector<8x8xf32>, vector<8x512xf32>, vector<8x512xf32> -> vector<8x512xf32>
    %19 = arith.addf %10, %18 : vector<8x512xf32>
    %c2 = arith.constant 2 : index
    %c0_14 = arith.constant 0 : index
    %c0_15 = arith.constant 0 : index
    %20 = vector.load %arg2[%c2, %c0_14, %c0_15] : memref<9x8x8xf32, #tpu.memory_space<vmem>>, vector<1x8x8xf32>
    %21 = vector.shape_cast %20 : vector<1x8x8xf32> to vector<8x8xf32>
    %c15_i32 = arith.constant 15 : i32
    %22 = tpu.dynamic_rotate %0 by %c15_i32 dim 1 : vector<8x512xf32>, i32 -> vector<8x512xf32>
    %c2_16 = arith.constant 2 : index
    %c0_17 = arith.constant 0 : index
    %c0_18 = arith.constant 0 : index
    %23 = vector.load %arg7[%c2_16, %c0_17, %c0_18] : memref<9x1x512xf32, #tpu.memory_space<vmem>>, vector<1x1x512xf32>
    %24 = vector.shape_cast %23 : vector<1x1x512xf32> to vector<1x512xf32>
    %25 = vector.broadcast %24 : vector<1x512xf32> to vector<8x512xf32>
    %26 = arith.mulf %22, %25 : vector<8x512xf32>
    %cst_19 = arith.constant dense<0.000000e+00> : vector<8x512xf32>
    %27 = tpu.matmul %21, %26, %cst_19 {dimension_numbers = #tpu.dot_dimension_numbers<[1], [0], [0], [1], [0, 0, 1, 1], [], []>} : vector<8x8xf32>, vector<8x512xf32>, vector<8x512xf32> -> vector<8x512xf32>
    %28 = arith.addf %19, %27 : vector<8x512xf32>
    %c3 = arith.constant 3 : index
    %c0_20 = arith.constant 0 : index
    %c0_21 = arith.constant 0 : index
    %29 = vector.load %arg2[%c3, %c0_20, %c0_21] : memref<9x8x8xf32, #tpu.memory_space<vmem>>, vector<1x8x8xf32>
    %30 = vector.shape_cast %29 : vector<1x8x8xf32> to vector<8x8xf32>
    %c1_i32 = arith.constant 1 : i32
    %31 = tpu.dynamic_rotate %0 by %c1_i32 dim 1 : vector<8x512xf32>, i32 -> vector<8x512xf32>
    %c3_22 = arith.constant 3 : index
    %c0_23 = arith.constant 0 : index
    %c0_24 = arith.constant 0 : index
    %32 = vector.load %arg7[%c3_22, %c0_23, %c0_24] : memref<9x1x512xf32, #tpu.memory_space<vmem>>, vector<1x1x512xf32>
    %33 = vector.shape_cast %32 : vector<1x1x512xf32> to vector<1x512xf32>
    %34 = vector.broadcast %33 : vector<1x512xf32> to vector<8x512xf32>
    %35 = arith.mulf %31, %34 : vector<8x512xf32>
    %cst_25 = arith.constant dense<0.000000e+00> : vector<8x512xf32>
    %36 = tpu.matmul %30, %35, %cst_25 {dimension_numbers = #tpu.dot_dimension_numbers<[1], [0], [0], [1], [0, 0, 1, 1], [], []>} : vector<8x8xf32>, vector<8x512xf32>, vector<8x512xf32> -> vector<8x512xf32>
    %37 = arith.addf %28, %36 : vector<8x512xf32>
    %c4 = arith.constant 4 : index
    %c0_26 = arith.constant 0 : index
    %c0_27 = arith.constant 0 : index
    %38 = vector.load %arg2[%c4, %c0_26, %c0_27] : memref<9x8x8xf32, #tpu.memory_space<vmem>>, vector<1x8x8xf32>
    %39 = vector.shape_cast %38 : vector<1x8x8xf32> to vector<8x8xf32>
    %cst_28 = arith.constant dense<0.000000e+00> : vector<8x512xf32>
    %40 = tpu.matmul %39, %0, %cst_28 {dimension_numbers = #tpu.dot_dimension_numbers<[1], [0], [0], [1], [0, 0, 1, 1], [], []>} : vector<8x8xf32>, vector<8x512xf32>, vector<8x512xf32> -> vector<8x512xf32>
    %41 = arith.addf %37, %40 : vector<8x512xf32>
    %c5 = arith.constant 5 : index
    %c0_29 = arith.constant 0 : index
    %c0_30 = arith.constant 0 : index
    %42 = vector.load %arg2[%c5, %c0_29, %c0_30] : memref<9x8x8xf32, #tpu.memory_space<vmem>>, vector<1x8x8xf32>
    %43 = vector.shape_cast %42 : vector<1x8x8xf32> to vector<8x8xf32>
    %c511_i32 = arith.constant 511 : i32
    %44 = tpu.dynamic_rotate %0 by %c511_i32 dim 1 : vector<8x512xf32>, i32 -> vector<8x512xf32>
    %c5_31 = arith.constant 5 : index
    %c0_32 = arith.constant 0 : index
    %c0_33 = arith.constant 0 : index
    %45 = vector.load %arg7[%c5_31, %c0_32, %c0_33] : memref<9x1x512xf32, #tpu.memory_space<vmem>>, vector<1x1x512xf32>
    %46 = vector.shape_cast %45 : vector<1x1x512xf32> to vector<1x512xf32>
    %47 = vector.broadcast %46 : vector<1x512xf32> to vector<8x512xf32>
    %48 = arith.mulf %44, %47 : vector<8x512xf32>
    %cst_34 = arith.constant dense<0.000000e+00> : vector<8x512xf32>
    %49 = tpu.matmul %43, %48, %cst_34 {dimension_numbers = #tpu.dot_dimension_numbers<[1], [0], [0], [1], [0, 0, 1, 1], [], []>} : vector<8x8xf32>, vector<8x512xf32>, vector<8x512xf32> -> vector<8x512xf32>
    %50 = arith.addf %41, %49 : vector<8x512xf32>
    %c6 = arith.constant 6 : index
    %c0_35 = arith.constant 0 : index
    %c0_36 = arith.constant 0 : index
    %51 = vector.load %arg2[%c6, %c0_35, %c0_36] : memref<9x8x8xf32, #tpu.memory_space<vmem>>, vector<1x8x8xf32>
    %52 = vector.shape_cast %51 : vector<1x8x8xf32> to vector<8x8xf32>
    %c497_i32 = arith.constant 497 : i32
    %53 = tpu.dynamic_rotate %0 by %c497_i32 dim 1 : vector<8x512xf32>, i32 -> vector<8x512xf32>
    %c6_37 = arith.constant 6 : index
    %c0_38 = arith.constant 0 : index
    %c0_39 = arith.constant 0 : index
    %54 = vector.load %arg7[%c6_37, %c0_38, %c0_39] : memref<9x1x512xf32, #tpu.memory_space<vmem>>, vector<1x1x512xf32>
    %55 = vector.shape_cast %54 : vector<1x1x512xf32> to vector<1x512xf32>
    %56 = vector.broadcast %55 : vector<1x512xf32> to vector<8x512xf32>
    %57 = arith.mulf %53, %56 : vector<8x512xf32>
    %cst_40 = arith.constant dense<0.000000e+00> : vector<8x512xf32>
    %58 = tpu.matmul %52, %57, %cst_40 {dimension_numbers = #tpu.dot_dimension_numbers<[1], [0], [0], [1], [0, 0, 1, 1], [], []>} : vector<8x8xf32>, vector<8x512xf32>, vector<8x512xf32> -> vector<8x512xf32>
    %59 = arith.addf %50, %58 : vector<8x512xf32>
    %c7 = arith.constant 7 : index
    %c0_41 = arith.constant 0 : index
    %c0_42 = arith.constant 0 : index
    %60 = vector.load %arg2[%c7, %c0_41, %c0_42] : memref<9x8x8xf32, #tpu.memory_space<vmem>>, vector<1x8x8xf32>
    %61 = vector.shape_cast %60 : vector<1x8x8xf32> to vector<8x8xf32>
    %c496_i32 = arith.constant 496 : i32
    %62 = tpu.dynamic_rotate %0 by %c496_i32 dim 1 : vector<8x512xf32>, i32 -> vector<8x512xf32>
    %c7_43 = arith.constant 7 : index
    %c0_44 = arith.constant 0 : index
    %c0_45 = arith.constant 0 : index
    %63 = vector.load %arg7[%c7_43, %c0_44, %c0_45] : memref<9x1x512xf32, #tpu.memory_space<vmem>>, vector<1x1x512xf32>
    %64 = vector.shape_cast %63 : vector<1x1x512xf32> to vector<1x512xf32>
    %65 = vector.broadcast %64 : vector<1x512xf32> to vector<8x512xf32>
    %66 = arith.mulf %62, %65 : vector<8x512xf32>
    %cst_46 = arith.constant dense<0.000000e+00> : vector<8x512xf32>
    %67 = tpu.matmul %61, %66, %cst_46 {dimension_numbers = #tpu.dot_dimension_numbers<[1], [0], [0], [1], [0, 0, 1, 1], [], []>} : vector<8x8xf32>, vector<8x512xf32>, vector<8x512xf32> -> vector<8x512xf32>
    %68 = arith.addf %59, %67 : vector<8x512xf32>
    %c8 = arith.constant 8 : index
    %c0_47 = arith.constant 0 : index
    %c0_48 = arith.constant 0 : index
    %69 = vector.load %arg2[%c8, %c0_47, %c0_48] : memref<9x8x8xf32, #tpu.memory_space<vmem>>, vector<1x8x8xf32>
    %70 = vector.shape_cast %69 : vector<1x8x8xf32> to vector<8x8xf32>
    %c495_i32 = arith.constant 495 : i32
    %71 = tpu.dynamic_rotate %0 by %c495_i32 dim 1 : vector<8x512xf32>, i32 -> vector<8x512xf32>
    %c8_49 = arith.constant 8 : index
    %c0_50 = arith.constant 0 : index
    %c0_51 = arith.constant 0 : index
    %72 = vector.load %arg7[%c8_49, %c0_50, %c0_51] : memref<9x1x512xf32, #tpu.memory_space<vmem>>, vector<1x1x512xf32>
    %73 = vector.shape_cast %72 : vector<1x1x512xf32> to vector<1x512xf32>
    %74 = vector.broadcast %73 : vector<1x512xf32> to vector<8x512xf32>
    %75 = arith.mulf %71, %74 : vector<8x512xf32>
    %cst_52 = arith.constant dense<0.000000e+00> : vector<8x512xf32>
    %76 = tpu.matmul %70, %75, %cst_52 {dimension_numbers = #tpu.dot_dimension_numbers<[1], [0], [0], [1], [0, 0, 1, 1], [], []>} : vector<8x8xf32>, vector<8x512xf32>, vector<8x512xf32> -> vector<8x512xf32>
    %77 = arith.addf %68, %76 : vector<8x512xf32>
    %cst_53 = arith.constant dense<0.000000e+00> : vector<8xf32>
    %78 = vector.multi_reduction <add>, %77, %cst_53 [1] : vector<8x512xf32> to vector<8xf32>
    %79 = vector.shape_cast %78 : vector<8xf32> to vector<8x1xf32>
    %cst_54 = arith.constant 5.120000e+02 : f32
    %80 = vector.broadcast %cst_54 : f32 to vector<8x1xf32>
    %81 = arith.divf %79, %80 : vector<8x1xf32>
    %82 = vector.broadcast %81 : vector<8x1xf32> to vector<8x512xf32>
    %83 = arith.subf %77, %82 : vector<8x512xf32>
    %84 = vector.broadcast %81 : vector<8x1xf32> to vector<8x512xf32>
    %85 = arith.subf %77, %84 : vector<8x512xf32>
    %86 = arith.mulf %83, %85 : vector<8x512xf32>
    %cst_55 = arith.constant dense<0.000000e+00> : vector<8xf32>
    %87 = vector.multi_reduction <add>, %86, %cst_55 [1] : vector<8x512xf32> to vector<8xf32>
    %88 = vector.shape_cast %87 : vector<8xf32> to vector<8x1xf32>
    %cst_56 = arith.constant 5.120000e+02 : f32
    %89 = vector.broadcast %cst_56 : f32 to vector<8x1xf32>
    %90 = arith.divf %88, %89 : vector<8x1xf32>
    %cst_57 = arith.constant 9.99999974E-6 : f32
    %91 = vector.broadcast %cst_57 : f32 to vector<8x1xf32>
    %92 = arith.addf %90, %91 : vector<8x1xf32>
    %93 = math.rsqrt %92 : vector<8x1xf32>
    %c0_58 = arith.constant 0 : index
    %c0_59 = arith.constant 0 : index
    %94 = vector.load %arg3[%c0_58, %c0_59] : memref<8x1xf32, #tpu.memory_space<vmem>>, vector<8x1xf32>
    %95 = arith.mulf %93, %94 : vector<8x1xf32>
    %96 = vector.broadcast %81 : vector<8x1xf32> to vector<8x512xf32>
    %97 = arith.subf %77, %96 : vector<8x512xf32>
    %98 = vector.broadcast %95 : vector<8x1xf32> to vector<8x512xf32>
    %99 = arith.mulf %97, %98 : vector<8x512xf32>
    %c0_60 = arith.constant 0 : index
    %c0_61 = arith.constant 0 : index
    %100 = vector.load %arg4[%c0_60, %c0_61] : memref<8x1xf32, #tpu.memory_space<vmem>>, vector<8x1xf32>
    %101 = vector.broadcast %100 : vector<8x1xf32> to vector<8x512xf32>
    %102 = arith.addf %99, %101 : vector<8x512xf32>
    %cst_62 = arith.constant 0.000000e+00 : f32
    %103 = vector.broadcast %cst_62 : f32 to vector<8x512xf32>
    %104 = arith.maximumf %102, %103 : vector<8x512xf32>
    %cst_63 = arith.constant 0.000000e+00 : f32
    %105 = vector.broadcast %cst_63 : f32 to vector<16x512xf32>
    %c0_64 = arith.constant 0 : index
    %c0_65 = arith.constant 0 : index
    %c0_66 = arith.constant 0 : index
    %106 = vector.load %arg5[%c0_64, %c0_65, %c0_66] : memref<9x16x8xf32, #tpu.memory_space<vmem>>, vector<1x16x8xf32>
    %107 = vector.shape_cast %106 : vector<1x16x8xf32> to vector<16x8xf32>
    %c17_i32_67 = arith.constant 17 : i32
    %108 = tpu.dynamic_rotate %104 by %c17_i32_67 dim 1 : vector<8x512xf32>, i32 -> vector<8x512xf32>
    %c0_68 = arith.constant 0 : index
    %c0_69 = arith.constant 0 : index
    %c0_70 = arith.constant 0 : index
    %109 = vector.load %arg7[%c0_68, %c0_69, %c0_70] : memref<9x1x512xf32, #tpu.memory_space<vmem>>, vector<1x1x512xf32>
    %110 = vector.shape_cast %109 : vector<1x1x512xf32> to vector<1x512xf32>
    %111 = vector.broadcast %110 : vector<1x512xf32> to vector<8x512xf32>
    %112 = arith.mulf %108, %111 : vector<8x512xf32>
    %cst_71 = arith.constant dense<0.000000e+00> : vector<16x512xf32>
    %113 = tpu.matmul %107, %112, %cst_71 {dimension_numbers = #tpu.dot_dimension_numbers<[1], [0], [0], [1], [0, 0, 1, 1], [], []>} : vector<16x8xf32>, vector<8x512xf32>, vector<16x512xf32> -> vector<16x512xf32>
    %114 = arith.addf %105, %113 : vector<16x512xf32>
    %c1_72 = arith.constant 1 : index
    %c0_73 = arith.constant 0 : index
    %c0_74 = arith.constant 0 : index
    %115 = vector.load %arg5[%c1_72, %c0_73, %c0_74] : memref<9x16x8xf32, #tpu.memory_space<vmem>>, vector<1x16x8xf32>
    %116 = vector.shape_cast %115 : vector<1x16x8xf32> to vector<16x8xf32>
    %c16_i32_75 = arith.constant 16 : i32
    %117 = tpu.dynamic_rotate %104 by %c16_i32_75 dim 1 : vector<8x512xf32>, i32 -> vector<8x512xf32>
    %c1_76 = arith.constant 1 : index
    %c0_77 = arith.constant 0 : index
    %c0_78 = arith.constant 0 : index
    %118 = vector.load %arg7[%c1_76, %c0_77, %c0_78] : memref<9x1x512xf32, #tpu.memory_space<vmem>>, vector<1x1x512xf32>
    %119 = vector.shape_cast %118 : vector<1x1x512xf32> to vector<1x512xf32>
    %120 = vector.broadcast %119 : vector<1x512xf32> to vector<8x512xf32>
    %121 = arith.mulf %117, %120 : vector<8x512xf32>
    %cst_79 = arith.constant dense<0.000000e+00> : vector<16x512xf32>
    %122 = tpu.matmul %116, %121, %cst_79 {dimension_numbers = #tpu.dot_dimension_numbers<[1], [0], [0], [1], [0, 0, 1, 1], [], []>} : vector<16x8xf32>, vector<8x512xf32>, vector<16x512xf32> -> vector<16x512xf32>
    %123 = arith.addf %114, %122 : vector<16x512xf32>
    %c2_80 = arith.constant 2 : index
    %c0_81 = arith.constant 0 : index
    %c0_82 = arith.constant 0 : index
    %124 = vector.load %arg5[%c2_80, %c0_81, %c0_82] : memref<9x16x8xf32, #tpu.memory_space<vmem>>, vector<1x16x8xf32>
    %125 = vector.shape_cast %124 : vector<1x16x8xf32> to vector<16x8xf32>
    %c15_i32_83 = arith.constant 15 : i32
    %126 = tpu.dynamic_rotate %104 by %c15_i32_83 dim 1 : vector<8x512xf32>, i32 -> vector<8x512xf32>
    %c2_84 = arith.constant 2 : index
    %c0_85 = arith.constant 0 : index
    %c0_86 = arith.constant 0 : index
    %127 = vector.load %arg7[%c2_84, %c0_85, %c0_86] : memref<9x1x512xf32, #tpu.memory_space<vmem>>, vector<1x1x512xf32>
    %128 = vector.shape_cast %127 : vector<1x1x512xf32> to vector<1x512xf32>
    %129 = vector.broadcast %128 : vector<1x512xf32> to vector<8x512xf32>
    %130 = arith.mulf %126, %129 : vector<8x512xf32>
    %cst_87 = arith.constant dense<0.000000e+00> : vector<16x512xf32>
    %131 = tpu.matmul %125, %130, %cst_87 {dimension_numbers = #tpu.dot_dimension_numbers<[1], [0], [0], [1], [0, 0, 1, 1], [], []>} : vector<16x8xf32>, vector<8x512xf32>, vector<16x512xf32> -> vector<16x512xf32>
    %132 = arith.addf %123, %131 : vector<16x512xf32>
    %c3_88 = arith.constant 3 : index
    %c0_89 = arith.constant 0 : index
    %c0_90 = arith.constant 0 : index
    %133 = vector.load %arg5[%c3_88, %c0_89, %c0_90] : memref<9x16x8xf32, #tpu.memory_space<vmem>>, vector<1x16x8xf32>
    %134 = vector.shape_cast %133 : vector<1x16x8xf32> to vector<16x8xf32>
    %c1_i32_91 = arith.constant 1 : i32
    %135 = tpu.dynamic_rotate %104 by %c1_i32_91 dim 1 : vector<8x512xf32>, i32 -> vector<8x512xf32>
    %c3_92 = arith.constant 3 : index
    %c0_93 = arith.constant 0 : index
    %c0_94 = arith.constant 0 : index
    %136 = vector.load %arg7[%c3_92, %c0_93, %c0_94] : memref<9x1x512xf32, #tpu.memory_space<vmem>>, vector<1x1x512xf32>
    %137 = vector.shape_cast %136 : vector<1x1x512xf32> to vector<1x512xf32>
    %138 = vector.broadcast %137 : vector<1x512xf32> to vector<8x512xf32>
    %139 = arith.mulf %135, %138 : vector<8x512xf32>
    %cst_95 = arith.constant dense<0.000000e+00> : vector<16x512xf32>
    %140 = tpu.matmul %134, %139, %cst_95 {dimension_numbers = #tpu.dot_dimension_numbers<[1], [0], [0], [1], [0, 0, 1, 1], [], []>} : vector<16x8xf32>, vector<8x512xf32>, vector<16x512xf32> -> vector<16x512xf32>
    %141 = arith.addf %132, %140 : vector<16x512xf32>
    %c4_96 = arith.constant 4 : index
    %c0_97 = arith.constant 0 : index
    %c0_98 = arith.constant 0 : index
    %142 = vector.load %arg5[%c4_96, %c0_97, %c0_98] : memref<9x16x8xf32, #tpu.memory_space<vmem>>, vector<1x16x8xf32>
    %143 = vector.shape_cast %142 : vector<1x16x8xf32> to vector<16x8xf32>
    %cst_99 = arith.constant dense<0.000000e+00> : vector<16x512xf32>
    %144 = tpu.matmul %143, %104, %cst_99 {dimension_numbers = #tpu.dot_dimension_numbers<[1], [0], [0], [1], [0, 0, 1, 1], [], []>} : vector<16x8xf32>, vector<8x512xf32>, vector<16x512xf32> -> vector<16x512xf32>
    %145 = arith.addf %141, %144 : vector<16x512xf32>
    %c5_100 = arith.constant 5 : index
    %c0_101 = arith.constant 0 : index
    %c0_102 = arith.constant 0 : index
    %146 = vector.load %arg5[%c5_100, %c0_101, %c0_102] : memref<9x16x8xf32, #tpu.memory_space<vmem>>, vector<1x16x8xf32>
    %147 = vector.shape_cast %146 : vector<1x16x8xf32> to vector<16x8xf32>
    %c511_i32_103 = arith.constant 511 : i32
    %148 = tpu.dynamic_rotate %104 by %c511_i32_103 dim 1 : vector<8x512xf32>, i32 -> vector<8x512xf32>
    %c5_104 = arith.constant 5 : index
    %c0_105 = arith.constant 0 : index
    %c0_106 = arith.constant 0 : index
    %149 = vector.load %arg7[%c5_104, %c0_105, %c0_106] : memref<9x1x512xf32, #tpu.memory_space<vmem>>, vector<1x1x512xf32>
    %150 = vector.shape_cast %149 : vector<1x1x512xf32> to vector<1x512xf32>
    %151 = vector.broadcast %150 : vector<1x512xf32> to vector<8x512xf32>
    %152 = arith.mulf %148, %151 : vector<8x512xf32>
    %cst_107 = arith.constant dense<0.000000e+00> : vector<16x512xf32>
    %153 = tpu.matmul %147, %152, %cst_107 {dimension_numbers = #tpu.dot_dimension_numbers<[1], [0], [0], [1], [0, 0, 1, 1], [], []>} : vector<16x8xf32>, vector<8x512xf32>, vector<16x512xf32> -> vector<16x512xf32>
    %154 = arith.addf %145, %153 : vector<16x512xf32>
    %c6_108 = arith.constant 6 : index
    %c0_109 = arith.constant 0 : index
    %c0_110 = arith.constant 0 : index
    %155 = vector.load %arg5[%c6_108, %c0_109, %c0_110] : memref<9x16x8xf32, #tpu.memory_space<vmem>>, vector<1x16x8xf32>
    %156 = vector.shape_cast %155 : vector<1x16x8xf32> to vector<16x8xf32>
    %c497_i32_111 = arith.constant 497 : i32
    %157 = tpu.dynamic_rotate %104 by %c497_i32_111 dim 1 : vector<8x512xf32>, i32 -> vector<8x512xf32>
    %c6_112 = arith.constant 6 : index
    %c0_113 = arith.constant 0 : index
    %c0_114 = arith.constant 0 : index
    %158 = vector.load %arg7[%c6_112, %c0_113, %c0_114] : memref<9x1x512xf32, #tpu.memory_space<vmem>>, vector<1x1x512xf32>
    %159 = vector.shape_cast %158 : vector<1x1x512xf32> to vector<1x512xf32>
    %160 = vector.broadcast %159 : vector<1x512xf32> to vector<8x512xf32>
    %161 = arith.mulf %157, %160 : vector<8x512xf32>
    %cst_115 = arith.constant dense<0.000000e+00> : vector<16x512xf32>
    %162 = tpu.matmul %156, %161, %cst_115 {dimension_numbers = #tpu.dot_dimension_numbers<[1], [0], [0], [1], [0, 0, 1, 1], [], []>} : vector<16x8xf32>, vector<8x512xf32>, vector<16x512xf32> -> vector<16x512xf32>
    %163 = arith.addf %154, %162 : vector<16x512xf32>
    %c7_116 = arith.constant 7 : index
    %c0_117 = arith.constant 0 : index
    %c0_118 = arith.constant 0 : index
    %164 = vector.load %arg5[%c7_116, %c0_117, %c0_118] : memref<9x16x8xf32, #tpu.memory_space<vmem>>, vector<1x16x8xf32>
    %165 = vector.shape_cast %164 : vector<1x16x8xf32> to vector<16x8xf32>
    %c496_i32_119 = arith.constant 496 : i32
    %166 = tpu.dynamic_rotate %104 by %c496_i32_119 dim 1 : vector<8x512xf32>, i32 -> vector<8x512xf32>
    %c7_120 = arith.constant 7 : index
    %c0_121 = arith.constant 0 : index
    %c0_122 = arith.constant 0 : index
    %167 = vector.load %arg7[%c7_120, %c0_121, %c0_122] : memref<9x1x512xf32, #tpu.memory_space<vmem>>, vector<1x1x512xf32>
    %168 = vector.shape_cast %167 : vector<1x1x512xf32> to vector<1x512xf32>
    %169 = vector.broadcast %168 : vector<1x512xf32> to vector<8x512xf32>
    %170 = arith.mulf %166, %169 : vector<8x512xf32>
    %cst_123 = arith.constant dense<0.000000e+00> : vector<16x512xf32>
    %171 = tpu.matmul %165, %170, %cst_123 {dimension_numbers = #tpu.dot_dimension_numbers<[1], [0], [0], [1], [0, 0, 1, 1], [], []>} : vector<16x8xf32>, vector<8x512xf32>, vector<16x512xf32> -> vector<16x512xf32>
    %172 = arith.addf %163, %171 : vector<16x512xf32>
    %c8_124 = arith.constant 8 : index
    %c0_125 = arith.constant 0 : index
    %c0_126 = arith.constant 0 : index
    %173 = vector.load %arg5[%c8_124, %c0_125, %c0_126] : memref<9x16x8xf32, #tpu.memory_space<vmem>>, vector<1x16x8xf32>
    %174 = vector.shape_cast %173 : vector<1x16x8xf32> to vector<16x8xf32>
    %c495_i32_127 = arith.constant 495 : i32
    %175 = tpu.dynamic_rotate %104 by %c495_i32_127 dim 1 : vector<8x512xf32>, i32 -> vector<8x512xf32>
    %c8_128 = arith.constant 8 : index
    %c0_129 = arith.constant 0 : index
    %c0_130 = arith.constant 0 : index
    %176 = vector.load %arg7[%c8_128, %c0_129, %c0_130] : memref<9x1x512xf32, #tpu.memory_space<vmem>>, vector<1x1x512xf32>
    %177 = vector.shape_cast %176 : vector<1x1x512xf32> to vector<1x512xf32>
    %178 = vector.broadcast %177 : vector<1x512xf32> to vector<8x512xf32>
    %179 = arith.mulf %175, %178 : vector<8x512xf32>
    %cst_131 = arith.constant dense<0.000000e+00> : vector<16x512xf32>
    %180 = tpu.matmul %174, %179, %cst_131 {dimension_numbers = #tpu.dot_dimension_numbers<[1], [0], [0], [1], [0, 0, 1, 1], [], []>} : vector<16x8xf32>, vector<8x512xf32>, vector<16x512xf32> -> vector<16x512xf32>
    %181 = arith.addf %172, %180 : vector<16x512xf32>
    %c0_132 = arith.constant 0 : index
    %c0_133 = arith.constant 0 : index
    %182 = vector.load %arg6[%c0_132, %c0_133] : memref<16x1xf32, #tpu.memory_space<vmem>>, vector<16x1xf32>
    %183 = vector.broadcast %182 : vector<16x1xf32> to vector<16x512xf32>
    %184 = arith.addf %181, %183 : vector<16x512xf32>
    %c0_134 = arith.constant 0 : index
    %c0_135 = arith.constant 0 : index
    %185 = vector.load %arg8[%c0_134, %c0_135] : memref<16x512xf32, #tpu.memory_space<vmem>>, vector<16x512xf32>
    tpu.vector_store %arg8[%c0_134, %c0_135], %184 {strides = array<i32>} : memref<16x512xf32, #tpu.memory_space<vmem>>, vector<16x512xf32>,
    return
  }
  func.func @transform_0(%arg0: i32) -> (i32, i32) {
    %c0_i32 = arith.constant 0 : i32
    %c0_i32_0 = arith.constant 0 : i32
    %c0_i32_1 = arith.constant 0 : i32
    return %c0_i32, %c0_i32_0 : i32, i32
  }
  func.func @transform_1(%arg0: i32) -> (i32, i32, i32) {
    %c0_i32 = arith.constant 0 : i32
    %c0_i32_0 = arith.constant 0 : i32
    %c0_i32_1 = arith.constant 0 : i32
    %c0_i32_2 = arith.constant 0 : i32
    return %c0_i32, %c0_i32_0, %c0_i32_1 : i32, i32, i32
  }
  func.func @transform_2(%arg0: i32) -> (i32, i32) {
    %c0_i32 = arith.constant 0 : i32
    %c0_i32_0 = arith.constant 0 : i32
    %c0_i32_1 = arith.constant 0 : i32
    return %c0_i32, %c0_i32_0 : i32, i32
  }
  func.func @transform_3(%arg0: i32) -> (i32, i32) {
    %c0_i32 = arith.constant 0 : i32
    %c0_i32_0 = arith.constant 0 : i32
    %c0_i32_1 = arith.constant 0 : i32
    return %c0_i32, %c0_i32_0 : i32, i32
  }
  func.func @transform_4(%arg0: i32) -> (i32, i32, i32) {
    %c0_i32 = arith.constant 0 : i32
    %c0_i32_0 = arith.constant 0 : i32
    %c0_i32_1 = arith.constant 0 : i32
    %c0_i32_2 = arith.constant 0 : i32
    return %c0_i32, %c0_i32_0, %c0_i32_1 : i32, i32, i32
  }
  func.func @transform_5(%arg0: i32) -> (i32, i32) {
    %c0_i32 = arith.constant 0 : i32
    %c0_i32_0 = arith.constant 0 : i32
    %c0_i32_1 = arith.constant 0 : i32
    return %c0_i32, %c0_i32_0 : i32, i32
  }
  func.func @transform_6(%arg0: i32) -> (i32, i32, i32) {
    %c0_i32 = arith.constant 0 : i32
    %c0_i32_0 = arith.constant 0 : i32
    %c0_i32_1 = arith.constant 0 : i32
    %c0_i32_2 = arith.constant 0 : i32
    return %c0_i32, %c0_i32_0, %c0_i32_1 : i32, i32, i32
  }
  func.func @transform_7(%arg0: i32) -> (i32, i32) {
    %c0_i32 = arith.constant 0 : i32
    %c0_i32_0 = arith.constant 0 : i32
    %c0_i32_1 = arith.constant 0 : i32
    return %c0_i32, %c0_i32_0 : i32, i32
  }
}

</mosaic_0001>

<llo_original>
// kernel: unpack_layer_conv3d.1
$region0: #{unpack_layer_conv3d.1}
  #allocation0 [shape = 'u32[]', space=smem, size = 0x4, offset = 0x4, fixed_abs, tag = 'smem constant byte address 0x4 - core index']
  #allocation1 [shape = 'u32[144,128]{1,0:T(1,128)}', space=vmem, size = 0x12000, scoped, tag = 'internal scratch']
  %s0 = inlined_call_operand.vmem [shape: f32[8,512], index: 0, kind: input, shape index: {}]
  %s1 = inlined_call_operand.vmem [shape: f32[9,8,8], index: 1, kind: input, shape index: {}]
  %s2 = inlined_call_operand.vmem [shape: f32[8,1], index: 2, kind: input, shape index: {}]
  %s3 = inlined_call_operand.vmem [shape: f32[8,1], index: 3, kind: input, shape index: {}]
  %s4 = inlined_call_operand.vmem [shape: f32[9,16,8], index: 4, kind: input, shape index: {}]
  %s5 = inlined_call_operand.vmem [shape: f32[16,1], index: 5, kind: input, shape index: {}]
  %s6 = inlined_call_operand.vmem [shape: f32[9,1,512], index: 6, kind: input, shape index: {}]
  %s7 = inlined_call_operand.vmem [shape: f32[16,512], index: 7, kind: output, shape index: {}]
  %s8 = sld [smem:[#allocation0]]
  $region38: #{unpack_layer_conv3d.1} parent=0
    _
  %s10 = ssub.s32 1, %s8
  %s11 = scalar_select 0, %s10, %s8
  // Predicated region
  $region2: #{unpack_layer_conv3d.1} parent=0 // pred_check
    _
  $region3: #{unpack_layer_conv3d.1} parent=0 // pred_check_branch
    %13 = sbr.rel (0) target = $region5
  $region4: #{unpack_layer_conv3d.1} parent=0 // pred_region
    _
  $region5: #{unpack_layer_conv3d.1} parent=0 // pred_fallthru
    _
  // Predicated region
  $region6: #{unpack_layer_conv3d.1} parent=0 // pred_check
    _
  $region7: #{unpack_layer_conv3d.1} parent=0 // pred_check_branch
    %15 = sbr.rel (0) target = $region9
  $region8: #{unpack_layer_conv3d.1} parent=0 // pred_region
    _
  $region9: #{unpack_layer_conv3d.1} parent=0 // pred_fallthru
    _
  // Predicated region
  $region10: #{unpack_layer_conv3d.1} parent=0 // pred_check
    _
  $region11: #{unpack_layer_conv3d.1} parent=0 // pred_check_branch
    %17 = sbr.rel (0) target = $region13
  $region12: #{unpack_layer_conv3d.1} parent=0 // pred_region
    _
  $region13: #{unpack_layer_conv3d.1} parent=0 // pred_fallthru
    _
  // Predicated region
  $region14: #{unpack_layer_conv3d.1} parent=0 // pred_check
    _
  $region15: #{unpack_layer_conv3d.1} parent=0 // pred_check_branch
    %19 = sbr.rel (0) target = $region17
  $region16: #{unpack_layer_conv3d.1} parent=0 // pred_region
    _
  $region17: #{unpack_layer_conv3d.1} parent=0 // pred_fallthru
    _
  // Predicated region
  $region18: #{unpack_layer_conv3d.1} parent=0 // pred_check
    _
  $region19: #{unpack_layer_conv3d.1} parent=0 // pred_check_branch
    %21 = sbr.rel (0) target = $region21
  $region20: #{unpack_layer_conv3d.1} parent=0 // pred_region
    _
  $region21: #{unpack_layer_conv3d.1} parent=0 // pred_fallthru
    _
  // Predicated region
  $region22: #{unpack_layer_conv3d.1} parent=0 // pred_check
    _
  $region23: #{unpack_layer_conv3d.1} parent=0 // pred_check_branch
    %23 = sbr.rel (0) target = $region25
  $region24: #{unpack_layer_conv3d.1} parent=0 // pred_region
    _
  $region25: #{unpack_layer_conv3d.1} parent=0 // pred_fallthru
    _
  // Predicated region
  $region26: #{unpack_layer_conv3d.1} parent=0 // pred_check
    _
  $region27: #{unpack_layer_conv3d.1} parent=0 // pred_check_branch
    %25 = sbr.rel (0) target = $region29
  $region28: #{unpack_layer_conv3d.1} parent=0 // pred_region
    _
  $region29: #{unpack_layer_conv3d.1} parent=0 // pred_fallthru
    _
  %v26 = vld [vmem:[%s0] sm:$0xff]
  %v27 = vld [vmem:[%s0 + $0x8] sm:$0xff]
  %v28 = vld [vmem:[%s0 + $0x10] sm:$0xff]
  %v29 = vld [vmem:[%s0 + $0x18] sm:$0xff]
  %v30 = vld [vmem:[%s1] sm:$0xff]
  %31 = vrot.lane.b32.xlu0 %v26, 17
  %v32 = vpop.permute.xlu0 %31
  %33 = vrot.lane.b32.xlu0 %v27, 17
  %v34 = vpop.permute.xlu0 %33
  %35 = vrot.lane.b32.xlu0 %v28, 17
  %v36 = vpop.permute.xlu0 %35
  %37 = vrot.lane.b32.xlu0 %v29, 17
  %v38 = vpop.permute.xlu0 %37
  %v39 = vlaneseq
  %v40 = vand.u32 %v39, 127
  %vm41 = vcmp.lt.s32.totalorder %v40, 17
  %v42 = vsel %vm41, %v36, %v38
  %v43 = vsel %vm41, %v34, %v36
  %v44 = vsel %vm41, %v32, %v34
  %v45 = vsel %vm41, %v38, %v32
  %v46 = vld [vmem:[%s6] sm:$0xf]
  %v48 = vlaneseq
  %v49 = vshrl.u32 %v48, 7
  %v50 = vsub.s32 0, %v49
  %v51 = vrot.slane %v46, %v50
  %v52 = vlaneseq
  %v53 = vshrl.u32 %v52, 7
  %v54 = vsub.s32 1, %v53
  %v55 = vrot.slane %v46, %v54
  %v56 = vlaneseq
  %v57 = vshrl.u32 %v56, 7
  %v58 = vsub.s32 2, %v57
  %v59 = vrot.slane %v46, %v58
  %v60 = vlaneseq
  %v61 = vshrl.u32 %v60, 7
  %v62 = vsub.s32 3, %v61
  %v63 = vrot.slane %v46, %v62
  %v68 = vmul.f32 %v45, %v51
  %v69 = vmul.f32 %v44, %v55
  %v70 = vmul.f32 %v43, %v59
  %v71 = vmul.f32 %v42, %v63
  %s72 = scalar_lea.vmem %s1, 8
  %v73 = vld [vmem:[%s72] sm:$0xff]
  %74 = vrot.lane.b32.xlu0 %v26, 16
  %v75 = vpop.permute.xlu0 %74
  %76 = vrot.lane.b32.xlu0 %v27, 16
  %v77 = vpop.permute.xlu0 %76
  %78 = vrot.lane.b32.xlu0 %v28, 16
  %v79 = vpop.permute.xlu0 %78
  %80 = vrot.lane.b32.xlu0 %v29, 16
  %v81 = vpop.permute.xlu0 %80
  %vm82 = vcmp.lt.s32.totalorder %v40, 16
  %v83 = vsel %vm82, %v79, %v81
  %v84 = vsel %vm82, %v77, %v79
  %v85 = vsel %vm82, %v75, %v77
  %v86 = vsel %vm82, %v81, %v75
  %s87 = scalar_lea.vmem %s6, 4
  %v88 = vld [vmem:[%s87] sm:$0xf]
  %v90 = vlaneseq
  %v91 = vshrl.u32 %v90, 7
  %v92 = vsub.s32 0, %v91
  %v93 = vrot.slane %v88, %v92
  %v94 = vlaneseq
  %v95 = vshrl.u32 %v94, 7
  %v96 = vsub.s32 1, %v95
  %v97 = vrot.slane %v88, %v96
  %v98 = vlaneseq
  %v99 = vshrl.u32 %v98, 7
  %v100 = vsub.s32 2, %v99
  %v101 = vrot.slane %v88, %v100
  %v102 = vlaneseq
  %v103 = vshrl.u32 %v102, 7
  %v104 = vsub.s32 3, %v103
  %v105 = vrot.slane %v88, %v104
  %v110 = vmul.f32 %v86, %v93
  %v111 = vmul.f32 %v85, %v97
  %v112 = vmul.f32 %v84, %v101
  %v113 = vmul.f32 %v83, %v105
  %vm114 = vcmask 64512
  %v116 = vsel %vm114, %v73, 0
  %118 = vmatprep.subr.mxu0 %v111
  %119 = vmatpush1.msra.mxu0 %v110
  %120 = vmatprep.subr.mxu0 0.0
  %121 = vmatpush1.msra.mxu0 0.0
  %122 = vmatprep.subr.mxu0 0.0
  %123 = vmatpush1.msra.mxu0 0.0
  %124 = vmatprep.subr.mxu0 0.0
  %125 = vmatpush1.msra.mxu0 0.0
  %126 = vmatprep.subr.mxu0 0.0
  %127 = vmatpush1.msra.mxu0 0.0
  %128 = vmatprep.subr.mxu0 0.0
  %129 = vmatpush1.msra.mxu0 0.0
  %130 = vmatprep.subr.mxu0 0.0
  %131 = vmatpush1.msra.mxu0 0.0
  %132 = vmatprep.subr.mxu0 0.0
  %133 = vmatpush1.msra.mxu0 0.0
  %134 = vmatprep.subr.mxu0 0.0
  %135 = vmatpush1.msra.mxu0 0.0
  %136 = vmatprep.subr.mxu0 0.0
  %137 = vmatpush1.msra.mxu0 0.0
  %138 = vmatprep.subr.mxu0 0.0
  %139 = vmatpush1.msra.mxu0 0.0
  %140 = vmatprep.subr.mxu0 0.0
  %141 = vmatpush1.msra.mxu0 0.0
  %142 = vmatprep.subr.mxu0 0.0
  %143 = vmatpush1.msra.mxu0 0.0
  %144 = vmatprep.subr.mxu0 0.0
  %145 = vmatpush1.msra.mxu0 0.0
  %146 = vmatprep.subr.mxu0 0.0
  %147 = vmatpush1.msra.mxu0 0.0
  %148 = vmatprep.subr.mxu0 0.0
  %149 = vmatpush1.msra.mxu0 0.0
  %150 = vmatprep.subr.mxu0 0.0
  %151 = vmatpush1.msra.mxu0 0.0
  %152 = vmatprep.subr.mxu0 0.0
  %153 = vmatpush1.msra.mxu0 0.0
  %154 = vmatprep.subr.mxu0 0.0
  %155 = vmatpush1.msra.mxu0 0.0
  %156 = vmatprep.subr.mxu0 0.0
  %157 = vmatpush1.msra.mxu0 0.0
  %158 = vmatprep.subr.mxu0 0.0
  %159 = vmatpush1.msra.mxu0 0.0
  %160 = vmatprep.subr.mxu0 0.0
  %161 = vmatpush1.msra.mxu0 0.0
  %162 = vmatprep.subr.mxu0 0.0
  %163 = vmatpush1.msra.mxu0 0.0
  %164 = vmatprep.subr.mxu0 0.0
  %165 = vmatpush1.msra.mxu0 0.0
  %166 = vmatprep.subr.mxu0 0.0
  %167 = vmatpush1.msra.mxu0 0.0
  %168 = vmatprep.subr.mxu0 0.0
  %169 = vmatpush1.msra.mxu0 0.0
  %170 = vmatprep.subr.mxu0 0.0
  %171 = vmatpush1.msra.mxu0 0.0
  %172 = vmatprep.subr.mxu0 0.0
  %173 = vmatpush1.msra.mxu0 0.0
  %174 = vmatprep.subr.mxu0 0.0
  %175 = vmatpush1.msra.mxu0 0.0
  %176 = vmatprep.subr.mxu0 0.0
  %177 = vmatpush1.msra.mxu0 0.0
  %178 = vmatprep.subr.mxu0 0.0
  %179 = vmatpush1.msra.mxu0 0.0
  %180 = vmatprep.subr.mxu0 0.0
  %181 = vmatpush1.msra.mxu0 0.0
  %182 = vmatprep.mubr.f32.mxu0 0.0
  %183 = vmatmul.mubr.f32.gmra.mrb[0].mxu0 %v116
  %v184 = vpop.f32.mrb[0].mxu0
  %v185 = vadd.f32 0.0, %v184
  %v186 = vpop.f32.mrb[0].mxu0
  %v187 = vadd.f32 0.0, %v186
  %188 = vdwg.mxu0
  %189 = vmatprep.subr.mxu0 %v113
  %190 = vmatpush1.msra.mxu0 %v112
  %191 = vmatprep.subr.mxu0 0.0
  %192 = vmatpush1.msra.mxu0 0.0
  %193 = vmatprep.subr.mxu0 0.0
  %194 = vmatpush1.msra.mxu0 0.0
  %195 = vmatprep.subr.mxu0 0.0
  %196 = vmatpush1.msra.mxu0 0.0
  %197 = vmatprep.subr.mxu0 0.0
  %198 = vmatpush1.msra.mxu0 0.0
  %199 = vmatprep.subr.mxu0 0.0
  %200 = vmatpush1.msra.mxu0 0.0
  %201 = vmatprep.subr.mxu0 0.0
  %202 = vmatpush1.msra.mxu0 0.0
  %203 = vmatprep.subr.mxu0 0.0
  %204 = vmatpush1.msra.mxu0 0.0
  %205 = vmatprep.subr.mxu0 0.0
  %206 = vmatpush1.msra.mxu0 0.0
  %207 = vmatprep.subr.mxu0 0.0
  %208 = vmatpush1.msra.mxu0 0.0
  %209 = vmatprep.subr.mxu0 0.0
  %210 = vmatpush1.msra.mxu0 0.0
  %211 = vmatprep.subr.mxu0 0.0
  %212 = vmatpush1.msra.mxu0 0.0
  %213 = vmatprep.subr.mxu0 0.0
  %214 = vmatpush1.msra.mxu0 0.0
  %215 = vmatprep.subr.mxu0 0.0
  %216 = vmatpush1.msra.mxu0 0.0
  %217 = vmatprep.subr.mxu0 0.0
  %218 = vmatpush1.msra.mxu0 0.0
  %219 = vmatprep.subr.mxu0 0.0
  %220 = vmatpush1.msra.mxu0 0.0
  %221 = vmatprep.subr.mxu0 0.0
  %222 = vmatpush1.msra.mxu0 0.0
  %223 = vmatprep.subr.mxu0 0.0
  %224 = vmatpush1.msra.mxu0 0.0
  %225 = vmatprep.subr.mxu0 0.0
  %226 = vmatpush1.msra.mxu0 0.0
  %227 = vmatprep.subr.mxu0 0.0
  %228 = vmatpush1.msra.mxu0 0.0
  %229 = vmatprep.subr.mxu0 0.0
  %230 = vmatpush1.msra.mxu0 0.0
  %231 = vmatprep.subr.mxu0 0.0
  %232 = vmatpush1.msra.mxu0 0.0
  %233 = vmatprep.subr.mxu0 0.0
  %234 = vmatpush1.msra.mxu0 0.0
  %235 = vmatprep.subr.mxu0 0.0
  %236 = vmatpush1.msra.mxu0 0.0
  %237 = vmatprep.subr.mxu0 0.0
  %238 = vmatpush1.msra.mxu0 0.0
  %239 = vmatprep.subr.mxu0 0.0
  %240 = vmatpush1.msra.mxu0 0.0
  %241 = vmatprep.subr.mxu0 0.0
  %242 = vmatpush1.msra.mxu0 0.0
  %243 = vmatprep.subr.mxu0 0.0
  %244 = vmatpush1.msra.mxu0 0.0
  %245 = vmatprep.subr.mxu0 0.0
  %246 = vmatpush1.msra.mxu0 0.0
  %247 = vmatprep.subr.mxu0 0.0
  %248 = vmatpush1.msra.mxu0 0.0
  %249 = vmatprep.subr.mxu0 0.0
  %250 = vmatpush1.msra.mxu0 0.0
  %251 = vmatprep.subr.mxu0 0.0
  %252 = vmatpush1.msra.mxu0 0.0
  %253 = vmatprep.mubr.f32.mxu0 0.0
  %254 = vmatmul.mubr.f32.gmra.mrb[0].mxu0 %v116
  %v255 = vpop.f32.mrb[0].mxu0
  %v256 = vadd.f32 0.0, %v255
  %v257 = vpop.f32.mrb[0].mxu0
  %v258 = vadd.f32 0.0, %v257
  %259 = vdwg.mxu0
  %v261 = vsel %vm114, %v30, 0
  %263 = vmatprep.subr.mxu0 %v69
  %264 = vmatpush1.msra.mxu0 %v68
  %265 = vmatprep.subr.mxu0 0.0
  %266 = vmatpush1.msra.mxu0 0.0
  %267 = vmatprep.subr.mxu0 0.0
  %268 = vmatpush1.msra.mxu0 0.0
  %269 = vmatprep.subr.mxu0 0.0
  %270 = vmatpush1.msra.mxu0 0.0
  %271 = vmatprep.subr.mxu0 0.0
  %272 = vmatpush1.msra.mxu0 0.0
  %273 = vmatprep.subr.mxu0 0.0
  %274 = vmatpush1.msra.mxu0 0.0
  %275 = vmatprep.subr.mxu0 0.0
  %276 = vmatpush1.msra.mxu0 0.0
  %277 = vmatprep.subr.mxu0 0.0
  %278 = vmatpush1.msra.mxu0 0.0
  %279 = vmatprep.subr.mxu0 0.0
  %280 = vmatpush1.msra.mxu0 0.0
  %281 = vmatprep.subr.mxu0 0.0
  %282 = vmatpush1.msra.mxu0 0.0
  %283 = vmatprep.subr.mxu0 0.0
  %284 = vmatpush1.msra.mxu0 0.0
  %285 = vmatprep.subr.mxu0 0.0
  %286 = vmatpush1.msra.mxu0 0.0
  %287 = vmatprep.subr.mxu0 0.0
  %288 = vmatpush1.msra.mxu0 0.0
  %289 = vmatprep.subr.mxu0 0.0
  %290 = vmatpush1.msra.mxu0 0.0
  %291 = vmatprep.subr.mxu0 0.0
  %292 = vmatpush1.msra.mxu0 0.0
  %293 = vmatprep.subr.mxu0 0.0
  %294 = vmatpush1.msra.mxu0 0.0
  %295 = vmatprep.subr.mxu0 0.0
  %296 = vmatpush1.msra.mxu0 0.0
  %297 = vmatprep.subr.mxu0 0.0
  %298 = vmatpush1.msra.mxu0 0.0
  %299 = vmatprep.subr.mxu0 0.0
  %300 = vmatpush1.msra.mxu0 0.0
  %301 = vmatprep.subr.mxu0 0.0
  %302 = vmatpush1.msra.mxu0 0.0
  %303 = vmatprep.subr.mxu0 0.0
  %304 = vmatpush1.msra.mxu0 0.0
  %305 = vmatprep.subr.mxu0 0.0
  %306 = vmatpush1.msra.mxu0 0.0
  %307 = vmatprep.subr.mxu0 0.0
  %308 = vmatpush1.msra.mxu0 0.0
  %309 = vmatprep.subr.mxu0 0.0
  %310 = vmatpush1.msra.mxu0 0.0
  %311 = vmatprep.subr.mxu0 0.0
  %312 = vmatpush1.msra.mxu0 0.0
  %313 = vmatprep.subr.mxu0 0.0
  %314 = vmatpush1.msra.mxu0 0.0
  %315 = vmatprep.subr.mxu0 0.0
  %316 = vmatpush1.msra.mxu0 0.0
  %317 = vmatprep.subr.mxu0 0.0
  %318 = vmatpush1.msra.mxu0 0.0
  %319 = vmatprep.subr.mxu0 0.0
  %320 = vmatpush1.msra.mxu0 0.0
  %321 = vmatprep.subr.mxu0 0.0
  %322 = vmatpush1.msra.mxu0 0.0
  %323 = vmatprep.subr.mxu0 0.0
  %324 = vmatpush1.msra.mxu0 0.0
  %325 = vmatprep.subr.mxu0 0.0
  %326 = vmatpush1.msra.mxu0 0.0
  %327 = vmatprep.mubr.f32.mxu0 0.0
  %328 = vmatmul.mubr.f32.gmra.mrb[0].mxu0 %v261
  %v329 = vpop.f32.mrb[0].mxu0
  %v330 = vadd.f32 %v185, %v329
  %v331 = vpop.f32.mrb[0].mxu0
  %v332 = vadd.f32 %v187, %v331
  %333 = vdwg.mxu0
  %334 = vmatprep.subr.mxu0 %v71
  %335 = vmatpush1.msra.mxu0 %v70
  %336 = vmatprep.subr.mxu0 0.0
  %337 = vmatpush1.msra.mxu0 0.0
  %338 = vmatprep.subr.mxu0 0.0
  %339 = vmatpush1.msra.mxu0 0.0
  %340 = vmatprep.subr.mxu0 0.0
  %341 = vmatpush1.msra.mxu0 0.0
  %342 = vmatprep.subr.mxu0 0.0
  %343 = vmatpush1.msra.mxu0 0.0
  %344 = vmatprep.subr.mxu0 0.0
  %345 = vmatpush1.msra.mxu0 0.0
  %346 = vmatprep.subr.mxu0 0.0
  %347 = vmatpush1.msra.mxu0 0.0
  %348 = vmatprep.subr.mxu0 0.0
  %349 = vmatpush1.msra.mxu0 0.0
  %350 = vmatprep.subr.mxu0 0.0
  %351 = vmatpush1.msra.mxu0 0.0
  %352 = vmatprep.subr.mxu0 0.0
  %353 = vmatpush1.msra.mxu0 0.0
  %354 = vmatprep.subr.mxu0 0.0
  %355 = vmatpush1.msra.mxu0 0.0
  %356 = vmatprep.subr.mxu0 0.0
  %357 = vmatpush1.msra.mxu0 0.0
  %358 = vmatprep.subr.mxu0 0.0
  %359 = vmatpush1.msra.mxu0 0.0
  %360 = vmatprep.subr.mxu0 0.0
  %361 = vmatpush1.msra.mxu0 0.0
  %362 = vmatprep.subr.mxu0 0.0
  %363 = vmatpush1.msra.mxu0 0.0
  %364 = vmatprep.subr.mxu0 0.0
  %365 = vmatpush1.msra.mxu0 0.0
  %366 = vmatprep.subr.mxu0 0.0
  %367 = vmatpush1.msra.mxu0 0.0
  %368 = vmatprep.subr.mxu0 0.0
  %369 = vmatpush1.msra.mxu0 0.0
  %370 = vmatprep.subr.mxu0 0.0
  %371 = vmatpush1.msra.mxu0 0.0
  %372 = vmatprep.subr.mxu0 0.0
  %373 = vmatpush1.msra.mxu0 0.0
  %374 = vmatprep.subr.mxu0 0.0
  %375 = vmatpush1.msra.mxu0 0.0
  %376 = vmatprep.subr.mxu0 0.0
  %377 = vmatpush1.msra.mxu0 0.0
  %378 = vmatprep.subr.mxu0 0.0
  %379 = vmatpush1.msra.mxu0 0.0
  %380 = vmatprep.subr.mxu0 0.0
  %381 = vmatpush1.msra.mxu0 0.0
  %382 = vmatprep.subr.mxu0 0.0
  %383 = vmatpush1.msra.mxu0 0.0
  %384 = vmatprep.subr.mxu0 0.0
  %385 = vmatpush1.msra.mxu0 0.0
  %386 = vmatprep.subr.mxu0 0.0
  %387 = vmatpush1.msra.mxu0 0.0
  %388 = vmatprep.subr.mxu0 0.0
  %389 = vmatpush1.msra.mxu0 0.0
  %390 = vmatprep.subr.mxu0 0.0
  %391 = vmatpush1.msra.mxu0 0.0
  %392 = vmatprep.subr.mxu0 0.0
  %393 = vmatpush1.msra.mxu0 0.0
  %394 = vmatprep.subr.mxu0 0.0
  %395 = vmatpush1.msra.mxu0 0.0
  %396 = vmatprep.subr.mxu0 0.0
  %397 = vmatpush1.msra.mxu0 0.0
  %398 = vmatprep.mubr.f32.mxu0 0.0
  %399 = vmatmul.mubr.f32.gmra.mrb[0].mxu0 %v261
  %v400 = vpop.f32.mrb[0].mxu0
  %v401 = vadd.f32 %v256, %v400
  %v402 = vpop.f32.mrb[0].mxu0
  %v403 = vadd.f32 %v258, %v402
  %404 = vdwg.mxu0
  %s405 = scalar_lea.vmem %s1, 16
  %v406 = vld [vmem:[%s405] sm:$0xff]
  %407 = vrot.lane.b32.xlu0 %v26, 15
  %v408 = vpop.permute.xlu0 %407
  %409 = vrot.lane.b32.xlu0 %v27, 15
  %v410 = vpop.permute.xlu0 %409
  %411 = vrot.lane.b32.xlu0 %v28, 15
  %v412 = vpop.permute.xlu0 %411
  %413 = vrot.lane.b32.xlu0 %v29, 15
  %v414 = vpop.permute.xlu0 %413
  %vm415 = vcmp.lt.s32.totalorder %v40, 15
  %v416 = vsel %vm415, %v412, %v414
  %v417 = vsel %vm415, %v410, %v412
  %v418 = vsel %vm415, %v408, %v410
  %v419 = vsel %vm415, %v414, %v408
  %s420 = scalar_lea.vmem %s6, 8
  %v421 = vld [vmem:[%s420] sm:$0xf]
  %v423 = vlaneseq
  %v424 = vshrl.u32 %v423, 7
  %v425 = vsub.s32 0, %v424
  %v426 = vrot.slane %v421, %v425
  %v427 = vlaneseq
  %v428 = vshrl.u32 %v427, 7
  %v429 = vsub.s32 1, %v428
  %v430 = vrot.slane %v421, %v429
  %v431 = vlaneseq
  %v432 = vshrl.u32 %v431, 7
  %v433 = vsub.s32 2, %v432
  %v434 = vrot.slane %v421, %v433
  %v435 = vlaneseq
  %v436 = vshrl.u32 %v435, 7
  %v437 = vsub.s32 3, %v436
  %v438 = vrot.slane %v421, %v437
  %v443 = vmul.f32 %v419, %v426
  %v444 = vmul.f32 %v418, %v430
  %v445 = vmul.f32 %v417, %v434
  %v446 = vmul.f32 %v416, %v438
  %v448 = vsel %vm114, %v406, 0
  %450 = vmatprep.subr.mxu0 %v444
  %451 = vmatpush1.msra.mxu0 %v443
  %452 = vmatprep.subr.mxu0 0.0
  %453 = vmatpush1.msra.mxu0 0.0
  %454 = vmatprep.subr.mxu0 0.0
  %455 = vmatpush1.msra.mxu0 0.0
  %456 = vmatprep.subr.mxu0 0.0
  %457 = vmatpush1.msra.mxu0 0.0
  %458 = vmatprep.subr.mxu0 0.0
  %459 = vmatpush1.msra.mxu0 0.0
  %460 = vmatprep.subr.mxu0 0.0
  %461 = vmatpush1.msra.mxu0 0.0
  %462 = vmatprep.subr.mxu0 0.0
  %463 = vmatpush1.msra.mxu0 0.0
  %464 = vmatprep.subr.mxu0 0.0
  %465 = vmatpush1.msra.mxu0 0.0
  %466 = vmatprep.subr.mxu0 0.0
  %467 = vmatpush1.msra.mxu0 0.0
  %468 = vmatprep.subr.mxu0 0.0
  %469 = vmatpush1.msra.mxu0 0.0
  %470 = vmatprep.subr.mxu0 0.0
  %471 = vmatpush1.msra.mxu0 0.0
  %472 = vmatprep.subr.mxu0 0.0
  %473 = vmatpush1.msra.mxu0 0.0
  %474 = vmatprep.subr.mxu0 0.0
  %475 = vmatpush1.msra.mxu0 0.0
  %476 = vmatprep.subr.mxu0 0.0
  %477 = vmatpush1.msra.mxu0 0.0
  %478 = vmatprep.subr.mxu0 0.0
  %479 = vmatpush1.msra.mxu0 0.0
  %480 = vmatprep.subr.mxu0 0.0
  %481 = vmatpush1.msra.mxu0 0.0
  %482 = vmatprep.subr.mxu0 0.0
  %483 = vmatpush1.msra.mxu0 0.0
  %484 = vmatprep.subr.mxu0 0.0
  %485 = vmatpush1.msra.mxu0 0.0
  %486 = vmatprep.subr.mxu0 0.0
  %487 = vmatpush1.msra.mxu0 0.0
  %488 = vmatprep.subr.mxu0 0.0
  %489 = vmatpush1.msra.mxu0 0.0
  %490 = vmatprep.subr.mxu0 0.0
  %491 = vmatpush1.msra.mxu0 0.0
  %492 = vmatprep.subr.mxu0 0.0
  %493 = vmatpush1.msra.mxu0 0.0
  %494 = vmatprep.subr.mxu0 0.0
  %495 = vmatpush1.msra.mxu0 0.0
  %496 = vmatprep.subr.mxu0 0.0
  %497 = vmatpush1.msra.mxu0 0.0
  %498 = vmatprep.subr.mxu0 0.0
  %499 = vmatpush1.msra.mxu0 0.0
  %500 = vmatprep.subr.mxu0 0.0
  %501 = vmatpush1.msra.mxu0 0.0
  %502 = vmatprep.subr.mxu0 0.0
  %503 = vmatpush1.msra.mxu0 0.0
  %504 = vmatprep.subr.mxu0 0.0
  %505 = vmatpush1.msra.mxu0 0.0
  %506 = vmatprep.subr.mxu0 0.0
  %507 = vmatpush1.msra.mxu0 0.0
  %508 = vmatprep.subr.mxu0 0.0
  %509 = vmatpush1.msra.mxu0 0.0
  %510 = vmatprep.subr.mxu0 0.0
  %511 = vmatpush1.msra.mxu0 0.0
  %512 = vmatprep.subr.mxu0 0.0
  %513 = vmatpush1.msra.mxu0 0.0
  %514 = vmatprep.mubr.f32.mxu0 0.0
  %515 = vmatmul.mubr.f32.gmra.mrb[0].mxu0 %v448
  %v516 = vpop.f32.mrb[0].mxu0
  %v517 = vadd.f32 0.0, %v516
  %v518 = vpop.f32.mrb[0].mxu0
  %v519 = vadd.f32 0.0, %v518
  %520 = vdwg.mxu0
  %521 = vmatprep.subr.mxu0 %v446
  %522 = vmatpush1.msra.mxu0 %v445
  %523 = vmatprep.subr.mxu0 0.0
  %524 = vmatpush1.msra.mxu0 0.0
  %525 = vmatprep.subr.mxu0 0.0
  %526 = vmatpush1.msra.mxu0 0.0
  %527 = vmatprep.subr.mxu0 0.0
  %528 = vmatpush1.msra.mxu0 0.0
  %529 = vmatprep.subr.mxu0 0.0
  %530 = vmatpush1.msra.mxu0 0.0
  %531 = vmatprep.subr.mxu0 0.0
  %532 = vmatpush1.msra.mxu0 0.0
  %533 = vmatprep.subr.mxu0 0.0
  %534 = vmatpush1.msra.mxu0 0.0
  %535 = vmatprep.subr.mxu0 0.0
  %536 = vmatpush1.msra.mxu0 0.0
  %537 = vmatprep.subr.mxu0 0.0
  %538 = vmatpush1.msra.mxu0 0.0
  %539 = vmatprep.subr.mxu0 0.0
  %540 = vmatpush1.msra.mxu0 0.0
  %541 = vmatprep.subr.mxu0 0.0
  %542 = vmatpush1.msra.mxu0 0.0
  %543 = vmatprep.subr.mxu0 0.0
  %544 = vmatpush1.msra.mxu0 0.0
  %545 = vmatprep.subr.mxu0 0.0
  %546 = vmatpush1.msra.mxu0 0.0
  %547 = vmatprep.subr.mxu0 0.0
  %548 = vmatpush1.msra.mxu0 0.0
  %549 = vmatprep.subr.mxu0 0.0
  %550 = vmatpush1.msra.mxu0 0.0
  %551 = vmatprep.subr.mxu0 0.0
  %552 = vmatpush1.msra.mxu0 0.0
  %553 = vmatprep.subr.mxu0 0.0
  %554 = vmatpush1.msra.mxu0 0.0
  %555 = vmatprep.subr.mxu0 0.0
  %556 = vmatpush1.msra.mxu0 0.0
  %557 = vmatprep.subr.mxu0 0.0
  %558 = vmatpush1.msra.mxu0 0.0
  %559 = vmatprep.subr.mxu0 0.0
  %560 = vmatpush1.msra.mxu0 0.0
  %561 = vmatprep.subr.mxu0 0.0
  %562 = vmatpush1.msra.mxu0 0.0
  %563 = vmatprep.subr.mxu0 0.0
  %564 = vmatpush1.msra.mxu0 0.0
  %565 = vmatprep.subr.mxu0 0.0
  %566 = vmatpush1.msra.mxu0 0.0
  %567 = vmatprep.subr.mxu0 0.0
  %568 = vmatpush1.msra.mxu0 0.0
  %569 = vmatprep.subr.mxu0 0.0
  %570 = vmatpush1.msra.mxu0 0.0
  %571 = vmatprep.subr.mxu0 0.0
  %572 = vmatpush1.msra.mxu0 0.0
  %573 = vmatprep.subr.mxu0 0.0
  %574 = vmatpush1.msra.mxu0 0.0
  %575 = vmatprep.subr.mxu0 0.0
  %576 = vmatpush1.msra.mxu0 0.0
  %577 = vmatprep.subr.mxu0 0.0
  %578 = vmatpush1.msra.mxu0 0.0
  %579 = vmatprep.subr.mxu0 0.0
  %580 = vmatpush1.msra.mxu0 0.0
  %581 = vmatprep.subr.mxu0 0.0
  %582 = vmatpush1.msra.mxu0 0.0
  %583 = vmatprep.subr.mxu0 0.0
  %584 = vmatpush1.msra.mxu0 0.0
  %585 = vmatprep.mubr.f32.mxu0 0.0
  %586 = vmatmul.mubr.f32.gmra.mrb[0].mxu0 %v448
  %v587 = vpop.f32.mrb[0].mxu0
  %v588 = vadd.f32 0.0, %v587
  %v589 = vpop.f32.mrb[0].mxu0
  %v590 = vadd.f32 0.0, %v589
  %591 = vdwg.mxu0
  %v592 = vadd.f32 %v330, %v517
  %v593 = vadd.f32 %v332, %v519
  %v594 = vadd.f32 %v401, %v588
  %v595 = vadd.f32 %v403, %v590
  %s596 = scalar_lea.vmem %s1, 24
  %v597 = vld [vmem:[%s596] sm:$0xff]
  %598 = vrot.lane.b32.xlu0 %v26, 1
  %v599 = vpop.permute.xlu0 %598
  %600 = vrot.lane.b32.xlu0 %v27, 1
  %v601 = vpop.permute.xlu0 %600
  %602 = vrot.lane.b32.xlu0 %v28, 1
  %v603 = vpop.permute.xlu0 %602
  %604 = vrot.lane.b32.xlu0 %v29, 1
  %v605 = vpop.permute.xlu0 %604
  %vm606 = vcmp.lt.s32.totalorder %v40, 1
  %v607 = vsel %vm606, %v603, %v605
  %v608 = vsel %vm606, %v601, %v603
  %v609 = vsel %vm606, %v599, %v601
  %v610 = vsel %vm606, %v605, %v599
  %s611 = scalar_lea.vmem %s6, 12
  %v612 = vld [vmem:[%s611] sm:$0xf]
  %v614 = vlaneseq
  %v615 = vshrl.u32 %v614, 7
  %v616 = vsub.s32 0, %v615
  %v617 = vrot.slane %v612, %v616
  %v618 = vlaneseq
  %v619 = vshrl.u32 %v618, 7
  %v620 = vsub.s32 1, %v619
  %v621 = vrot.slane %v612, %v620
  %v622 = vlaneseq
  %v623 = vshrl.u32 %v622, 7
  %v624 = vsub.s32 2, %v623
  %v625 = vrot.slane %v612, %v624
  %v626 = vlaneseq
  %v627 = vshrl.u32 %v626, 7
  %v628 = vsub.s32 3, %v627
  %v629 = vrot.slane %v612, %v628
  %v634 = vmul.f32 %v610, %v617
  %v635 = vmul.f32 %v609, %v621
  %v636 = vmul.f32 %v608, %v625
  %v637 = vmul.f32 %v607, %v629
  %v639 = vsel %vm114, %v597, 0
  %641 = vmatprep.subr.mxu0 %v635
  %642 = vmatpush1.msra.mxu0 %v634
  %643 = vmatprep.subr.mxu0 0.0
  %644 = vmatpush1.msra.mxu0 0.0
  %645 = vmatprep.subr.mxu0 0.0
  %646 = vmatpush1.msra.mxu0 0.0
  %647 = vmatprep.subr.mxu0 0.0
  %648 = vmatpush1.msra.mxu0 0.0
  %649 = vmatprep.subr.mxu0 0.0
  %650 = vmatpush1.msra.mxu0 0.0
  %651 = vmatprep.subr.mxu0 0.0
  %652 = vmatpush1.msra.mxu0 0.0
  %653 = vmatprep.subr.mxu0 0.0
  %654 = vmatpush1.msra.mxu0 0.0
  %655 = vmatprep.subr.mxu0 0.0
  %656 = vmatpush1.msra.mxu0 0.0
  %657 = vmatprep.subr.mxu0 0.0
  %658 = vmatpush1.msra.mxu0 0.0
  %659 = vmatprep.subr.mxu0 0.0
  %660 = vmatpush1.msra.mxu0 0.0
  %661 = vmatprep.subr.mxu0 0.0
  %662 = vmatpush1.msra.mxu0 0.0
  %663 = vmatprep.subr.mxu0 0.0
  %664 = vmatpush1.msra.mxu0 0.0
  %665 = vmatprep.subr.mxu0 0.0
  %666 = vmatpush1.msra.mxu0 0.0
  %667 = vmatprep.subr.mxu0 0.0
  %668 = vmatpush1.msra.mxu0 0.0
  %669 = vmatprep.subr.mxu0 0.0
  %670 = vmatpush1.msra.mxu0 0.0
  %671 = vmatprep.subr.mxu0 0.0
  %672 = vmatpush1.msra.mxu0 0.0
  %673 = vmatprep.subr.mxu0 0.0
  %674 = vmatpush1.msra.mxu0 0.0
  %675 = vmatprep.subr.mxu0 0.0
  %676 = vmatpush1.msra.mxu0 0.0
  %677 = vmatprep.subr.mxu0 0.0
  %678 = vmatpush1.msra.mxu0 0.0
  %679 = vmatprep.subr.mxu0 0.0
  %680 = vmatpush1.msra.mxu0 0.0
  %681 = vmatprep.subr.mxu0 0.0
  %682 = vmatpush1.msra.mxu0 0.0
  %683 = vmatprep.subr.mxu0 0.0
  %684 = vmatpush1.msra.mxu0 0.0
  %685 = vmatprep.subr.mxu0 0.0
  %686 = vmatpush1.msra.mxu0 0.0
  %687 = vmatprep.subr.mxu0 0.0
  %688 = vmatpush1.msra.mxu0 0.0
  %689 = vmatprep.subr.mxu0 0.0
  %690 = vmatpush1.msra.mxu0 0.0
  %691 = vmatprep.subr.mxu0 0.0
  %692 = vmatpush1.msra.mxu0 0.0
  %693 = vmatprep.subr.mxu0 0.0
  %694 = vmatpush1.msra.mxu0 0.0
  %695 = vmatprep.subr.mxu0 0.0
  %696 = vmatpush1.msra.mxu0 0.0
  %697 = vmatprep.subr.mxu0 0.0
  %698 = vmatpush1.msra.mxu0 0.0
  %699 = vmatprep.subr.mxu0 0.0
  %700 = vmatpush1.msra.mxu0 0.0
  %701 = vmatprep.subr.mxu0 0.0
  %702 = vmatpush1.msra.mxu0 0.0
  %703 = vmatprep.subr.mxu0 0.0
  %704 = vmatpush1.msra.mxu0 0.0
  %705 = vmatprep.mubr.f32.mxu0 0.0
  %706 = vmatmul.mubr.f32.gmra.mrb[0].mxu0 %v639
  %v707 = vpop.f32.mrb[0].mxu0
  %v708 = vadd.f32 0.0, %v707
  %v709 = vpop.f32.mrb[0].mxu0
  %v710 = vadd.f32 0.0, %v709
  %711 = vdwg.mxu0
  %712 = vmatprep.subr.mxu0 %v637
  %713 = vmatpush1.msra.mxu0 %v636
  %714 = vmatprep.subr.mxu0 0.0
  %715 = vmatpush1.msra.mxu0 0.0
  %716 = vmatprep.subr.mxu0 0.0
  %717 = vmatpush1.msra.mxu0 0.0
  %718 = vmatprep.subr.mxu0 0.0
  %719 = vmatpush1.msra.mxu0 0.0
  %720 = vmatprep.subr.mxu0 0.0
  %721 = vmatpush1.msra.mxu0 0.0
  %722 = vmatprep.subr.mxu0 0.0
  %723 = vmatpush1.msra.mxu0 0.0
  %724 = vmatprep.subr.mxu0 0.0
  %725 = vmatpush1.msra.mxu0 0.0
  %726 = vmatprep.subr.mxu0 0.0
  %727 = vmatpush1.msra.mxu0 0.0
  %728 = vmatprep.subr.mxu0 0.0
  %729 = vmatpush1.msra.mxu0 0.0
  %730 = vmatprep.subr.mxu0 0.0
  %731 = vmatpush1.msra.mxu0 0.0
  %732 = vmatprep.subr.mxu0 0.0
  %733 = vmatpush1.msra.mxu0 0.0
  %734 = vmatprep.subr.mxu0 0.0
  %735 = vmatpush1.msra.mxu0 0.0
  %736 = vmatprep.subr.mxu0 0.0
  %737 = vmatpush1.msra.mxu0 0.0
  %738 = vmatprep.subr.mxu0 0.0
  %739 = vmatpush1.msra.mxu0 0.0
  %740 = vmatprep.subr.mxu0 0.0
  %741 = vmatpush1.msra.mxu0 0.0
  %742 = vmatprep.subr.mxu0 0.0
  %743 = vmatpush1.msra.mxu0 0.0
  %744 = vmatprep.subr.mxu0 0.0
  %745 = vmatpush1.msra.mxu0 0.0
  %746 = vmatprep.subr.mxu0 0.0
  %747 = vmatpush1.msra.mxu0 0.0
  %748 = vmatprep.subr.mxu0 0.0
  %749 = vmatpush1.msra.mxu0 0.0
  %750 = vmatprep.subr.mxu0 0.0
  %751 = vmatpush1.msra.mxu0 0.0
  %752 = vmatprep.subr.mxu0 0.0
  %753 = vmatpush1.msra.mxu0 0.0
  %754 = vmatprep.subr.mxu0 0.0
  %755 = vmatpush1.msra.mxu0 0.0
  %756 = vmatprep.subr.mxu0 0.0
  %757 = vmatpush1.msra.mxu0 0.0
  %758 = vmatprep.subr.mxu0 0.0
  %759 = vmatpush1.msra.mxu0 0.0
  %760 = vmatprep.subr.mxu0 0.0
  %761 = vmatpush1.msra.mxu0 0.0
  %762 = vmatprep.subr.mxu0 0.0
  %763 = vmatpush1.msra.mxu0 0.0
  %764 = vmatprep.subr.mxu0 0.0
  %765 = vmatpush1.msra.mxu0 0.0
  %766 = vmatprep.subr.mxu0 0.0
  %767 = vmatpush1.msra.mxu0 0.0
  %768 = vmatprep.subr.mxu0 0.0
  %769 = vmatpush1.msra.mxu0 0.0
  %770 = vmatprep.subr.mxu0 0.0
  %771 = vmatpush1.msra.mxu0 0.0
  %772 = vmatprep.subr.mxu0 0.0
  %773 = vmatpush1.msra.mxu0 0.0
  %774 = vmatprep.subr.mxu0 0.0
  %775 = vmatpush1.msra.mxu0 0.0
  %776 = vmatprep.mubr.f32.mxu0 0.0
  %777 = vmatmul.mubr.f32.gmra.mrb[0].mxu0 %v639
  %v778 = vpop.f32.mrb[0].mxu0
  %v779 = vadd.f32 0.0, %v778
  %v780 = vpop.f32.mrb[0].mxu0
  %v781 = vadd.f32 0.0, %v780
  %782 = vdwg.mxu0
  %v783 = vadd.f32 %v592, %v708
  %v784 = vadd.f32 %v593, %v710
  %v785 = vadd.f32 %v594, %v779
  %v786 = vadd.f32 %v595, %v781
  %s787 = scalar_lea.vmem %s1, 32
  %v788 = vld [vmem:[%s787] sm:$0xff]
  %v790 = vsel %vm114, %v788, 0
  %792 = vmatprep.subr.mxu0 %v27
  %793 = vmatpush1.msra.mxu0 %v26
  %794 = vmatprep.subr.mxu0 0.0
  %795 = vmatpush1.msra.mxu0 0.0
  %796 = vmatprep.subr.mxu0 0.0
  %797 = vmatpush1.msra.mxu0 0.0
  %798 = vmatprep.subr.mxu0 0.0
  %799 = vmatpush1.msra.mxu0 0.0
  %800 = vmatprep.subr.mxu0 0.0
  %801 = vmatpush1.msra.mxu0 0.0
  %802 = vmatprep.subr.mxu0 0.0
  %803 = vmatpush1.msra.mxu0 0.0
  %804 = vmatprep.subr.mxu0 0.0
  %805 = vmatpush1.msra.mxu0 0.0
  %806 = vmatprep.subr.mxu0 0.0
  %807 = vmatpush1.msra.mxu0 0.0
  %808 = vmatprep.subr.mxu0 0.0
  %809 = vmatpush1.msra.mxu0 0.0
  %810 = vmatprep.subr.mxu0 0.0
  %811 = vmatpush1.msra.mxu0 0.0
  %812 = vmatprep.subr.mxu0 0.0
  %813 = vmatpush1.msra.mxu0 0.0
  %814 = vmatprep.subr.mxu0 0.0
  %815 = vmatpush1.msra.mxu0 0.0
  %816 = vmatprep.subr.mxu0 0.0
  %817 = vmatpush1.msra.mxu0 0.0
  %818 = vmatprep.subr.mxu0 0.0
  %819 = vmatpush1.msra.mxu0 0.0
  %820 = vmatprep.subr.mxu0 0.0
  %821 = vmatpush1.msra.mxu0 0.0
  %822 = vmatprep.subr.mxu0 0.0
  %823 = vmatpush1.msra.mxu0 0.0
  %824 = vmatprep.subr.mxu0 0.0
  %825 = vmatpush1.msra.mxu0 0.0
  %826 = vmatprep.subr.mxu0 0.0
  %827 = vmatpush1.msra.mxu0 0.0
  %828 = vmatprep.subr.mxu0 0.0
  %829 = vmatpush1.msra.mxu0 0.0
  %830 = vmatprep.subr.mxu0 0.0
  %831 = vmatpush1.msra.mxu0 0.0
  %832 = vmatprep.subr.mxu0 0.0
  %833 = vmatpush1.msra.mxu0 0.0
  %834 = vmatprep.subr.mxu0 0.0
  %835 = vmatpush1.msra.mxu0 0.0
  %836 = vmatprep.subr.mxu0 0.0
  %837 = vmatpush1.msra.mxu0 0.0
  %838 = vmatprep.subr.mxu0 0.0
  %839 = vmatpush1.msra.mxu0 0.0
  %840 = vmatprep.subr.mxu0 0.0
  %841 = vmatpush1.msra.mxu0 0.0
  %842 = vmatprep.subr.mxu0 0.0
  %843 = vmatpush1.msra.mxu0 0.0
  %844 = vmatprep.subr.mxu0 0.0
  %845 = vmatpush1.msra.mxu0 0.0
  %846 = vmatprep.subr.mxu0 0.0
  %847 = vmatpush1.msra.mxu0 0.0
  %848 = vmatprep.subr.mxu0 0.0
  %849 = vmatpush1.msra.mxu0 0.0
  %850 = vmatprep.subr.mxu0 0.0
  %851 = vmatpush1.msra.mxu0 0.0
  %852 = vmatprep.subr.mxu0 0.0
  %853 = vmatpush1.msra.mxu0 0.0
  %854 = vmatprep.subr.mxu0 0.0
  %855 = vmatpush1.msra.mxu0 0.0
  %856 = vmatprep.mubr.f32.mxu0 0.0
  %857 = vmatmul.mubr.f32.gmra.mrb[0].mxu0 %v790
  %v858 = vpop.f32.mrb[0].mxu0
  %v859 = vadd.f32 0.0, %v858
  %v860 = vpop.f32.mrb[0].mxu0
  %v861 = vadd.f32 0.0, %v860
  %862 = vdwg.mxu0
  %863 = vmatprep.subr.mxu0 %v29
  %864 = vmatpush1.msra.mxu0 %v28
  %865 = vmatprep.subr.mxu0 0.0
  %866 = vmatpush1.msra.mxu0 0.0
  %867 = vmatprep.subr.mxu0 0.0
  %868 = vmatpush1.msra.mxu0 0.0
  %869 = vmatprep.subr.mxu0 0.0
  %870 = vmatpush1.msra.mxu0 0.0
  %871 = vmatprep.subr.mxu0 0.0
  %872 = vmatpush1.msra.mxu0 0.0
  %873 = vmatprep.subr.mxu0 0.0
  %874 = vmatpush1.msra.mxu0 0.0
  %875 = vmatprep.subr.mxu0 0.0
  %876 = vmatpush1.msra.mxu0 0.0
  %877 = vmatprep.subr.mxu0 0.0
  %878 = vmatpush1.msra.mxu0 0.0
  %879 = vmatprep.subr.mxu0 0.0
  %880 = vmatpush1.msra.mxu0 0.0
  %881 = vmatprep.subr.mxu0 0.0
  %882 = vmatpush1.msra.mxu0 0.0
  %883 = vmatprep.subr.mxu0 0.0
  %884 = vmatpush1.msra.mxu0 0.0
  %885 = vmatprep.subr.mxu0 0.0
  %886 = vmatpush1.msra.mxu0 0.0
  %887 = vmatprep.subr.mxu0 0.0
  %888 = vmatpush1.msra.mxu0 0.0
  %889 = vmatprep.subr.mxu0 0.0
  %890 = vmatpush1.msra.mxu0 0.0
  %891 = vmatprep.subr.mxu0 0.0
  %892 = vmatpush1.msra.mxu0 0.0
  %893 = vmatprep.subr.mxu0 0.0
  %894 = vmatpush1.msra.mxu0 0.0
  %895 = vmatprep.subr.mxu0 0.0
  %896 = vmatpush1.msra.mxu0 0.0
  %897 = vmatprep.subr.mxu0 0.0
  %898 = vmatpush1.msra.mxu0 0.0
  %899 = vmatprep.subr.mxu0 0.0
  %900 = vmatpush1.msra.mxu0 0.0
  %901 = vmatprep.subr.mxu0 0.0
  %902 = vmatpush1.msra.mxu0 0.0
  %903 = vmatprep.subr.mxu0 0.0
  %904 = vmatpush1.msra.mxu0 0.0
  %905 = vmatprep.subr.mxu0 0.0
  %906 = vmatpush1.msra.mxu0 0.0
  %907 = vmatprep.subr.mxu0 0.0
  %908 = vmatpush1.msra.mxu0 0.0
  %909 = vmatprep.subr.mxu0 0.0
  %910 = vmatpush1.msra.mxu0 0.0
  %911 = vmatprep.subr.mxu0 0.0
  %912 = vmatpush1.msra.mxu0 0.0
  %913 = vmatprep.subr.mxu0 0.0
  %914 = vmatpush1.msra.mxu0 0.0
  %915 = vmatprep.subr.mxu0 0.0
  %916 = vmatpush1.msra.mxu0 0.0
  %917 = vmatprep.subr.mxu0 0.0
  %918 = vmatpush1.msra.mxu0 0.0
  %919 = vmatprep.subr.mxu0 0.0
  %920 = vmatpush1.msra.mxu0 0.0
  %921 = vmatprep.subr.mxu0 0.0
  %922 = vmatpush1.msra.mxu0 0.0
  %923 = vmatprep.subr.mxu0 0.0
  %924 = vmatpush1.msra.mxu0 0.0
  %925 = vmatprep.subr.mxu0 0.0
  %926 = vmatpush1.msra.mxu0 0.0
  %927 = vmatprep.mubr.f32.mxu0 0.0
  %928 = vmatmul.mubr.f32.gmra.mrb[0].mxu0 %v790
  %v929 = vpop.f32.mrb[0].mxu0
  %v930 = vadd.f32 0.0, %v929
  %v931 = vpop.f32.mrb[0].mxu0
  %v932 = vadd.f32 0.0, %v931
  %933 = vdwg.mxu0
  %v934 = vadd.f32 %v783, %v859
  %v935 = vadd.f32 %v784, %v861
  %v936 = vadd.f32 %v785, %v930
  %v937 = vadd.f32 %v786, %v932
  %s938 = scalar_lea.vmem %s1, 40
  %v939 = vld [vmem:[%s938] sm:$0xff]
  %940 = vrot.lane.b32.xlu0 %v26, 127
  %v941 = vpop.permute.xlu0 %940
  %942 = vrot.lane.b32.xlu0 %v27, 127
  %v943 = vpop.permute.xlu0 %942
  %944 = vrot.lane.b32.xlu0 %v28, 127
  %v945 = vpop.permute.xlu0 %944
  %946 = vrot.lane.b32.xlu0 %v29, 127
  %v947 = vpop.permute.xlu0 %946
  %vm948 = vcmp.lt.s32.totalorder %v40, 127
  %v949 = vsel %vm948, %v945, %v947
  %v950 = vsel %vm948, %v943, %v945
  %v951 = vsel %vm948, %v941, %v943
  %v952 = vsel %vm948, %v947, %v941
  %s953 = scalar_lea.vmem %s6, 20
  %v954 = vld [vmem:[%s953] sm:$0xf]
  %v956 = vlaneseq
  %v957 = vshrl.u32 %v956, 7
  %v958 = vsub.s32 0, %v957
  %v959 = vrot.slane %v954, %v958
  %v960 = vlaneseq
  %v961 = vshrl.u32 %v960, 7
  %v962 = vsub.s32 1, %v961
  %v963 = vrot.slane %v954, %v962
  %v964 = vlaneseq
  %v965 = vshrl.u32 %v964, 7
  %v966 = vsub.s32 2, %v965
  %v967 = vrot.slane %v954, %v966
  %v968 = vlaneseq
  %v969 = vshrl.u32 %v968, 7
  %v970 = vsub.s32 3, %v969
  %v971 = vrot.slane %v954, %v970
  %v976 = vmul.f32 %v951, %v959
  %v977 = vmul.f32 %v950, %v963
  %v978 = vmul.f32 %v949, %v967
  %v979 = vmul.f32 %v952, %v971
  %v981 = vsel %vm114, %v939, 0
  %983 = vmatprep.subr.mxu0 %v977
  %984 = vmatpush1.msra.mxu0 %v976
  %985 = vmatprep.subr.mxu0 0.0
  %986 = vmatpush1.msra.mxu0 0.0
  %987 = vmatprep.subr.mxu0 0.0
  %988 = vmatpush1.msra.mxu0 0.0
  %989 = vmatprep.subr.mxu0 0.0
  %990 = vmatpush1.msra.mxu0 0.0
  %991 = vmatprep.subr.mxu0 0.0
  %992 = vmatpush1.msra.mxu0 0.0
  %993 = vmatprep.subr.mxu0 0.0
  %994 = vmatpush1.msra.mxu0 0.0
  %995 = vmatprep.subr.mxu0 0.0
  %996 = vmatpush1.msra.mxu0 0.0
  %997 = vmatprep.subr.mxu0 0.0
  %998 = vmatpush1.msra.mxu0 0.0
  %999 = vmatprep.subr.mxu0 0.0
  %1000 = vmatpush1.msra.mxu0 0.0
  %1001 = vmatprep.subr.mxu0 0.0
  %1002 = vmatpush1.msra.mxu0 0.0
  %1003 = vmatprep.subr.mxu0 0.0
  %1004 = vmatpush1.msra.mxu0 0.0
  %1005 = vmatprep.subr.mxu0 0.0
  %1006 = vmatpush1.msra.mxu0 0.0
  %1007 = vmatprep.subr.mxu0 0.0
  %1008 = vmatpush1.msra.mxu0 0.0
  %1009 = vmatprep.subr.mxu0 0.0
  %1010 = vmatpush1.msra.mxu0 0.0
  %1011 = vmatprep.subr.mxu0 0.0
  %1012 = vmatpush1.msra.mxu0 0.0
  %1013 = vmatprep.subr.mxu0 0.0
  %1014 = vmatpush1.msra.mxu0 0.0
  %1015 = vmatprep.subr.mxu0 0.0
  %1016 = vmatpush1.msra.mxu0 0.0
  %1017 = vmatprep.subr.mxu0 0.0
  %1018 = vmatpush1.msra.mxu0 0.0
  %1019 = vmatprep.subr.mxu0 0.0
  %1020 = vmatpush1.msra.mxu0 0.0
  %1021 = vmatprep.subr.mxu0 0.0
  %1022 = vmatpush1.msra.mxu0 0.0
  %1023 = vmatprep.subr.mxu0 0.0
  %1024 = vmatpush1.msra.mxu0 0.0
  %1025 = vmatprep.subr.mxu0 0.0
  %1026 = vmatpush1.msra.mxu0 0.0
  %1027 = vmatprep.subr.mxu0 0.0
  %1028 = vmatpush1.msra.mxu0 0.0
  %1029 = vmatprep.subr.mxu0 0.0
  %1030 = vmatpush1.msra.mxu0 0.0
  %1031 = vmatprep.subr.mxu0 0.0
  %1032 = vmatpush1.msra.mxu0 0.0
  %1033 = vmatprep.subr.mxu0 0.0
  %1034 = vmatpush1.msra.mxu0 0.0
  %1035 = vmatprep.subr.mxu0 0.0
  %1036 = vmatpush1.msra.mxu0 0.0
  %1037 = vmatprep.subr.mxu0 0.0
  %1038 = vmatpush1.msra.mxu0 0.0
  %1039 = vmatprep.subr.mxu0 0.0
  %1040 = vmatpush1.msra.mxu0 0.0
  %1041 = vmatprep.subr.mxu0 0.0
  %1042 = vmatpush1.msra.mxu0 0.0
  %1043 = vmatprep.subr.mxu0 0.0
  %1044 = vmatpush1.msra.mxu0 0.0
  %1045 = vmatprep.subr.mxu0 0.0
  %1046 = vmatpush1.msra.mxu0 0.0
  %1047 = vmatprep.mubr.f32.mxu0 0.0
  %1048 = vmatmul.mubr.f32.gmra.mrb[0].mxu0 %v981
  %v1049 = vpop.f32.mrb[0].mxu0
  %v1050 = vadd.f32 0.0, %v1049
  %v1051 = vpop.f32.mrb[0].mxu0
  %v1052 = vadd.f32 0.0, %v1051
  %1053 = vdwg.mxu0
  %1054 = vmatprep.subr.mxu0 %v979
  %1055 = vmatpush1.msra.mxu0 %v978
  %1056 = vmatprep.subr.mxu0 0.0
  %1057 = vmatpush1.msra.mxu0 0.0
  %1058 = vmatprep.subr.mxu0 0.0
  %1059 = vmatpush1.msra.mxu0 0.0
  %1060 = vmatprep.subr.mxu0 0.0
  %1061 = vmatpush1.msra.mxu0 0.0
  %1062 = vmatprep.subr.mxu0 0.0
  %1063 = vmatpush1.msra.mxu0 0.0
  %1064 = vmatprep.subr.mxu0 0.0
  %1065 = vmatpush1.msra.mxu0 0.0
  %1066 = vmatprep.subr.mxu0 0.0
  %1067 = vmatpush1.msra.mxu0 0.0
  %1068 = vmatprep.subr.mxu0 0.0
  %1069 = vmatpush1.msra.mxu0 0.0
  %1070 = vmatprep.subr.mxu0 0.0
  %1071 = vmatpush1.msra.mxu0 0.0
  %1072 = vmatprep.subr.mxu0 0.0
  %1073 = vmatpush1.msra.mxu0 0.0
  %1074 = vmatprep.subr.mxu0 0.0
  %1075 = vmatpush1.msra.mxu0 0.0
  %1076 = vmatprep.subr.mxu0 0.0
  %1077 = vmatpush1.msra.mxu0 0.0
  %1078 = vmatprep.subr.mxu0 0.0
  %1079 = vmatpush1.msra.mxu0 0.0
  %1080 = vmatprep.subr.mxu0 0.0
  %1081 = vmatpush1.msra.mxu0 0.0
  %1082 = vmatprep.subr.mxu0 0.0
  %1083 = vmatpush1.msra.mxu0 0.0
  %1084 = vmatprep.subr.mxu0 0.0
  %1085 = vmatpush1.msra.mxu0 0.0
  %1086 = vmatprep.subr.mxu0 0.0
  %1087 = vmatpush1.msra.mxu0 0.0
  %1088 = vmatprep.subr.mxu0 0.0
  %1089 = vmatpush1.msra.mxu0 0.0
  %1090 = vmatprep.subr.mxu0 0.0
  %1091 = vmatpush1.msra.mxu0 0.0
  %1092 = vmatprep.subr.mxu0 0.0
  %1093 = vmatpush1.msra.mxu0 0.0
  %1094 = vmatprep.subr.mxu0 0.0
  %1095 = vmatpush1.msra.mxu0 0.0
  %1096 = vmatprep.subr.mxu0 0.0
  %1097 = vmatpush1.msra.mxu0 0.0
  %1098 = vmatprep.subr.mxu0 0.0
  %1099 = vmatpush1.msra.mxu0 0.0
  %1100 = vmatprep.subr.mxu0 0.0
  %1101 = vmatpush1.msra.mxu0 0.0
  %1102 = vmatprep.subr.mxu0 0.0
  %1103 = vmatpush1.msra.mxu0 0.0
  %1104 = vmatprep.subr.mxu0 0.0
  %1105 = vmatpush1.msra.mxu0 0.0
  %1106 = vmatprep.subr.mxu0 0.0
  %1107 = vmatpush1.msra.mxu0 0.0
  %1108 = vmatprep.subr.mxu0 0.0
  %1109 = vmatpush1.msra.mxu0 0.0
  %1110 = vmatprep.subr.mxu0 0.0
  %1111 = vmatpush1.msra.mxu0 0.0
  %1112 = vmatprep.subr.mxu0 0.0
  %1113 = vmatpush1.msra.mxu0 0.0
  %1114 = vmatprep.subr.mxu0 0.0
  %1115 = vmatpush1.msra.mxu0 0.0
  %1116 = vmatprep.subr.mxu0 0.0
  %1117 = vmatpush1.msra.mxu0 0.0
  %1118 = vmatprep.mubr.f32.mxu0 0.0
  %1119 = vmatmul.mubr.f32.gmra.mrb[0].mxu0 %v981
  %v1120 = vpop.f32.mrb[0].mxu0
  %v1121 = vadd.f32 0.0, %v1120
  %v1122 = vpop.f32.mrb[0].mxu0
  %v1123 = vadd.f32 0.0, %v1122
  %1124 = vdwg.mxu0
  %v1125 = vadd.f32 %v934, %v1050
  %v1126 = vadd.f32 %v935, %v1052
  %v1127 = vadd.f32 %v936, %v1121
  %v1128 = vadd.f32 %v937, %v1123
  %s1129 = scalar_lea.vmem %s1, 48
  %v1130 = vld [vmem:[%s1129] sm:$0xff]
  %1131 = vrot.lane.b32.xlu0 %v26, 113
  %v1132 = vpop.permute.xlu0 %1131
  %1133 = vrot.lane.b32.xlu0 %v27, 113
  %v1134 = vpop.permute.xlu0 %1133
  %1135 = vrot.lane.b32.xlu0 %v28, 113
  %v1136 = vpop.permute.xlu0 %1135
  %1137 = vrot.lane.b32.xlu0 %v29, 113
  %v1138 = vpop.permute.xlu0 %1137
  %vm1139 = vcmp.lt.s32.totalorder %v40, 113
  %v1140 = vsel %vm1139, %v1136, %v1138
  %v1141 = vsel %vm1139, %v1134, %v1136
  %v1142 = vsel %vm1139, %v1132, %v1134
  %v1143 = vsel %vm1139, %v1138, %v1132
  %s1144 = scalar_lea.vmem %s6, 24
  %v1145 = vld [vmem:[%s1144] sm:$0xf]
  %v1147 = vlaneseq
  %v1148 = vshrl.u32 %v1147, 7
  %v1149 = vsub.s32 0, %v1148
  %v1150 = vrot.slane %v1145, %v1149
  %v1151 = vlaneseq
  %v1152 = vshrl.u32 %v1151, 7
  %v1153 = vsub.s32 1, %v1152
  %v1154 = vrot.slane %v1145, %v1153
  %v1155 = vlaneseq
  %v1156 = vshrl.u32 %v1155, 7
  %v1157 = vsub.s32 2, %v1156
  %v1158 = vrot.slane %v1145, %v1157
  %v1159 = vlaneseq
  %v1160 = vshrl.u32 %v1159, 7
  %v1161 = vsub.s32 3, %v1160
  %v1162 = vrot.slane %v1145, %v1161
  %v1167 = vmul.f32 %v1142, %v1150
  %v1168 = vmul.f32 %v1141, %v1154
  %v1169 = vmul.f32 %v1140, %v1158
  %v1170 = vmul.f32 %v1143, %v1162
  %v1172 = vsel %vm114, %v1130, 0
  %1174 = vmatprep.subr.mxu0 %v1168
  %1175 = vmatpush1.msra.mxu0 %v1167
  %1176 = vmatprep.subr.mxu0 0.0
  %1177 = vmatpush1.msra.mxu0 0.0
  %1178 = vmatprep.subr.mxu0 0.0
  %1179 = vmatpush1.msra.mxu0 0.0
  %1180 = vmatprep.subr.mxu0 0.0
  %1181 = vmatpush1.msra.mxu0 0.0
  %1182 = vmatprep.subr.mxu0 0.0
  %1183 = vmatpush1.msra.mxu0 0.0
  %1184 = vmatprep.subr.mxu0 0.0
  %1185 = vmatpush1.msra.mxu0 0.0
  %1186 = vmatprep.subr.mxu0 0.0
  %1187 = vmatpush1.msra.mxu0 0.0
  %1188 = vmatprep.subr.mxu0 0.0
  %1189 = vmatpush1.msra.mxu0 0.0
  %1190 = vmatprep.subr.mxu0 0.0
  %1191 = vmatpush1.msra.mxu0 0.0
  %1192 = vmatprep.subr.mxu0 0.0
  %1193 = vmatpush1.msra.mxu0 0.0
  %1194 = vmatprep.subr.mxu0 0.0
  %1195 = vmatpush1.msra.mxu0 0.0
  %1196 = vmatprep.subr.mxu0 0.0
  %1197 = vmatpush1.msra.mxu0 0.0
  %1198 = vmatprep.subr.mxu0 0.0
  %1199 = vmatpush1.msra.mxu0 0.0
  %1200 = vmatprep.subr.mxu0 0.0
  %1201 = vmatpush1.msra.mxu0 0.0
  %1202 = vmatprep.subr.mxu0 0.0
  %1203 = vmatpush1.msra.mxu0 0.0
  %1204 = vmatprep.subr.mxu0 0.0
  %1205 = vmatpush1.msra.mxu0 0.0
  %1206 = vmatprep.subr.mxu0 0.0
  %1207 = vmatpush1.msra.mxu0 0.0
  %1208 = vmatprep.subr.mxu0 0.0
  %1209 = vmatpush1.msra.mxu0 0.0
  %1210 = vmatprep.subr.mxu0 0.0
  %1211 = vmatpush1.msra.mxu0 0.0
  %1212 = vmatprep.subr.mxu0 0.0
  %1213 = vmatpush1.msra.mxu0 0.0
  %1214 = vmatprep.subr.mxu0 0.0
  %1215 = vmatpush1.msra.mxu0 0.0
  %1216 = vmatprep.subr.mxu0 0.0
  %1217 = vmatpush1.msra.mxu0 0.0
  %1218 = vmatprep.subr.mxu0 0.0
  %1219 = vmatpush1.msra.mxu0 0.0
  %1220 = vmatprep.subr.mxu0 0.0
  %1221 = vmatpush1.msra.mxu0 0.0
  %1222 = vmatprep.subr.mxu0 0.0
  %1223 = vmatpush1.msra.mxu0 0.0
  %1224 = vmatprep.subr.mxu0 0.0
  %1225 = vmatpush1.msra.mxu0 0.0
  %1226 = vmatprep.subr.mxu0 0.0
  %1227 = vmatpush1.msra.mxu0 0.0
  %1228 = vmatprep.subr.mxu0 0.0
  %1229 = vmatpush1.msra.mxu0 0.0
  %1230 = vmatprep.subr.mxu0 0.0
  %1231 = vmatpush1.msra.mxu0 0.0
  %1232 = vmatprep.subr.mxu0 0.0
  %1233 = vmatpush1.msra.mxu0 0.0
  %1234 = vmatprep.subr.mxu0 0.0
  %1235 = vmatpush1.msra.mxu0 0.0
  %1236 = vmatprep.subr.mxu0 0.0
  %1237 = vmatpush1.msra.mxu0 0.0
  %1238 = vmatprep.mubr.f32.mxu0 0.0
  %1239 = vmatmul.mubr.f32.gmra.mrb[0].mxu0 %v1172
  %v1240 = vpop.f32.mrb[0].mxu0
  %v1241 = vadd.f32 0.0, %v1240
  %v1242 = vpop.f32.mrb[0].mxu0
  %v1243 = vadd.f32 0.0, %v1242
  %1244 = vdwg.mxu0
  %1245 = vmatprep.subr.mxu0 %v1170
  %1246 = vmatpush1.msra.mxu0 %v1169
  %1247 = vmatprep.subr.mxu0 0.0
  %1248 = vmatpush1.msra.mxu0 0.0
  %1249 = vmatprep.subr.mxu0 0.0
  %1250 = vmatpush1.msra.mxu0 0.0
  %1251 = vmatprep.subr.mxu0 0.0
  %1252 = vmatpush1.msra.mxu0 0.0
  %1253 = vmatprep.subr.mxu0 0.0
  %1254 = vmatpush1.msra.mxu0 0.0
  %1255 = vmatprep.subr.mxu0 0.0
  %1256 = vmatpush1.msra.mxu0 0.0
  %1257 = vmatprep.subr.mxu0 0.0
  %1258 = vmatpush1.msra.mxu0 0.0
  %1259 = vmatprep.subr.mxu0 0.0
  %1260 = vmatpush1.msra.mxu0 0.0
  %1261 = vmatprep.subr.mxu0 0.0
  %1262 = vmatpush1.msra.mxu0 0.0
  %1263 = vmatprep.subr.mxu0 0.0
  %1264 = vmatpush1.msra.mxu0 0.0
  %1265 = vmatprep.subr.mxu0 0.0
  %1266 = vmatpush1.msra.mxu0 0.0
  %1267 = vmatprep.subr.mxu0 0.0
  %1268 = vmatpush1.msra.mxu0 0.0
  %1269 = vmatprep.subr.mxu0 0.0
  %1270 = vmatpush1.msra.mxu0 0.0
  %1271 = vmatprep.subr.mxu0 0.0
  %1272 = vmatpush1.msra.mxu0 0.0
  %1273 = vmatprep.subr.mxu0 0.0
  %1274 = vmatpush1.msra.mxu0 0.0
  %1275 = vmatprep.subr.mxu0 0.0
  %1276 = vmatpush1.msra.mxu0 0.0
  %1277 = vmatprep.subr.mxu0 0.0
  %1278 = vmatpush1.msra.mxu0 0.0
  %1279 = vmatprep.subr.mxu0 0.0
  %1280 = vmatpush1.msra.mxu0 0.0
  %1281 = vmatprep.subr.mxu0 0.0
  %1282 = vmatpush1.msra.mxu0 0.0
  %1283 = vmatprep.subr.mxu0 0.0
  %1284 = vmatpush1.msra.mxu0 0.0
  %1285 = vmatprep.subr.mxu0 0.0
  %1286 = vmatpush1.msra.mxu0 0.0
  %1287 = vmatprep.subr.mxu0 0.0
  %1288 = vmatpush1.msra.mxu0 0.0
  %1289 = vmatprep.subr.mxu0 0.0
  %1290 = vmatpush1.msra.mxu0 0.0
  %1291 = vmatprep.subr.mxu0 0.0
  %1292 = vmatpush1.msra.mxu0 0.0
  %1293 = vmatprep.subr.mxu0 0.0
  %1294 = vmatpush1.msra.mxu0 0.0
  %1295 = vmatprep.subr.mxu0 0.0
  %1296 = vmatpush1.msra.mxu0 0.0
  %1297 = vmatprep.subr.mxu0 0.0
  %1298 = vmatpush1.msra.mxu0 0.0
  %1299 = vmatprep.subr.mxu0 0.0
  %1300 = vmatpush1.msra.mxu0 0.0
  %1301 = vmatprep.subr.mxu0 0.0
  %1302 = vmatpush1.msra.mxu0 0.0
  %1303 = vmatprep.subr.mxu0 0.0
  %1304 = vmatpush1.msra.mxu0 0.0
  %1305 = vmatprep.subr.mxu0 0.0
  %1306 = vmatpush1.msra.mxu0 0.0
  %1307 = vmatprep.subr.mxu0 0.0
  %1308 = vmatpush1.msra.mxu0 0.0
  %1309 = vmatprep.mubr.f32.mxu0 0.0
  %1310 = vmatmul.mubr.f32.gmra.mrb[0].mxu0 %v1172
  %v1311 = vpop.f32.mrb[0].mxu0
  %v1312 = vadd.f32 0.0, %v1311
  %v1313 = vpop.f32.mrb[0].mxu0
  %v1314 = vadd.f32 0.0, %v1313
  %1315 = vdwg.mxu0
  %v1316 = vadd.f32 %v1125, %v1241
  %v1317 = vadd.f32 %v1126, %v1243
  %v1318 = vadd.f32 %v1127, %v1312
  %v1319 = vadd.f32 %v1128, %v1314
  %s1320 = scalar_lea.vmem %s1, 56
  %v1321 = vld [vmem:[%s1320] sm:$0xff]
  %1322 = vrot.lane.b32.xlu0 %v26, 112
  %v1323 = vpop.permute.xlu0 %1322
  %1324 = vrot.lane.b32.xlu0 %v27, 112
  %v1325 = vpop.permute.xlu0 %1324
  %1326 = vrot.lane.b32.xlu0 %v28, 112
  %v1327 = vpop.permute.xlu0 %1326
  %1328 = vrot.lane.b32.xlu0 %v29, 112
  %v1329 = vpop.permute.xlu0 %1328
  %vm1330 = vcmp.lt.s32.totalorder %v40, 112
  %v1331 = vsel %vm1330, %v1327, %v1329
  %v1332 = vsel %vm1330, %v1325, %v1327
  %v1333 = vsel %vm1330, %v1323, %v1325
  %v1334 = vsel %vm1330, %v1329, %v1323
  %s1335 = scalar_lea.vmem %s6, 28
  %v1336 = vld [vmem:[%s1335] sm:$0xf]
  %v1338 = vlaneseq
  %v1339 = vshrl.u32 %v1338, 7
  %v1340 = vsub.s32 0, %v1339
  %v1341 = vrot.slane %v1336, %v1340
  %v1342 = vlaneseq
  %v1343 = vshrl.u32 %v1342, 7
  %v1344 = vsub.s32 1, %v1343
  %v1345 = vrot.slane %v1336, %v1344
  %v1346 = vlaneseq
  %v1347 = vshrl.u32 %v1346, 7
  %v1348 = vsub.s32 2, %v1347
  %v1349 = vrot.slane %v1336, %v1348
  %v1350 = vlaneseq
  %v1351 = vshrl.u32 %v1350, 7
  %v1352 = vsub.s32 3, %v1351
  %v1353 = vrot.slane %v1336, %v1352
  %v1358 = vmul.f32 %v1333, %v1341
  %v1359 = vmul.f32 %v1332, %v1345
  %v1360 = vmul.f32 %v1331, %v1349
  %v1361 = vmul.f32 %v1334, %v1353
  %v1363 = vsel %vm114, %v1321, 0
  %1365 = vmatprep.subr.mxu0 %v1359
  %1366 = vmatpush1.msra.mxu0 %v1358
  %1367 = vmatprep.subr.mxu0 0.0
  %1368 = vmatpush1.msra.mxu0 0.0
  %1369 = vmatprep.subr.mxu0 0.0
  %1370 = vmatpush1.msra.mxu0 0.0
  %1371 = vmatprep.subr.mxu0 0.0
  %1372 = vmatpush1.msra.mxu0 0.0
  %1373 = vmatprep.subr.mxu0 0.0
  %1374 = vmatpush1.msra.mxu0 0.0
  %1375 = vmatprep.subr.mxu0 0.0
  %1376 = vmatpush1.msra.mxu0 0.0
  %1377 = vmatprep.subr.mxu0 0.0
  %1378 = vmatpush1.msra.mxu0 0.0
  %1379 = vmatprep.subr.mxu0 0.0
  %1380 = vmatpush1.msra.mxu0 0.0
  %1381 = vmatprep.subr.mxu0 0.0
  %1382 = vmatpush1.msra.mxu0 0.0
  %1383 = vmatprep.subr.mxu0 0.0
  %1384 = vmatpush1.msra.mxu0 0.0
  %1385 = vmatprep.subr.mxu0 0.0
  %1386 = vmatpush1.msra.mxu0 0.0
  %1387 = vmatprep.subr.mxu0 0.0
  %1388 = vmatpush1.msra.mxu0 0.0
  %1389 = vmatprep.subr.mxu0 0.0
  %1390 = vmatpush1.msra.mxu0 0.0
  %1391 = vmatprep.subr.mxu0 0.0
  %1392 = vmatpush1.msra.mxu0 0.0
  %1393 = vmatprep.subr.mxu0 0.0
  %1394 = vmatpush1.msra.mxu0 0.0
  %1395 = vmatprep.subr.mxu0 0.0
  %1396 = vmatpush1.msra.mxu0 0.0
  %1397 = vmatprep.subr.mxu0 0.0
  %1398 = vmatpush1.msra.mxu0 0.0
  %1399 = vmatprep.subr.mxu0 0.0
  %1400 = vmatpush1.msra.mxu0 0.0
  %1401 = vmatprep.subr.mxu0 0.0
  %1402 = vmatpush1.msra.mxu0 0.0
  %1403 = vmatprep.subr.mxu0 0.0
  %1404 = vmatpush1.msra.mxu0 0.0
  %1405 = vmatprep.subr.mxu0 0.0
  %1406 = vmatpush1.msra.mxu0 0.0
  %1407 = vmatprep.subr.mxu0 0.0
  %1408 = vmatpush1.msra.mxu0 0.0
  %1409 = vmatprep.subr.mxu0 0.0
  %1410 = vmatpush1.msra.mxu0 0.0
  %1411 = vmatprep.subr.mxu0 0.0
  %1412 = vmatpush1.msra.mxu0 0.0
  %1413 = vmatprep.subr.mxu0 0.0
  %1414 = vmatpush1.msra.mxu0 0.0
  %1415 = vmatprep.subr.mxu0 0.0
  %1416 = vmatpush1.msra.mxu0 0.0
  %1417 = vmatprep.subr.mxu0 0.0
  %1418 = vmatpush1.msra.mxu0 0.0
  %1419 = vmatprep.subr.mxu0 0.0
  %1420 = vmatpush1.msra.mxu0 0.0
  %1421 = vmatprep.subr.mxu0 0.0
  %1422 = vmatpush1.msra.mxu0 0.0
  %1423 = vmatprep.subr.mxu0 0.0
  %1424 = vmatpush1.msra.mxu0 0.0
  %1425 = vmatprep.subr.mxu0 0.0
  %1426 = vmatpush1.msra.mxu0 0.0
  %1427 = vmatprep.subr.mxu0 0.0
  %1428 = vmatpush1.msra.mxu0 0.0
  %1429 = vmatprep.mubr.f32.mxu0 0.0
  %1430 = vmatmul.mubr.f32.gmra.mrb[0].mxu0 %v1363
  %v1431 = vpop.f32.mrb[0].mxu0
  %v1432 = vadd.f32 0.0, %v1431
  %v1433 = vpop.f32.mrb[0].mxu0
  %v1434 = vadd.f32 0.0, %v1433
  %1435 = vdwg.mxu0
  %1436 = vmatprep.subr.mxu0 %v1361
  %1437 = vmatpush1.msra.mxu0 %v1360
  %1438 = vmatprep.subr.mxu0 0.0
  %1439 = vmatpush1.msra.mxu0 0.0
  %1440 = vmatprep.subr.mxu0 0.0
  %1441 = vmatpush1.msra.mxu0 0.0
  %1442 = vmatprep.subr.mxu0 0.0
  %1443 = vmatpush1.msra.mxu0 0.0
  %1444 = vmatprep.subr.mxu0 0.0
  %1445 = vmatpush1.msra.mxu0 0.0
  %1446 = vmatprep.subr.mxu0 0.0
  %1447 = vmatpush1.msra.mxu0 0.0
  %1448 = vmatprep.subr.mxu0 0.0
  %1449 = vmatpush1.msra.mxu0 0.0
  %1450 = vmatprep.subr.mxu0 0.0
  %1451 = vmatpush1.msra.mxu0 0.0
  %1452 = vmatprep.subr.mxu0 0.0
  %1453 = vmatpush1.msra.mxu0 0.0
  %1454 = vmatprep.subr.mxu0 0.0
  %1455 = vmatpush1.msra.mxu0 0.0
  %1456 = vmatprep.subr.mxu0 0.0
  %1457 = vmatpush1.msra.mxu0 0.0
  %1458 = vmatprep.subr.mxu0 0.0
  %1459 = vmatpush1.msra.mxu0 0.0
  %1460 = vmatprep.subr.mxu0 0.0
  %1461 = vmatpush1.msra.mxu0 0.0
  %1462 = vmatprep.subr.mxu0 0.0
  %1463 = vmatpush1.msra.mxu0 0.0
  %1464 = vmatprep.subr.mxu0 0.0
  %1465 = vmatpush1.msra.mxu0 0.0
  %1466 = vmatprep.subr.mxu0 0.0
  %1467 = vmatpush1.msra.mxu0 0.0
  %1468 = vmatprep.subr.mxu0 0.0
  %1469 = vmatpush1.msra.mxu0 0.0
  %1470 = vmatprep.subr.mxu0 0.0
  %1471 = vmatpush1.msra.mxu0 0.0
  %1472 = vmatprep.subr.mxu0 0.0
  %1473 = vmatpush1.msra.mxu0 0.0
  %1474 = vmatprep.subr.mxu0 0.0
  %1475 = vmatpush1.msra.mxu0 0.0
  %1476 = vmatprep.subr.mxu0 0.0
  %1477 = vmatpush1.msra.mxu0 0.0
  %1478 = vmatprep.subr.mxu0 0.0
  %1479 = vmatpush1.msra.mxu0 0.0
  %1480 = vmatprep.subr.mxu0 0.0
  %1481 = vmatpush1.msra.mxu0 0.0
  %1482 = vmatprep.subr.mxu0 0.0
  %1483 = vmatpush1.msra.mxu0 0.0
  %1484 = vmatprep.subr.mxu0 0.0
  %1485 = vmatpush1.msra.mxu0 0.0
  %1486 = vmatprep.subr.mxu0 0.0
  %1487 = vmatpush1.msra.mxu0 0.0
  %1488 = vmatprep.subr.mxu0 0.0
  %1489 = vmatpush1.msra.mxu0 0.0
  %1490 = vmatprep.subr.mxu0 0.0
  %1491 = vmatpush1.msra.mxu0 0.0
  %1492 = vmatprep.subr.mxu0 0.0
  %1493 = vmatpush1.msra.mxu0 0.0
  %1494 = vmatprep.subr.mxu0 0.0
  %1495 = vmatpush1.msra.mxu0 0.0
  %1496 = vmatprep.subr.mxu0 0.0
  %1497 = vmatpush1.msra.mxu0 0.0
  %1498 = vmatprep.subr.mxu0 0.0
  %1499 = vmatpush1.msra.mxu0 0.0
  %1500 = vmatprep.mubr.f32.mxu0 0.0
  %1501 = vmatmul.mubr.f32.gmra.mrb[0].mxu0 %v1363
  %v1502 = vpop.f32.mrb[0].mxu0
  %v1503 = vadd.f32 0.0, %v1502
  %v1504 = vpop.f32.mrb[0].mxu0
  %v1505 = vadd.f32 0.0, %v1504
  %1506 = vdwg.mxu0
  %v1507 = vadd.f32 %v1316, %v1432
  %v1508 = vadd.f32 %v1317, %v1434
  %v1509 = vadd.f32 %v1318, %v1503
  %v1510 = vadd.f32 %v1319, %v1505
  %s1511 = scalar_lea.vmem %s1, 64
  %v1512 = vld [vmem:[%s1511] sm:$0xff]
  %1513 = vrot.lane.b32.xlu0 %v26, 111
  %v1514 = vpop.permute.xlu0 %1513
  %1515 = vrot.lane.b32.xlu0 %v27, 111
  %v1516 = vpop.permute.xlu0 %1515
  %1517 = vrot.lane.b32.xlu0 %v28, 111
  %v1518 = vpop.permute.xlu0 %1517
  %1519 = vrot.lane.b32.xlu0 %v29, 111
  %v1520 = vpop.permute.xlu0 %1519
  %vm1521 = vcmp.lt.s32.totalorder %v40, 111
  %v1522 = vsel %vm1521, %v1518, %v1520
  %v1523 = vsel %vm1521, %v1516, %v1518
  %v1524 = vsel %vm1521, %v1514, %v1516
  %v1525 = vsel %vm1521, %v1520, %v1514
  %s1526 = scalar_lea.vmem %s6, 32
  %v1527 = vld [vmem:[%s1526] sm:$0xf]
  %v1529 = vlaneseq
  %v1530 = vshrl.u32 %v1529, 7
  %v1531 = vsub.s32 0, %v1530
  %v1532 = vrot.slane %v1527, %v1531
  %v1533 = vlaneseq
  %v1534 = vshrl.u32 %v1533, 7
  %v1535 = vsub.s32 1, %v1534
  %v1536 = vrot.slane %v1527, %v1535
  %v1537 = vlaneseq
  %v1538 = vshrl.u32 %v1537, 7
  %v1539 = vsub.s32 2, %v1538
  %v1540 = vrot.slane %v1527, %v1539
  %v1541 = vlaneseq
  %v1542 = vshrl.u32 %v1541, 7
  %v1543 = vsub.s32 3, %v1542
  %v1544 = vrot.slane %v1527, %v1543
  %v1549 = vmul.f32 %v1524, %v1532
  %v1550 = vmul.f32 %v1523, %v1536
  %v1551 = vmul.f32 %v1522, %v1540
  %v1552 = vmul.f32 %v1525, %v1544
  %v1554 = vsel %vm114, %v1512, 0
  %1556 = vmatprep.subr.mxu0 %v1550
  %1557 = vmatpush1.msra.mxu0 %v1549
  %1558 = vmatprep.subr.mxu0 0.0
  %1559 = vmatpush1.msra.mxu0 0.0
  %1560 = vmatprep.subr.mxu0 0.0
  %1561 = vmatpush1.msra.mxu0 0.0
  %1562 = vmatprep.subr.mxu0 0.0
  %1563 = vmatpush1.msra.mxu0 0.0
  %1564 = vmatprep.subr.mxu0 0.0
  %1565 = vmatpush1.msra.mxu0 0.0
  %1566 = vmatprep.subr.mxu0 0.0
  %1567 = vmatpush1.msra.mxu0 0.0
  %1568 = vmatprep.subr.mxu0 0.0
  %1569 = vmatpush1.msra.mxu0 0.0
  %1570 = vmatprep.subr.mxu0 0.0
  %1571 = vmatpush1.msra.mxu0 0.0
  %1572 = vmatprep.subr.mxu0 0.0
  %1573 = vmatpush1.msra.mxu0 0.0
  %1574 = vmatprep.subr.mxu0 0.0
  %1575 = vmatpush1.msra.mxu0 0.0
  %1576 = vmatprep.subr.mxu0 0.0
  %1577 = vmatpush1.msra.mxu0 0.0
  %1578 = vmatprep.subr.mxu0 0.0
  %1579 = vmatpush1.msra.mxu0 0.0
  %1580 = vmatprep.subr.mxu0 0.0
  %1581 = vmatpush1.msra.mxu0 0.0
  %1582 = vmatprep.subr.mxu0 0.0
  %1583 = vmatpush1.msra.mxu0 0.0
  %1584 = vmatprep.subr.mxu0 0.0
  %1585 = vmatpush1.msra.mxu0 0.0
  %1586 = vmatprep.subr.mxu0 0.0
  %1587 = vmatpush1.msra.mxu0 0.0
  %1588 = vmatprep.subr.mxu0 0.0
  %1589 = vmatpush1.msra.mxu0 0.0
  %1590 = vmatprep.subr.mxu0 0.0
  %1591 = vmatpush1.msra.mxu0 0.0
  %1592 = vmatprep.subr.mxu0 0.0
  %1593 = vmatpush1.msra.mxu0 0.0
  %1594 = vmatprep.subr.mxu0 0.0
  %1595 = vmatpush1.msra.mxu0 0.0
  %1596 = vmatprep.subr.mxu0 0.0
  %1597 = vmatpush1.msra.mxu0 0.0
  %1598 = vmatprep.subr.mxu0 0.0
  %1599 = vmatpush1.msra.mxu0 0.0
  %1600 = vmatprep.subr.mxu0 0.0
  %1601 = vmatpush1.msra.mxu0 0.0
  %1602 = vmatprep.subr.mxu0 0.0
  %1603 = vmatpush1.msra.mxu0 0.0
  %1604 = vmatprep.subr.mxu0 0.0
  %1605 = vmatpush1.msra.mxu0 0.0
  %1606 = vmatprep.subr.mxu0 0.0
  %1607 = vmatpush1.msra.mxu0 0.0
  %1608 = vmatprep.subr.mxu0 0.0
  %1609 = vmatpush1.msra.mxu0 0.0
  %1610 = vmatprep.subr.mxu0 0.0
  %1611 = vmatpush1.msra.mxu0 0.0
  %1612 = vmatprep.subr.mxu0 0.0
  %1613 = vmatpush1.msra.mxu0 0.0
  %1614 = vmatprep.subr.mxu0 0.0
  %1615 = vmatpush1.msra.mxu0 0.0
  %1616 = vmatprep.subr.mxu0 0.0
  %1617 = vmatpush1.msra.mxu0 0.0
  %1618 = vmatprep.subr.mxu0 0.0
  %1619 = vmatpush1.msra.mxu0 0.0
  %1620 = vmatprep.mubr.f32.mxu0 0.0
  %1621 = vmatmul.mubr.f32.gmra.mrb[0].mxu0 %v1554
  %v1622 = vpop.f32.mrb[0].mxu0
  %v1623 = vadd.f32 0.0, %v1622
  %v1624 = vpop.f32.mrb[0].mxu0
  %v1625 = vadd.f32 0.0, %v1624
  %1626 = vdwg.mxu0
  %1627 = vmatprep.subr.mxu0 %v1552
  %1628 = vmatpush1.msra.mxu0 %v1551
  %1629 = vmatprep.subr.mxu0 0.0
  %1630 = vmatpush1.msra.mxu0 0.0
  %1631 = vmatprep.subr.mxu0 0.0
  %1632 = vmatpush1.msra.mxu0 0.0
  %1633 = vmatprep.subr.mxu0 0.0
  %1634 = vmatpush1.msra.mxu0 0.0
  %1635 = vmatprep.subr.mxu0 0.0
  %1636 = vmatpush1.msra.mxu0 0.0
  %1637 = vmatprep.subr.mxu0 0.0
  %1638 = vmatpush1.msra.mxu0 0.0
  %1639 = vmatprep.subr.mxu0 0.0
  %1640 = vmatpush1.msra.mxu0 0.0
  %1641 = vmatprep.subr.mxu0 0.0
  %1642 = vmatpush1.msra.mxu0 0.0
  %1643 = vmatprep.subr.mxu0 0.0
  %1644 = vmatpush1.msra.mxu0 0.0
  %1645 = vmatprep.subr.mxu0 0.0
  %1646 = vmatpush1.msra.mxu0 0.0
  %1647 = vmatprep.subr.mxu0 0.0
  %1648 = vmatpush1.msra.mxu0 0.0
  %1649 = vmatprep.subr.mxu0 0.0
  %1650 = vmatpush1.msra.mxu0 0.0
  %1651 = vmatprep.subr.mxu0 0.0
  %1652 = vmatpush1.msra.mxu0 0.0
  %1653 = vmatprep.subr.mxu0 0.0
  %1654 = vmatpush1.msra.mxu0 0.0
  %1655 = vmatprep.subr.mxu0 0.0
  %1656 = vmatpush1.msra.mxu0 0.0
  %1657 = vmatprep.subr.mxu0 0.0
  %1658 = vmatpush1.msra.mxu0 0.0
  %1659 = vmatprep.subr.mxu0 0.0
  %1660 = vmatpush1.msra.mxu0 0.0
  %1661 = vmatprep.subr.mxu0 0.0
  %1662 = vmatpush1.msra.mxu0 0.0
  %1663 = vmatprep.subr.mxu0 0.0
  %1664 = vmatpush1.msra.mxu0 0.0
  %1665 = vmatprep.subr.mxu0 0.0
  %1666 = vmatpush1.msra.mxu0 0.0
  %1667 = vmatprep.subr.mxu0 0.0
  %1668 = vmatpush1.msra.mxu0 0.0
  %1669 = vmatprep.subr.mxu0 0.0
  %1670 = vmatpush1.msra.mxu0 0.0
  %1671 = vmatprep.subr.mxu0 0.0
  %1672 = vmatpush1.msra.mxu0 0.0
  %1673 = vmatprep.subr.mxu0 0.0
  %1674 = vmatpush1.msra.mxu0 0.0
  %1675 = vmatprep.subr.mxu0 0.0
  %1676 = vmatpush1.msra.mxu0 0.0
  %1677 = vmatprep.subr.mxu0 0.0
  %1678 = vmatpush1.msra.mxu0 0.0
  %1679 = vmatprep.subr.mxu0 0.0
  %1680 = vmatpush1.msra.mxu0 0.0
  %1681 = vmatprep.subr.mxu0 0.0
  %1682 = vmatpush1.msra.mxu0 0.0
  %1683 = vmatprep.subr.mxu0 0.0
  %1684 = vmatpush1.msra.mxu0 0.0
  %1685 = vmatprep.subr.mxu0 0.0
  %1686 = vmatpush1.msra.mxu0 0.0
  %1687 = vmatprep.subr.mxu0 0.0
  %1688 = vmatpush1.msra.mxu0 0.0
  %1689 = vmatprep.subr.mxu0 0.0
  %1690 = vmatpush1.msra.mxu0 0.0
  %1691 = vmatprep.mubr.f32.mxu0 0.0
  %1692 = vmatmul.mubr.f32.gmra.mrb[0].mxu0 %v1554
  %v1693 = vpop.f32.mrb[0].mxu0
  %v1694 = vadd.f32 0.0, %v1693
  %v1695 = vpop.f32.mrb[0].mxu0
  %v1696 = vadd.f32 0.0, %v1695
  %1697 = vdwg.mxu0
  %v1698 = vadd.f32 %v1507, %v1623
  %v1699 = vadd.f32 %v1508, %v1625
  %v1700 = vadd.f32 %v1509, %v1694
  %v1701 = vadd.f32 %v1510, %v1696
  %v1702 = vadd.f32 %v1698, %v1699
  %v1703 = vadd.f32 %v1702, %v1700
  %v1704 = vadd.f32 %v1703, %v1701
  %1705 = vadd.xlane.f32.xlu0 %v1704
  %v1706 = vpop.xlane.xlu0 %1705
  %v1707 = vrcp.pop 512.0
  %v1708 = vmul.f32 %v1706, %v1707
  %v1709 = vsub.f32 %v1698, %v1708
  %v1710 = vsub.f32 %v1699, %v1708
  %v1711 = vsub.f32 %v1700, %v1708
  %v1712 = vsub.f32 %v1701, %v1708
  %v1713 = vmul.f32 %v1709, %v1709
  %v1714 = vmul.f32 %v1710, %v1710
  %v1715 = vmul.f32 %v1711, %v1711
  %v1716 = vmul.f32 %v1712, %v1712
  %v1717 = vadd.f32 %v1713, %v1714
  %v1718 = vadd.f32 %v1717, %v1715
  %v1719 = vadd.f32 %v1718, %v1716
  %1720 = vadd.xlane.f32.xlu0 %v1719
  %v1721 = vpop.xlane.xlu0 %1720
  %v1722 = vmul.f32 %v1721, %v1707
  %v1723 = vadd.f32 %v1722, 1e-05
  %v1724 = vrsqrt.pop %v1723
  %v1725 = vld [vmem:[%s2] sm:$0xff]
  %v1726 = vmul.f32 %v1724, %v1725
  %1728 = vset.pattern.permute.xlu0 0
  %1729 = vperm.xlu0 %1728, %v1726
  %v1730 = vpop.permute.xlu0 %1729
  %v1732 = vmul.f32 %v1709, %v1730
  %v1733 = vmul.f32 %v1710, %v1730
  %v1734 = vmul.f32 %v1711, %v1730
  %v1735 = vmul.f32 %v1712, %v1730
  %v1736 = vld [vmem:[%s3] sm:$0xff]
  %1738 = vset.pattern.permute.xlu0 0
  %1739 = vperm.xlu0 %1738, %v1736
  %v1740 = vpop.permute.xlu0 %1739
  %v1742 = vadd.f32 %v1732, %v1740
  %v1743 = vadd.f32 %v1733, %v1740
  %v1744 = vadd.f32 %v1734, %v1740
  %v1745 = vadd.f32 %v1735, %v1740
  %v1746 = vmax.f32 %v1742, 0.0
  %v1747 = vmax.f32 %v1743, 0.0
  %v1748 = vmax.f32 %v1744, 0.0
  %v1749 = vmax.f32 %v1745, 0.0
  %v1750 = vld [vmem:[%s4] sm:$0xff]
  %v1751 = vld [vmem:[%s4 + $0x8] sm:$0xff]
  %1752 = vrot.lane.b32.xlu0 %v1746, 17
  %v1753 = vpop.permute.xlu0 %1752
  %1754 = vrot.lane.b32.xlu0 %v1747, 17
  %v1755 = vpop.permute.xlu0 %1754
  %1756 = vrot.lane.b32.xlu0 %v1748, 17
  %v1757 = vpop.permute.xlu0 %1756
  %1758 = vrot.lane.b32.xlu0 %v1749, 17
  %v1759 = vpop.permute.xlu0 %1758
  %v1760 = vsel %vm41, %v1757, %v1759
  %v1761 = vsel %vm41, %v1755, %v1757
  %v1762 = vsel %vm41, %v1753, %v1755
  %v1763 = vsel %vm41, %v1759, %v1753
  %v1764 = vmul.f32 %v1763, %v51
  %v1765 = vmul.f32 %v1762, %v55
  %v1766 = vmul.f32 %v1761, %v59
  %v1767 = vmul.f32 %v1760, %v63
  %s1768 = scalar_lea.vmem %s4, 16
  %v1769 = vld [vmem:[%s1768] sm:$0xff]
  %v1770 = vld [vmem:[%s1768 + $0x8] sm:$0xff]
  %1771 = vrot.lane.b32.xlu0 %v1746, 16
  %v1772 = vpop.permute.xlu0 %1771
  %1773 = vrot.lane.b32.xlu0 %v1747, 16
  %v1774 = vpop.permute.xlu0 %1773
  %1775 = vrot.lane.b32.xlu0 %v1748, 16
  %v1776 = vpop.permute.xlu0 %1775
  %1777 = vrot.lane.b32.xlu0 %v1749, 16
  %v1778 = vpop.permute.xlu0 %1777
  %v1779 = vsel %vm82, %v1776, %v1778
  %v1780 = vsel %vm82, %v1774, %v1776
  %v1781 = vsel %vm82, %v1772, %v1774
  %v1782 = vsel %vm82, %v1778, %v1772
  %v1783 = vmul.f32 %v1782, %v93
  %v1784 = vmul.f32 %v1781, %v97
  %v1785 = vmul.f32 %v1780, %v101
  %v1786 = vmul.f32 %v1779, %v105
  %v1788 = vsel %vm114, %v1769, 0
  %v1791 = vsel %vm114, %v1770, 0
  %1793 = vmatprep.subr.mxu0 %v1784
  %1794 = vmatpush1.msra.mxu0 %v1783
  %1795 = vmatprep.subr.mxu0 0.0
  %1796 = vmatpush1.msra.mxu0 0.0
  %1797 = vmatprep.subr.mxu0 0.0
  %1798 = vmatpush1.msra.mxu0 0.0
  %1799 = vmatprep.subr.mxu0 0.0
  %1800 = vmatpush1.msra.mxu0 0.0
  %1801 = vmatprep.subr.mxu0 0.0
  %1802 = vmatpush1.msra.mxu0 0.0
  %1803 = vmatprep.subr.mxu0 0.0
  %1804 = vmatpush1.msra.mxu0 0.0
  %1805 = vmatprep.subr.mxu0 0.0
  %1806 = vmatpush1.msra.mxu0 0.0
  %1807 = vmatprep.subr.mxu0 0.0
  %1808 = vmatpush1.msra.mxu0 0.0
  %1809 = vmatprep.subr.mxu0 0.0
  %1810 = vmatpush1.msra.mxu0 0.0
  %1811 = vmatprep.subr.mxu0 0.0
  %1812 = vmatpush1.msra.mxu0 0.0
  %1813 = vmatprep.subr.mxu0 0.0
  %1814 = vmatpush1.msra.mxu0 0.0
  %1815 = vmatprep.subr.mxu0 0.0
  %1816 = vmatpush1.msra.mxu0 0.0
  %1817 = vmatprep.subr.mxu0 0.0
  %1818 = vmatpush1.msra.mxu0 0.0
  %1819 = vmatprep.subr.mxu0 0.0
  %1820 = vmatpush1.msra.mxu0 0.0
  %1821 = vmatprep.subr.mxu0 0.0
  %1822 = vmatpush1.msra.mxu0 0.0
  %1823 = vmatprep.subr.mxu0 0.0
  %1824 = vmatpush1.msra.mxu0 0.0
  %1825 = vmatprep.subr.mxu0 0.0
  %1826 = vmatpush1.msra.mxu0 0.0
  %1827 = vmatprep.subr.mxu0 0.0
  %1828 = vmatpush1.msra.mxu0 0.0
  %1829 = vmatprep.subr.mxu0 0.0
  %1830 = vmatpush1.msra.mxu0 0.0
  %1831 = vmatprep.subr.mxu0 0.0
  %1832 = vmatpush1.msra.mxu0 0.0
  %1833 = vmatprep.subr.mxu0 0.0
  %1834 = vmatpush1.msra.mxu0 0.0
  %1835 = vmatprep.subr.mxu0 0.0
  %1836 = vmatpush1.msra.mxu0 0.0
  %1837 = vmatprep.subr.mxu0 0.0
  %1838 = vmatpush1.msra.mxu0 0.0
  %1839 = vmatprep.subr.mxu0 0.0
  %1840 = vmatpush1.msra.mxu0 0.0
  %1841 = vmatprep.subr.mxu0 0.0
  %1842 = vmatpush1.msra.mxu0 0.0
  %1843 = vmatprep.subr.mxu0 0.0
  %1844 = vmatpush1.msra.mxu0 0.0
  %1845 = vmatprep.subr.mxu0 0.0
  %1846 = vmatpush1.msra.mxu0 0.0
  %1847 = vmatprep.subr.mxu0 0.0
  %1848 = vmatpush1.msra.mxu0 0.0
  %1849 = vmatprep.subr.mxu0 0.0
  %1850 = vmatpush1.msra.mxu0 0.0
  %1851 = vmatprep.subr.mxu0 0.0
  %1852 = vmatpush1.msra.mxu0 0.0
  %1853 = vmatprep.subr.mxu0 0.0
  %1854 = vmatpush1.msra.mxu0 0.0
  %1855 = vmatprep.subr.mxu0 0.0
  %1856 = vmatpush1.msra.mxu0 0.0
  %1857 = vmatprep.mubr.f32.mxu0 0.0
  %1858 = vmatmul.mubr.f32.gmra.mrb[0].mxu0 %v1788
  %v1859 = vpop.f32.mrb[0].mxu0
  %v1860 = vadd.f32 0.0, %v1859
  %v1861 = vpop.f32.mrb[0].mxu0
  %v1862 = vadd.f32 0.0, %v1861
  %1863 = vmatprep.mubr.f32.mxu0 0.0
  %1864 = vmatmul.mubr.f32.gmra.mrb[0].mxu0 %v1791
  %v1865 = vpop.f32.mrb[0].mxu0
  %v1866 = vadd.f32 0.0, %v1865
  %v1867 = vpop.f32.mrb[0].mxu0
  %v1868 = vadd.f32 0.0, %v1867
  %1869 = vdwg.mxu0
  %1870 = vmatprep.subr.mxu0 %v1786
  %1871 = vmatpush1.msra.mxu0 %v1785
  %1872 = vmatprep.subr.mxu0 0.0
  %1873 = vmatpush1.msra.mxu0 0.0
  %1874 = vmatprep.subr.mxu0 0.0
  %1875 = vmatpush1.msra.mxu0 0.0
  %1876 = vmatprep.subr.mxu0 0.0
  %1877 = vmatpush1.msra.mxu0 0.0
  %1878 = vmatprep.subr.mxu0 0.0
  %1879 = vmatpush1.msra.mxu0 0.0
  %1880 = vmatprep.subr.mxu0 0.0
  %1881 = vmatpush1.msra.mxu0 0.0
  %1882 = vmatprep.subr.mxu0 0.0
  %1883 = vmatpush1.msra.mxu0 0.0
  %1884 = vmatprep.subr.mxu0 0.0
  %1885 = vmatpush1.msra.mxu0 0.0
  %1886 = vmatprep.subr.mxu0 0.0
  %1887 = vmatpush1.msra.mxu0 0.0
  %1888 = vmatprep.subr.mxu0 0.0
  %1889 = vmatpush1.msra.mxu0 0.0
  %1890 = vmatprep.subr.mxu0 0.0
  %1891 = vmatpush1.msra.mxu0 0.0
  %1892 = vmatprep.subr.mxu0 0.0
  %1893 = vmatpush1.msra.mxu0 0.0
  %1894 = vmatprep.subr.mxu0 0.0
  %1895 = vmatpush1.msra.mxu0 0.0
  %1896 = vmatprep.subr.mxu0 0.0
  %1897 = vmatpush1.msra.mxu0 0.0
  %1898 = vmatprep.subr.mxu0 0.0
  %1899 = vmatpush1.msra.mxu0 0.0
  %1900 = vmatprep.subr.mxu0 0.0
  %1901 = vmatpush1.msra.mxu0 0.0
  %1902 = vmatprep.subr.mxu0 0.0
  %1903 = vmatpush1.msra.mxu0 0.0
  %1904 = vmatprep.subr.mxu0 0.0
  %1905 = vmatpush1.msra.mxu0 0.0
  %1906 = vmatprep.subr.mxu0 0.0
  %1907 = vmatpush1.msra.mxu0 0.0
  %1908 = vmatprep.subr.mxu0 0.0
  %1909 = vmatpush1.msra.mxu0 0.0
  %1910 = vmatprep.subr.mxu0 0.0
  %1911 = vmatpush1.msra.mxu0 0.0
  %1912 = vmatprep.subr.mxu0 0.0
  %1913 = vmatpush1.msra.mxu0 0.0
  %1914 = vmatprep.subr.mxu0 0.0
  %1915 = vmatpush1.msra.mxu0 0.0
  %1916 = vmatprep.subr.mxu0 0.0
  %1917 = vmatpush1.msra.mxu0 0.0
  %1918 = vmatprep.subr.mxu0 0.0
  %1919 = vmatpush1.msra.mxu0 0.0
  %1920 = vmatprep.subr.mxu0 0.0
  %1921 = vmatpush1.msra.mxu0 0.0
  %1922 = vmatprep.subr.mxu0 0.0
  %1923 = vmatpush1.msra.mxu0 0.0
  %1924 = vmatprep.subr.mxu0 0.0
  %1925 = vmatpush1.msra.mxu0 0.0
  %1926 = vmatprep.subr.mxu0 0.0
  %1927 = vmatpush1.msra.mxu0 0.0
  %1928 = vmatprep.subr.mxu0 0.0
  %1929 = vmatpush1.msra.mxu0 0.0
  %1930 = vmatprep.subr.mxu0 0.0
  %1931 = vmatpush1.msra.mxu0 0.0
  %1932 = vmatprep.subr.mxu0 0.0
  %1933 = vmatpush1.msra.mxu0 0.0
  %1934 = vmatprep.mubr.f32.mxu0 0.0
  %1935 = vmatmul.mubr.f32.gmra.mrb[0].mxu0 %v1788
  %v1936 = vpop.f32.mrb[0].mxu0
  %v1937 = vadd.f32 0.0, %v1936
  %v1938 = vpop.f32.mrb[0].mxu0
  %v1939 = vadd.f32 0.0, %v1938
  %1940 = vmatprep.mubr.f32.mxu0 0.0
  %1941 = vmatmul.mubr.f32.gmra.mrb[0].mxu0 %v1791
  %v1942 = vpop.f32.mrb[0].mxu0
  %v1943 = vadd.f32 0.0, %v1942
  %v1944 = vpop.f32.mrb[0].mxu0
  %v1945 = vadd.f32 0.0, %v1944
  %1946 = vdwg.mxu0
  %v1948 = vsel %vm114, %v1750, 0
  %v1951 = vsel %vm114, %v1751, 0
  %1953 = vmatprep.subr.mxu0 %v1765
  %1954 = vmatpush1.msra.mxu0 %v1764
  %1955 = vmatprep.subr.mxu0 0.0
  %1956 = vmatpush1.msra.mxu0 0.0
  %1957 = vmatprep.subr.mxu0 0.0
  %1958 = vmatpush1.msra.mxu0 0.0
  %1959 = vmatprep.subr.mxu0 0.0
  %1960 = vmatpush1.msra.mxu0 0.0
  %1961 = vmatprep.subr.mxu0 0.0
  %1962 = vmatpush1.msra.mxu0 0.0
  %1963 = vmatprep.subr.mxu0 0.0
  %1964 = vmatpush1.msra.mxu0 0.0
  %1965 = vmatprep.subr.mxu0 0.0
  %1966 = vmatpush1.msra.mxu0 0.0
  %1967 = vmatprep.subr.mxu0 0.0
  %1968 = vmatpush1.msra.mxu0 0.0
  %1969 = vmatprep.subr.mxu0 0.0
  %1970 = vmatpush1.msra.mxu0 0.0
  %1971 = vmatprep.subr.mxu0 0.0
  %1972 = vmatpush1.msra.mxu0 0.0
  %1973 = vmatprep.subr.mxu0 0.0
  %1974 = vmatpush1.msra.mxu0 0.0
  %1975 = vmatprep.subr.mxu0 0.0
  %1976 = vmatpush1.msra.mxu0 0.0
  %1977 = vmatprep.subr.mxu0 0.0
  %1978 = vmatpush1.msra.mxu0 0.0
  %1979 = vmatprep.subr.mxu0 0.0
  %1980 = vmatpush1.msra.mxu0 0.0
  %1981 = vmatprep.subr.mxu0 0.0
  %1982 = vmatpush1.msra.mxu0 0.0
  %1983 = vmatprep.subr.mxu0 0.0
  %1984 = vmatpush1.msra.mxu0 0.0
  %1985 = vmatprep.subr.mxu0 0.0
  %1986 = vmatpush1.msra.mxu0 0.0
  %1987 = vmatprep.subr.mxu0 0.0
  %1988 = vmatpush1.msra.mxu0 0.0
  %1989 = vmatprep.subr.mxu0 0.0
  %1990 = vmatpush1.msra.mxu0 0.0
  %1991 = vmatprep.subr.mxu0 0.0
  %1992 = vmatpush1.msra.mxu0 0.0
  %1993 = vmatprep.subr.mxu0 0.0
  %1994 = vmatpush1.msra.mxu0 0.0
  %1995 = vmatprep.subr.mxu0 0.0
  %1996 = vmatpush1.msra.mxu0 0.0
  %1997 = vmatprep.subr.mxu0 0.0
  %1998 = vmatpush1.msra.mxu0 0.0
  %1999 = vmatprep.subr.mxu0 0.0
  %2000 = vmatpush1.msra.mxu0 0.0
  %2001 = vmatprep.subr.mxu0 0.0
  %2002 = vmatpush1.msra.mxu0 0.0
  %2003 = vmatprep.subr.mxu0 0.0
  %2004 = vmatpush1.msra.mxu0 0.0
  %2005 = vmatprep.subr.mxu0 0.0
  %2006 = vmatpush1.msra.mxu0 0.0
  %2007 = vmatprep.subr.mxu0 0.0
  %2008 = vmatpush1.msra.mxu0 0.0
  %2009 = vmatprep.subr.mxu0 0.0
  %2010 = vmatpush1.msra.mxu0 0.0
  %2011 = vmatprep.subr.mxu0 0.0
  %2012 = vmatpush1.msra.mxu0 0.0
  %2013 = vmatprep.subr.mxu0 0.0
  %2014 = vmatpush1.msra.mxu0 0.0
  %2015 = vmatprep.subr.mxu0 0.0
  %2016 = vmatpush1.msra.mxu0 0.0
  %2017 = vmatprep.mubr.f32.mxu0 0.0
  %2018 = vmatmul.mubr.f32.gmra.mrb[0].mxu0 %v1948
  %v2019 = vpop.f32.mrb[0].mxu0
  %v2020 = vadd.f32 %v1860, %v2019
  %v2021 = vpop.f32.mrb[0].mxu0
  %v2022 = vadd.f32 %v1862, %v2021
  %2023 = vmatprep.mubr.f32.mxu0 0.0
  %2024 = vmatmul.mubr.f32.gmra.mrb[0].mxu0 %v1951
  %v2025 = vpop.f32.mrb[0].mxu0
  %v2026 = vadd.f32 %v1866, %v2025
  %v2027 = vpop.f32.mrb[0].mxu0
  %v2028 = vadd.f32 %v1868, %v2027
  %2029 = vdwg.mxu0
  %2030 = vmatprep.subr.mxu0 %v1767
  %2031 = vmatpush1.msra.mxu0 %v1766
  %2032 = vmatprep.subr.mxu0 0.0
  %2033 = vmatpush1.msra.mxu0 0.0
  %2034 = vmatprep.subr.mxu0 0.0
  %2035 = vmatpush1.msra.mxu0 0.0
  %2036 = vmatprep.subr.mxu0 0.0
  %2037 = vmatpush1.msra.mxu0 0.0
  %2038 = vmatprep.subr.mxu0 0.0
  %2039 = vmatpush1.msra.mxu0 0.0
  %2040 = vmatprep.subr.mxu0 0.0
  %2041 = vmatpush1.msra.mxu0 0.0
  %2042 = vmatprep.subr.mxu0 0.0
  %2043 = vmatpush1.msra.mxu0 0.0
  %2044 = vmatprep.subr.mxu0 0.0
  %2045 = vmatpush1.msra.mxu0 0.0
  %2046 = vmatprep.subr.mxu0 0.0
  %2047 = vmatpush1.msra.mxu0 0.0
  %2048 = vmatprep.subr.mxu0 0.0
  %2049 = vmatpush1.msra.mxu0 0.0
  %2050 = vmatprep.subr.mxu0 0.0
  %2051 = vmatpush1.msra.mxu0 0.0
  %2052 = vmatprep.subr.mxu0 0.0
  %2053 = vmatpush1.msra.mxu0 0.0
  %2054 = vmatprep.subr.mxu0 0.0
  %2055 = vmatpush1.msra.mxu0 0.0
  %2056 = vmatprep.subr.mxu0 0.0
  %2057 = vmatpush1.msra.mxu0 0.0
  %2058 = vmatprep.subr.mxu0 0.0
  %2059 = vmatpush1.msra.mxu0 0.0
  %2060 = vmatprep.subr.mxu0 0.0
  %2061 = vmatpush1.msra.mxu0 0.0
  %2062 = vmatprep.subr.mxu0 0.0
  %2063 = vmatpush1.msra.mxu0 0.0
  %2064 = vmatprep.subr.mxu0 0.0
  %2065 = vmatpush1.msra.mxu0 0.0
  %2066 = vmatprep.subr.mxu0 0.0
  %2067 = vmatpush1.msra.mxu0 0.0
  %2068 = vmatprep.subr.mxu0 0.0
  %2069 = vmatpush1.msra.mxu0 0.0
  %2070 = vmatprep.subr.mxu0 0.0
  %2071 = vmatpush1.msra.mxu0 0.0
  %2072 = vmatprep.subr.mxu0 0.0
  %2073 = vmatpush1.msra.mxu0 0.0
  %2074 = vmatprep.subr.mxu0 0.0
  %2075 = vmatpush1.msra.mxu0 0.0
  %2076 = vmatprep.subr.mxu0 0.0
  %2077 = vmatpush1.msra.mxu0 0.0
  %2078 = vmatprep.subr.mxu0 0.0
  %2079 = vmatpush1.msra.mxu0 0.0
  %2080 = vmatprep.subr.mxu0 0.0
  %2081 = vmatpush1.msra.mxu0 0.0
  %2082 = vmatprep.subr.mxu0 0.0
  %2083 = vmatpush1.msra.mxu0 0.0
  %2084 = vmatprep.subr.mxu0 0.0
  %2085 = vmatpush1.msra.mxu0 0.0
  %2086 = vmatprep.subr.mxu0 0.0
  %2087 = vmatpush1.msra.mxu0 0.0
  %2088 = vmatprep.subr.mxu0 0.0
  %2089 = vmatpush1.msra.mxu0 0.0
  %2090 = vmatprep.subr.mxu0 0.0
  %2091 = vmatpush1.msra.mxu0 0.0
  %2092 = vmatprep.subr.mxu0 0.0
  %2093 = vmatpush1.msra.mxu0 0.0
  %2094 = vmatprep.mubr.f32.mxu0 0.0
  %2095 = vmatmul.mubr.f32.gmra.mrb[0].mxu0 %v1948
  %v2096 = vpop.f32.mrb[0].mxu0
  %v2097 = vadd.f32 %v1937, %v2096
  %v2098 = vpop.f32.mrb[0].mxu0
  %v2099 = vadd.f32 %v1939, %v2098
  %2100 = vmatprep.mubr.f32.mxu0 0.0
  %2101 = vmatmul.mubr.f32.gmra.mrb[0].mxu0 %v1951
  %v2102 = vpop.f32.mrb[0].mxu0
  %v2103 = vadd.f32 %v1943, %v2102
  %v2104 = vpop.f32.mrb[0].mxu0
  %v2105 = vadd.f32 %v1945, %v2104
  %2106 = vdwg.mxu0
  %s2107 = scalar_lea.vmem %s4, 32
  %v2108 = vld [vmem:[%s2107] sm:$0xff]
  %v2109 = vld [vmem:[%s2107 + $0x8] sm:$0xff]
  %2110 = vrot.lane.b32.xlu0 %v1746, 15
  %v2111 = vpop.permute.xlu0 %2110
  %2112 = vrot.lane.b32.xlu0 %v1747, 15
  %v2113 = vpop.permute.xlu0 %2112
  %2114 = vrot.lane.b32.xlu0 %v1748, 15
  %v2115 = vpop.permute.xlu0 %2114
  %2116 = vrot.lane.b32.xlu0 %v1749, 15
  %v2117 = vpop.permute.xlu0 %2116
  %v2118 = vsel %vm415, %v2115, %v2117
  %v2119 = vsel %vm415, %v2113, %v2115
  %v2120 = vsel %vm415, %v2111, %v2113
  %v2121 = vsel %vm415, %v2117, %v2111
  %v2122 = vmul.f32 %v2121, %v426
  %v2123 = vmul.f32 %v2120, %v430
  %v2124 = vmul.f32 %v2119, %v434
  %v2125 = vmul.f32 %v2118, %v438
  %v2127 = vsel %vm114, %v2108, 0
  %v2130 = vsel %vm114, %v2109, 0
  %2132 = vmatprep.subr.mxu0 %v2123
  %2133 = vmatpush1.msra.mxu0 %v2122
  %2134 = vmatprep.subr.mxu0 0.0
  %2135 = vmatpush1.msra.mxu0 0.0
  %2136 = vmatprep.subr.mxu0 0.0
  %2137 = vmatpush1.msra.mxu0 0.0
  %2138 = vmatprep.subr.mxu0 0.0
  %2139 = vmatpush1.msra.mxu0 0.0
  %2140 = vmatprep.subr.mxu0 0.0
  %2141 = vmatpush1.msra.mxu0 0.0
  %2142 = vmatprep.subr.mxu0 0.0
  %2143 = vmatpush1.msra.mxu0 0.0
  %2144 = vmatprep.subr.mxu0 0.0
  %2145 = vmatpush1.msra.mxu0 0.0
  %2146 = vmatprep.subr.mxu0 0.0
  %2147 = vmatpush1.msra.mxu0 0.0
  %2148 = vmatprep.subr.mxu0 0.0
  %2149 = vmatpush1.msra.mxu0 0.0
  %2150 = vmatprep.subr.mxu0 0.0
  %2151 = vmatpush1.msra.mxu0 0.0
  %2152 = vmatprep.subr.mxu0 0.0
  %2153 = vmatpush1.msra.mxu0 0.0
  %2154 = vmatprep.subr.mxu0 0.0
  %2155 = vmatpush1.msra.mxu0 0.0
  %2156 = vmatprep.subr.mxu0 0.0
  %2157 = vmatpush1.msra.mxu0 0.0
  %2158 = vmatprep.subr.mxu0 0.0
  %2159 = vmatpush1.msra.mxu0 0.0
  %2160 = vmatprep.subr.mxu0 0.0
  %2161 = vmatpush1.msra.mxu0 0.0
  %2162 = vmatprep.subr.mxu0 0.0
  %2163 = vmatpush1.msra.mxu0 0.0
  %2164 = vmatprep.subr.mxu0 0.0
  %2165 = vmatpush1.msra.mxu0 0.0
  %2166 = vmatprep.subr.mxu0 0.0
  %2167 = vmatpush1.msra.mxu0 0.0
  %2168 = vmatprep.subr.mxu0 0.0
  %2169 = vmatpush1.msra.mxu0 0.0
  %2170 = vmatprep.subr.mxu0 0.0
  %2171 = vmatpush1.msra.mxu0 0.0
  %2172 = vmatprep.subr.mxu0 0.0
  %2173 = vmatpush1.msra.mxu0 0.0
  %2174 = vmatprep.subr.mxu0 0.0
  %2175 = vmatpush1.msra.mxu0 0.0
  %2176 = vmatprep.subr.mxu0 0.0
  %2177 = vmatpush1.msra.mxu0 0.0
  %2178 = vmatprep.subr.mxu0 0.0
  %2179 = vmatpush1.msra.mxu0 0.0
  %2180 = vmatprep.subr.mxu0 0.0
  %2181 = vmatpush1.msra.mxu0 0.0
  %2182 = vmatprep.subr.mxu0 0.0
  %2183 = vmatpush1.msra.mxu0 0.0
  %2184 = vmatprep.subr.mxu0 0.0
  %2185 = vmatpush1.msra.mxu0 0.0
  %2186 = vmatprep.subr.mxu0 0.0
  %2187 = vmatpush1.msra.mxu0 0.0
  %2188 = vmatprep.subr.mxu0 0.0
  %2189 = vmatpush1.msra.mxu0 0.0
  %2190 = vmatprep.subr.mxu0 0.0
  %2191 = vmatpush1.msra.mxu0 0.0
  %2192 = vmatprep.subr.mxu0 0.0
  %2193 = vmatpush1.msra.mxu0 0.0
  %2194 = vmatprep.subr.mxu0 0.0
  %2195 = vmatpush1.msra.mxu0 0.0
  %2196 = vmatprep.mubr.f32.mxu0 0.0
  %2197 = vmatmul.mubr.f32.gmra.mrb[0].mxu0 %v2127
  %v2198 = vpop.f32.mrb[0].mxu0
  %v2199 = vadd.f32 0.0, %v2198
  %v2200 = vpop.f32.mrb[0].mxu0
  %v2201 = vadd.f32 0.0, %v2200
  %2202 = vmatprep.mubr.f32.mxu0 0.0
  %2203 = vmatmul.mubr.f32.gmra.mrb[0].mxu0 %v2130
  %v2204 = vpop.f32.mrb[0].mxu0
  %v2205 = vadd.f32 0.0, %v2204
  %v2206 = vpop.f32.mrb[0].mxu0
  %v2207 = vadd.f32 0.0, %v2206
  %2208 = vdwg.mxu0
  %2209 = vmatprep.subr.mxu0 %v2125
  %2210 = vmatpush1.msra.mxu0 %v2124
  %2211 = vmatprep.subr.mxu0 0.0
  %2212 = vmatpush1.msra.mxu0 0.0
  %2213 = vmatprep.subr.mxu0 0.0
  %2214 = vmatpush1.msra.mxu0 0.0
  %2215 = vmatprep.subr.mxu0 0.0
  %2216 = vmatpush1.msra.mxu0 0.0
  %2217 = vmatprep.subr.mxu0 0.0
  %2218 = vmatpush1.msra.mxu0 0.0
  %2219 = vmatprep.subr.mxu0 0.0
  %2220 = vmatpush1.msra.mxu0 0.0
  %2221 = vmatprep.subr.mxu0 0.0
  %2222 = vmatpush1.msra.mxu0 0.0
  %2223 = vmatprep.subr.mxu0 0.0
  %2224 = vmatpush1.msra.mxu0 0.0
  %2225 = vmatprep.subr.mxu0 0.0
  %2226 = vmatpush1.msra.mxu0 0.0
  %2227 = vmatprep.subr.mxu0 0.0
  %2228 = vmatpush1.msra.mxu0 0.0
  %2229 = vmatprep.subr.mxu0 0.0
  %2230 = vmatpush1.msra.mxu0 0.0
  %2231 = vmatprep.subr.mxu0 0.0
  %2232 = vmatpush1.msra.mxu0 0.0
  %2233 = vmatprep.subr.mxu0 0.0
  %2234 = vmatpush1.msra.mxu0 0.0
  %2235 = vmatprep.subr.mxu0 0.0
  %2236 = vmatpush1.msra.mxu0 0.0
  %2237 = vmatprep.subr.mxu0 0.0
  %2238 = vmatpush1.msra.mxu0 0.0
  %2239 = vmatprep.subr.mxu0 0.0
  %2240 = vmatpush1.msra.mxu0 0.0
  %2241 = vmatprep.subr.mxu0 0.0
  %2242 = vmatpush1.msra.mxu0 0.0
  %2243 = vmatprep.subr.mxu0 0.0
  %2244 = vmatpush1.msra.mxu0 0.0
  %2245 = vmatprep.subr.mxu0 0.0
  %2246 = vmatpush1.msra.mxu0 0.0
  %2247 = vmatprep.subr.mxu0 0.0
  %2248 = vmatpush1.msra.mxu0 0.0
  %2249 = vmatprep.subr.mxu0 0.0
  %2250 = vmatpush1.msra.mxu0 0.0
  %2251 = vmatprep.subr.mxu0 0.0
  %2252 = vmatpush1.msra.mxu0 0.0
  %2253 = vmatprep.subr.mxu0 0.0
  %2254 = vmatpush1.msra.mxu0 0.0
  %2255 = vmatprep.subr.mxu0 0.0
  %2256 = vmatpush1.msra.mxu0 0.0
  %2257 = vmatprep.subr.mxu0 0.0
  %2258 = vmatpush1.msra.mxu0 0.0
  %2259 = vmatprep.subr.mxu0 0.0
  %2260 = vmatpush1.msra.mxu0 0.0
  %2261 = vmatprep.subr.mxu0 0.0
  %2262 = vmatpush1.msra.mxu0 0.0
  %2263 = vmatprep.subr.mxu0 0.0
  %2264 = vmatpush1.msra.mxu0 0.0
  %2265 = vmatprep.subr.mxu0 0.0
  %2266 = vmatpush1.msra.mxu0 0.0
  %2267 = vmatprep.subr.mxu0 0.0
  %2268 = vmatpush1.msra.mxu0 0.0
  %2269 = vmatprep.subr.mxu0 0.0
  %2270 = vmatpush1.msra.mxu0 0.0
  %2271 = vmatprep.subr.mxu0 0.0
  %2272 = vmatpush1.msra.mxu0 0.0
  %2273 = vmatprep.mubr.f32.mxu0 0.0
  %2274 = vmatmul.mubr.f32.gmra.mrb[0].mxu0 %v2127
  %v2275 = vpop.f32.mrb[0].mxu0
  %v2276 = vadd.f32 0.0, %v2275
  %v2277 = vpop.f32.mrb[0].mxu0
  %v2278 = vadd.f32 0.0, %v2277
  %2279 = vmatprep.mubr.f32.mxu0 0.0
  %2280 = vmatmul.mubr.f32.gmra.mrb[0].mxu0 %v2130
  %v2281 = vpop.f32.mrb[0].mxu0
  %v2282 = vadd.f32 0.0, %v2281
  %v2283 = vpop.f32.mrb[0].mxu0
  %v2284 = vadd.f32 0.0, %v2283
  %2285 = vdwg.mxu0
  %v2286 = vadd.f32 %v2020, %v2199
  %v2287 = vadd.f32 %v2022, %v2201
  %v2288 = vadd.f32 %v2097, %v2276
  %v2289 = vadd.f32 %v2099, %v2278
  %v2290 = vadd.f32 %v2026, %v2205
  %v2291 = vadd.f32 %v2028, %v2207
  %v2292 = vadd.f32 %v2103, %v2282
  %v2293 = vadd.f32 %v2105, %v2284
  %s2294 = scalar_lea.vmem %s4, 48
  %v2295 = vld [vmem:[%s2294] sm:$0xff]
  %v2296 = vld [vmem:[%s2294 + $0x8] sm:$0xff]
  %2297 = vrot.lane.b32.xlu0 %v1746, 1
  %v2298 = vpop.permute.xlu0 %2297
  %2299 = vrot.lane.b32.xlu0 %v1747, 1
  %v2300 = vpop.permute.xlu0 %2299
  %2301 = vrot.lane.b32.xlu0 %v1748, 1
  %v2302 = vpop.permute.xlu0 %2301
  %2303 = vrot.lane.b32.xlu0 %v1749, 1
  %v2304 = vpop.permute.xlu0 %2303
  %v2305 = vsel %vm606, %v2302, %v2304
  %v2306 = vsel %vm606, %v2300, %v2302
  %v2307 = vsel %vm606, %v2298, %v2300
  %v2308 = vsel %vm606, %v2304, %v2298
  %v2309 = vmul.f32 %v2308, %v617
  %v2310 = vmul.f32 %v2307, %v621
  %v2311 = vmul.f32 %v2306, %v625
  %v2312 = vmul.f32 %v2305, %v629
  %v2314 = vsel %vm114, %v2295, 0
  %v2317 = vsel %vm114, %v2296, 0
  %2319 = vmatprep.subr.mxu0 %v2310
  %2320 = vmatpush1.msra.mxu0 %v2309
  %2321 = vmatprep.subr.mxu0 0.0
  %2322 = vmatpush1.msra.mxu0 0.0
  %2323 = vmatprep.subr.mxu0 0.0
  %2324 = vmatpush1.msra.mxu0 0.0
  %2325 = vmatprep.subr.mxu0 0.0
  %2326 = vmatpush1.msra.mxu0 0.0
  %2327 = vmatprep.subr.mxu0 0.0
  %2328 = vmatpush1.msra.mxu0 0.0
  %2329 = vmatprep.subr.mxu0 0.0
  %2330 = vmatpush1.msra.mxu0 0.0
  %2331 = vmatprep.subr.mxu0 0.0
  %2332 = vmatpush1.msra.mxu0 0.0
  %2333 = vmatprep.subr.mxu0 0.0
  %2334 = vmatpush1.msra.mxu0 0.0
  %2335 = vmatprep.subr.mxu0 0.0
  %2336 = vmatpush1.msra.mxu0 0.0
  %2337 = vmatprep.subr.mxu0 0.0
  %2338 = vmatpush1.msra.mxu0 0.0
  %2339 = vmatprep.subr.mxu0 0.0
  %2340 = vmatpush1.msra.mxu0 0.0
  %2341 = vmatprep.subr.mxu0 0.0
  %2342 = vmatpush1.msra.mxu0 0.0
  %2343 = vmatprep.subr.mxu0 0.0
  %2344 = vmatpush1.msra.mxu0 0.0
  %2345 = vmatprep.subr.mxu0 0.0
  %2346 = vmatpush1.msra.mxu0 0.0
  %2347 = vmatprep.subr.mxu0 0.0
  %2348 = vmatpush1.msra.mxu0 0.0
  %2349 = vmatprep.subr.mxu0 0.0
  %2350 = vmatpush1.msra.mxu0 0.0
  %2351 = vmatprep.subr.mxu0 0.0
  %2352 = vmatpush1.msra.mxu0 0.0
  %2353 = vmatprep.subr.mxu0 0.0
  %2354 = vmatpush1.msra.mxu0 0.0
  %2355 = vmatprep.subr.mxu0 0.0
  %2356 = vmatpush1.msra.mxu0 0.0
  %2357 = vmatprep.subr.mxu0 0.0
  %2358 = vmatpush1.msra.mxu0 0.0
  %2359 = vmatprep.subr.mxu0 0.0
  %2360 = vmatpush1.msra.mxu0 0.0
  %2361 = vmatprep.subr.mxu0 0.0
  %2362 = vmatpush1.msra.mxu0 0.0
  %2363 = vmatprep.subr.mxu0 0.0
  %2364 = vmatpush1.msra.mxu0 0.0
  %2365 = vmatprep.subr.mxu0 0.0
  %2366 = vmatpush1.msra.mxu0 0.0
  %2367 = vmatprep.subr.mxu0 0.0
  %2368 = vmatpush1.msra.mxu0 0.0
  %2369 = vmatprep.subr.mxu0 0.0
  %2370 = vmatpush1.msra.mxu0 0.0
  %2371 = vmatprep.subr.mxu0 0.0
  %2372 = vmatpush1.msra.mxu0 0.0
  %2373 = vmatprep.subr.mxu0 0.0
  %2374 = vmatpush1.msra.mxu0 0.0
  %2375 = vmatprep.subr.mxu0 0.0
  %2376 = vmatpush1.msra.mxu0 0.0
  %2377 = vmatprep.subr.mxu0 0.0
  %2378 = vmatpush1.msra.mxu0 0.0
  %2379 = vmatprep.subr.mxu0 0.0
  %2380 = vmatpush1.msra.mxu0 0.0
  %2381 = vmatprep.subr.mxu0 0.0
  %2382 = vmatpush1.msra.mxu0 0.0
  %2383 = vmatprep.mubr.f32.mxu0 0.0
  %2384 = vmatmul.mubr.f32.gmra.mrb[0].mxu0 %v2314
  %v2385 = vpop.f32.mrb[0].mxu0
  %v2386 = vadd.f32 0.0, %v2385
  %v2387 = vpop.f32.mrb[0].mxu0
  %v2388 = vadd.f32 0.0, %v2387
  %2389 = vmatprep.mubr.f32.mxu0 0.0
  %2390 = vmatmul.mubr.f32.gmra.mrb[0].mxu0 %v2317
  %v2391 = vpop.f32.mrb[0].mxu0
  %v2392 = vadd.f32 0.0, %v2391
  %v2393 = vpop.f32.mrb[0].mxu0
  %v2394 = vadd.f32 0.0, %v2393
  %2395 = vdwg.mxu0
  %2396 = vmatprep.subr.mxu0 %v2312
  %2397 = vmatpush1.msra.mxu0 %v2311
  %2398 = vmatprep.subr.mxu0 0.0
  %2399 = vmatpush1.msra.mxu0 0.0
  %2400 = vmatprep.subr.mxu0 0.0
  %2401 = vmatpush1.msra.mxu0 0.0
  %2402 = vmatprep.subr.mxu0 0.0
  %2403 = vmatpush1.msra.mxu0 0.0
  %2404 = vmatprep.subr.mxu0 0.0
  %2405 = vmatpush1.msra.mxu0 0.0
  %2406 = vmatprep.subr.mxu0 0.0
  %2407 = vmatpush1.msra.mxu0 0.0
  %2408 = vmatprep.subr.mxu0 0.0
  %2409 = vmatpush1.msra.mxu0 0.0
  %2410 = vmatprep.subr.mxu0 0.0
  %2411 = vmatpush1.msra.mxu0 0.0
  %2412 = vmatprep.subr.mxu0 0.0
  %2413 = vmatpush1.msra.mxu0 0.0
  %2414 = vmatprep.subr.mxu0 0.0
  %2415 = vmatpush1.msra.mxu0 0.0
  %2416 = vmatprep.subr.mxu0 0.0
  %2417 = vmatpush1.msra.mxu0 0.0
  %2418 = vmatprep.subr.mxu0 0.0
  %2419 = vmatpush1.msra.mxu0 0.0
  %2420 = vmatprep.subr.mxu0 0.0
  %2421 = vmatpush1.msra.mxu0 0.0
  %2422 = vmatprep.subr.mxu0 0.0
  %2423 = vmatpush1.msra.mxu0 0.0
  %2424 = vmatprep.subr.mxu0 0.0
  %2425 = vmatpush1.msra.mxu0 0.0
  %2426 = vmatprep.subr.mxu0 0.0
  %2427 = vmatpush1.msra.mxu0 0.0
  %2428 = vmatprep.subr.mxu0 0.0
  %2429 = vmatpush1.msra.mxu0 0.0
  %2430 = vmatprep.subr.mxu0 0.0
  %2431 = vmatpush1.msra.mxu0 0.0
  %2432 = vmatprep.subr.mxu0 0.0
  %2433 = vmatpush1.msra.mxu0 0.0
  %2434 = vmatprep.subr.mxu0 0.0
  %2435 = vmatpush1.msra.mxu0 0.0
  %2436 = vmatprep.subr.mxu0 0.0
  %2437 = vmatpush1.msra.mxu0 0.0
  %2438 = vmatprep.subr.mxu0 0.0
  %2439 = vmatpush1.msra.mxu0 0.0
  %2440 = vmatprep.subr.mxu0 0.0
  %2441 = vmatpush1.msra.mxu0 0.0
  %2442 = vmatprep.subr.mxu0 0.0
  %2443 = vmatpush1.msra.mxu0 0.0
  %2444 = vmatprep.subr.mxu0 0.0
  %2445 = vmatpush1.msra.mxu0 0.0
  %2446 = vmatprep.subr.mxu0 0.0
  %2447 = vmatpush1.msra.mxu0 0.0
  %2448 = vmatprep.subr.mxu0 0.0
  %2449 = vmatpush1.msra.mxu0 0.0
  %2450 = vmatprep.subr.mxu0 0.0
  %2451 = vmatpush1.msra.mxu0 0.0
  %2452 = vmatprep.subr.mxu0 0.0
  %2453 = vmatpush1.msra.mxu0 0.0
  %2454 = vmatprep.subr.mxu0 0.0
  %2455 = vmatpush1.msra.mxu0 0.0
  %2456 = vmatprep.subr.mxu0 0.0
  %2457 = vmatpush1.msra.mxu0 0.0
  %2458 = vmatprep.subr.mxu0 0.0
  %2459 = vmatpush1.msra.mxu0 0.0
  %2460 = vmatprep.mubr.f32.mxu0 0.0
  %2461 = vmatmul.mubr.f32.gmra.mrb[0].mxu0 %v2314
  %v2462 = vpop.f32.mrb[0].mxu0
  %v2463 = vadd.f32 0.0, %v2462
  %v2464 = vpop.f32.mrb[0].mxu0
  %v2465 = vadd.f32 0.0, %v2464
  %2466 = vmatprep.mubr.f32.mxu0 0.0
  %2467 = vmatmul.mubr.f32.gmra.mrb[0].mxu0 %v2317
  %v2468 = vpop.f32.mrb[0].mxu0
  %v2469 = vadd.f32 0.0, %v2468
  %v2470 = vpop.f32.mrb[0].mxu0
  %v2471 = vadd.f32 0.0, %v2470
  %2472 = vdwg.mxu0
  %v2473 = vadd.f32 %v2286, %v2386
  %v2474 = vadd.f32 %v2287, %v2388
  %v2475 = vadd.f32 %v2288, %v2463
  %v2476 = vadd.f32 %v2289, %v2465
  %v2477 = vadd.f32 %v2290, %v2392
  %v2478 = vadd.f32 %v2291, %v2394
  %v2479 = vadd.f32 %v2292, %v2469
  %v2480 = vadd.f32 %v2293, %v2471
  %s2481 = scalar_lea.vmem %s4, 64
  %v2482 = vld [vmem:[%s2481] sm:$0xff]
  %v2483 = vld [vmem:[%s2481 + $0x8] sm:$0xff]
  %v2485 = vsel %vm114, %v2482, 0
  %v2488 = vsel %vm114, %v2483, 0
  %2490 = vmatprep.subr.mxu0 %v1747
  %2491 = vmatpush1.msra.mxu0 %v1746
  %2492 = vmatprep.subr.mxu0 0.0
  %2493 = vmatpush1.msra.mxu0 0.0
  %2494 = vmatprep.subr.mxu0 0.0
  %2495 = vmatpush1.msra.mxu0 0.0
  %2496 = vmatprep.subr.mxu0 0.0
  %2497 = vmatpush1.msra.mxu0 0.0
  %2498 = vmatprep.subr.mxu0 0.0
  %2499 = vmatpush1.msra.mxu0 0.0
  %2500 = vmatprep.subr.mxu0 0.0
  %2501 = vmatpush1.msra.mxu0 0.0
  %2502 = vmatprep.subr.mxu0 0.0
  %2503 = vmatpush1.msra.mxu0 0.0
  %2504 = vmatprep.subr.mxu0 0.0
  %2505 = vmatpush1.msra.mxu0 0.0
  %2506 = vmatprep.subr.mxu0 0.0
  %2507 = vmatpush1.msra.mxu0 0.0
  %2508 = vmatprep.subr.mxu0 0.0
  %2509 = vmatpush1.msra.mxu0 0.0
  %2510 = vmatprep.subr.mxu0 0.0
  %2511 = vmatpush1.msra.mxu0 0.0
  %2512 = vmatprep.subr.mxu0 0.0
  %2513 = vmatpush1.msra.mxu0 0.0
  %2514 = vmatprep.subr.mxu0 0.0
  %2515 = vmatpush1.msra.mxu0 0.0
  %2516 = vmatprep.subr.mxu0 0.0
  %2517 = vmatpush1.msra.mxu0 0.0
  %2518 = vmatprep.subr.mxu0 0.0
  %2519 = vmatpush1.msra.mxu0 0.0
  %2520 = vmatprep.subr.mxu0 0.0
  %2521 = vmatpush1.msra.mxu0 0.0
  %2522 = vmatprep.subr.mxu0 0.0
  %2523 = vmatpush1.msra.mxu0 0.0
  %2524 = vmatprep.subr.mxu0 0.0
  %2525 = vmatpush1.msra.mxu0 0.0
  %2526 = vmatprep.subr.mxu0 0.0
  %2527 = vmatpush1.msra.mxu0 0.0
  %2528 = vmatprep.subr.mxu0 0.0
  %2529 = vmatpush1.msra.mxu0 0.0
  %2530 = vmatprep.subr.mxu0 0.0
  %2531 = vmatpush1.msra.mxu0 0.0
  %2532 = vmatprep.subr.mxu0 0.0
  %2533 = vmatpush1.msra.mxu0 0.0
  %2534 = vmatprep.subr.mxu0 0.0
  %2535 = vmatpush1.msra.mxu0 0.0
  %2536 = vmatprep.subr.mxu0 0.0
  %2537 = vmatpush1.msra.mxu0 0.0
  %2538 = vmatprep.subr.mxu0 0.0
  %2539 = vmatpush1.msra.mxu0 0.0
  %2540 = vmatprep.subr.mxu0 0.0
  %2541 = vmatpush1.msra.mxu0 0.0
  %2542 = vmatprep.subr.mxu0 0.0
  %2543 = vmatpush1.msra.mxu0 0.0
  %2544 = vmatprep.subr.mxu0 0.0
  %2545 = vmatpush1.msra.mxu0 0.0
  %2546 = vmatprep.subr.mxu0 0.0
  %2547 = vmatpush1.msra.mxu0 0.0
  %2548 = vmatprep.subr.mxu0 0.0
  %2549 = vmatpush1.msra.mxu0 0.0
  %2550 = vmatprep.subr.mxu0 0.0
  %2551 = vmatpush1.msra.mxu0 0.0
  %2552 = vmatprep.subr.mxu0 0.0
  %2553 = vmatpush1.msra.mxu0 0.0
  %2554 = vmatprep.mubr.f32.mxu0 0.0
  %2555 = vmatmul.mubr.f32.gmra.mrb[0].mxu0 %v2485
  %v2556 = vpop.f32.mrb[0].mxu0
  %v2557 = vadd.f32 0.0, %v2556
  %v2558 = vpop.f32.mrb[0].mxu0
  %v2559 = vadd.f32 0.0, %v2558
  %2560 = vmatprep.mubr.f32.mxu0 0.0
  %2561 = vmatmul.mubr.f32.gmra.mrb[0].mxu0 %v2488
  %v2562 = vpop.f32.mrb[0].mxu0
  %v2563 = vadd.f32 0.0, %v2562
  %v2564 = vpop.f32.mrb[0].mxu0
  %v2565 = vadd.f32 0.0, %v2564
  %2566 = vdwg.mxu0
  %2567 = vmatprep.subr.mxu0 %v1749
  %2568 = vmatpush1.msra.mxu0 %v1748
  %2569 = vmatprep.subr.mxu0 0.0
  %2570 = vmatpush1.msra.mxu0 0.0
  %2571 = vmatprep.subr.mxu0 0.0
  %2572 = vmatpush1.msra.mxu0 0.0
  %2573 = vmatprep.subr.mxu0 0.0
  %2574 = vmatpush1.msra.mxu0 0.0
  %2575 = vmatprep.subr.mxu0 0.0
  %2576 = vmatpush1.msra.mxu0 0.0
  %2577 = vmatprep.subr.mxu0 0.0
  %2578 = vmatpush1.msra.mxu0 0.0
  %2579 = vmatprep.subr.mxu0 0.0
  %2580 = vmatpush1.msra.mxu0 0.0
  %2581 = vmatprep.subr.mxu0 0.0
  %2582 = vmatpush1.msra.mxu0 0.0
  %2583 = vmatprep.subr.mxu0 0.0
  %2584 = vmatpush1.msra.mxu0 0.0
  %2585 = vmatprep.subr.mxu0 0.0
  %2586 = vmatpush1.msra.mxu0 0.0
  %2587 = vmatprep.subr.mxu0 0.0
  %2588 = vmatpush1.msra.mxu0 0.0
  %2589 = vmatprep.subr.mxu0 0.0
  %2590 = vmatpush1.msra.mxu0 0.0
  %2591 = vmatprep.subr.mxu0 0.0
  %2592 = vmatpush1.msra.mxu0 0.0
  %2593 = vmatprep.subr.mxu0 0.0
  %2594 = vmatpush1.msra.mxu0 0.0
  %2595 = vmatprep.subr.mxu0 0.0
  %2596 = vmatpush1.msra.mxu0 0.0
  %2597 = vmatprep.subr.mxu0 0.0
  %2598 = vmatpush1.msra.mxu0 0.0
  %2599 = vmatprep.subr.mxu0 0.0
  %2600 = vmatpush1.msra.mxu0 0.0
  %2601 = vmatprep.subr.mxu0 0.0
  %2602 = vmatpush1.msra.mxu0 0.0
  %2603 = vmatprep.subr.mxu0 0.0
  %2604 = vmatpush1.msra.mxu0 0.0
  %2605 = vmatprep.subr.mxu0 0.0
  %2606 = vmatpush1.msra.mxu0 0.0
  %2607 = vmatprep.subr.mxu0 0.0
  %2608 = vmatpush1.msra.mxu0 0.0
  %2609 = vmatprep.subr.mxu0 0.0
  %2610 = vmatpush1.msra.mxu0 0.0
  %2611 = vmatprep.subr.mxu0 0.0
  %2612 = vmatpush1.msra.mxu0 0.0
  %2613 = vmatprep.subr.mxu0 0.0
  %2614 = vmatpush1.msra.mxu0 0.0
  %2615 = vmatprep.subr.mxu0 0.0
  %2616 = vmatpush1.msra.mxu0 0.0
  %2617 = vmatprep.subr.mxu0 0.0
  %2618 = vmatpush1.msra.mxu0 0.0
  %2619 = vmatprep.subr.mxu0 0.0
  %2620 = vmatpush1.msra.mxu0 0.0
  %2621 = vmatprep.subr.mxu0 0.0
  %2622 = vmatpush1.msra.mxu0 0.0
  %2623 = vmatprep.subr.mxu0 0.0
  %2624 = vmatpush1.msra.mxu0 0.0
  %2625 = vmatprep.subr.mxu0 0.0
  %2626 = vmatpush1.msra.mxu0 0.0
  %2627 = vmatprep.subr.mxu0 0.0
  %2628 = vmatpush1.msra.mxu0 0.0
  %2629 = vmatprep.subr.mxu0 0.0
  %2630 = vmatpush1.msra.mxu0 0.0
  %2631 = vmatprep.mubr.f32.mxu0 0.0
  %2632 = vmatmul.mubr.f32.gmra.mrb[0].mxu0 %v2485
  %v2633 = vpop.f32.mrb[0].mxu0
  %v2634 = vadd.f32 0.0, %v2633
  %v2635 = vpop.f32.mrb[0].mxu0
  %v2636 = vadd.f32 0.0, %v2635
  %2637 = vmatprep.mubr.f32.mxu0 0.0
  %2638 = vmatmul.mubr.f32.gmra.mrb[0].mxu0 %v2488
  %v2639 = vpop.f32.mrb[0].mxu0
  %v2640 = vadd.f32 0.0, %v2639
  %v2641 = vpop.f32.mrb[0].mxu0
  %v2642 = vadd.f32 0.0, %v2641
  %2643 = vdwg.mxu0
  %v2644 = vadd.f32 %v2473, %v2557
  %v2645 = vadd.f32 %v2474, %v2559
  %v2646 = vadd.f32 %v2475, %v2634
  %v2647 = vadd.f32 %v2476, %v2636
  %v2648 = vadd.f32 %v2477, %v2563
  %v2649 = vadd.f32 %v2478, %v2565
  %v2650 = vadd.f32 %v2479, %v2640
  %v2651 = vadd.f32 %v2480, %v2642
  %s2652 = scalar_lea.vmem %s4, 80
  %v2653 = vld [vmem:[%s2652] sm:$0xff]
  %v2654 = vld [vmem:[%s2652 + $0x8] sm:$0xff]
  %2655 = vrot.lane.b32.xlu0 %v1746, 127
  %v2656 = vpop.permute.xlu0 %2655
  %2657 = vrot.lane.b32.xlu0 %v1747, 127
  %v2658 = vpop.permute.xlu0 %2657
  %2659 = vrot.lane.b32.xlu0 %v1748, 127
  %v2660 = vpop.permute.xlu0 %2659
  %2661 = vrot.lane.b32.xlu0 %v1749, 127
  %v2662 = vpop.permute.xlu0 %2661
  %v2663 = vsel %vm948, %v2660, %v2662
  %v2664 = vsel %vm948, %v2658, %v2660
  %v2665 = vsel %vm948, %v2656, %v2658
  %v2666 = vsel %vm948, %v2662, %v2656
  %v2667 = vmul.f32 %v2665, %v959
  %v2668 = vmul.f32 %v2664, %v963
  %v2669 = vmul.f32 %v2663, %v967
  %v2670 = vmul.f32 %v2666, %v971
  %v2672 = vsel %vm114, %v2653, 0
  %v2675 = vsel %vm114, %v2654, 0
  %2677 = vmatprep.subr.mxu0 %v2668
  %2678 = vmatpush1.msra.mxu0 %v2667
  %2679 = vmatprep.subr.mxu0 0.0
  %2680 = vmatpush1.msra.mxu0 0.0
  %2681 = vmatprep.subr.mxu0 0.0
  %2682 = vmatpush1.msra.mxu0 0.0
  %2683 = vmatprep.subr.mxu0 0.0
  %2684 = vmatpush1.msra.mxu0 0.0
  %2685 = vmatprep.subr.mxu0 0.0
  %2686 = vmatpush1.msra.mxu0 0.0
  %2687 = vmatprep.subr.mxu0 0.0
  %2688 = vmatpush1.msra.mxu0 0.0
  %2689 = vmatprep.subr.mxu0 0.0
  %2690 = vmatpush1.msra.mxu0 0.0
  %2691 = vmatprep.subr.mxu0 0.0
  %2692 = vmatpush1.msra.mxu0 0.0
  %2693 = vmatprep.subr.mxu0 0.0
  %2694 = vmatpush1.msra.mxu0 0.0
  %2695 = vmatprep.subr.mxu0 0.0
  %2696 = vmatpush1.msra.mxu0 0.0
  %2697 = vmatprep.subr.mxu0 0.0
  %2698 = vmatpush1.msra.mxu0 0.0
  %2699 = vmatprep.subr.mxu0 0.0
  %2700 = vmatpush1.msra.mxu0 0.0
  %2701 = vmatprep.subr.mxu0 0.0
  %2702 = vmatpush1.msra.mxu0 0.0
  %2703 = vmatprep.subr.mxu0 0.0
  %2704 = vmatpush1.msra.mxu0 0.0
  %2705 = vmatprep.subr.mxu0 0.0
  %2706 = vmatpush1.msra.mxu0 0.0
  %2707 = vmatprep.subr.mxu0 0.0
  %2708 = vmatpush1.msra.mxu0 0.0
  %2709 = vmatprep.subr.mxu0 0.0
  %2710 = vmatpush1.msra.mxu0 0.0
  %2711 = vmatprep.subr.mxu0 0.0
  %2712 = vmatpush1.msra.mxu0 0.0
  %2713 = vmatprep.subr.mxu0 0.0
  %2714 = vmatpush1.msra.mxu0 0.0
  %2715 = vmatprep.subr.mxu0 0.0
  %2716 = vmatpush1.msra.mxu0 0.0
  %2717 = vmatprep.subr.mxu0 0.0
  %2718 = vmatpush1.msra.mxu0 0.0
  %2719 = vmatprep.subr.mxu0 0.0
  %2720 = vmatpush1.msra.mxu0 0.0
  %2721 = vmatprep.subr.mxu0 0.0
  %2722 = vmatpush1.msra.mxu0 0.0
  %2723 = vmatprep.subr.mxu0 0.0
  %2724 = vmatpush1.msra.mxu0 0.0
  %2725 = vmatprep.subr.mxu0 0.0
  %2726 = vmatpush1.msra.mxu0 0.0
  %2727 = vmatprep.subr.mxu0 0.0
  %2728 = vmatpush1.msra.mxu0 0.0
  %2729 = vmatprep.subr.mxu0 0.0
  %2730 = vmatpush1.msra.mxu0 0.0
  %2731 = vmatprep.subr.mxu0 0.0
  %2732 = vmatpush1.msra.mxu0 0.0
  %2733 = vmatprep.subr.mxu0 0.0
  %2734 = vmatpush1.msra.mxu0 0.0
  %2735 = vmatprep.subr.mxu0 0.0
  %2736 = vmatpush1.msra.mxu0 0.0
  %2737 = vmatprep.subr.mxu0 0.0
  %2738 = vmatpush1.msra.mxu0 0.0
  %2739 = vmatprep.subr.mxu0 0.0
  %2740 = vmatpush1.msra.mxu0 0.0
  %2741 = vmatprep.mubr.f32.mxu0 0.0
  %2742 = vmatmul.mubr.f32.gmra.mrb[0].mxu0 %v2672
  %v2743 = vpop.f32.mrb[0].mxu0
  %v2744 = vadd.f32 0.0, %v2743
  %v2745 = vpop.f32.mrb[0].mxu0
  %v2746 = vadd.f32 0.0, %v2745
  %2747 = vmatprep.mubr.f32.mxu0 0.0
  %2748 = vmatmul.mubr.f32.gmra.mrb[0].mxu0 %v2675
  %v2749 = vpop.f32.mrb[0].mxu0
  %v2750 = vadd.f32 0.0, %v2749
  %v2751 = vpop.f32.mrb[0].mxu0
  %v2752 = vadd.f32 0.0, %v2751
  %2753 = vdwg.mxu0
  %2754 = vmatprep.subr.mxu0 %v2670
  %2755 = vmatpush1.msra.mxu0 %v2669
  %2756 = vmatprep.subr.mxu0 0.0
  %2757 = vmatpush1.msra.mxu0 0.0
  %2758 = vmatprep.subr.mxu0 0.0
  %2759 = vmatpush1.msra.mxu0 0.0
  %2760 = vmatprep.subr.mxu0 0.0
  %2761 = vmatpush1.msra.mxu0 0.0
  %2762 = vmatprep.subr.mxu0 0.0
  %2763 = vmatpush1.msra.mxu0 0.0
  %2764 = vmatprep.subr.mxu0 0.0
  %2765 = vmatpush1.msra.mxu0 0.0
  %2766 = vmatprep.subr.mxu0 0.0
  %2767 = vmatpush1.msra.mxu0 0.0
  %2768 = vmatprep.subr.mxu0 0.0
  %2769 = vmatpush1.msra.mxu0 0.0
  %2770 = vmatprep.subr.mxu0 0.0
  %2771 = vmatpush1.msra.mxu0 0.0
  %2772 = vmatprep.subr.mxu0 0.0
  %2773 = vmatpush1.msra.mxu0 0.0
  %2774 = vmatprep.subr.mxu0 0.0
  %2775 = vmatpush1.msra.mxu0 0.0
  %2776 = vmatprep.subr.mxu0 0.0
  %2777 = vmatpush1.msra.mxu0 0.0
  %2778 = vmatprep.subr.mxu0 0.0
  %2779 = vmatpush1.msra.mxu0 0.0
  %2780 = vmatprep.subr.mxu0 0.0
  %2781 = vmatpush1.msra.mxu0 0.0
  %2782 = vmatprep.subr.mxu0 0.0
  %2783 = vmatpush1.msra.mxu0 0.0
  %2784 = vmatprep.subr.mxu0 0.0
  %2785 = vmatpush1.msra.mxu0 0.0
  %2786 = vmatprep.subr.mxu0 0.0
  %2787 = vmatpush1.msra.mxu0 0.0
  %2788 = vmatprep.subr.mxu0 0.0
  %2789 = vmatpush1.msra.mxu0 0.0
  %2790 = vmatprep.subr.mxu0 0.0
  %2791 = vmatpush1.msra.mxu0 0.0
  %2792 = vmatprep.subr.mxu0 0.0
  %2793 = vmatpush1.msra.mxu0 0.0
  %2794 = vmatprep.subr.mxu0 0.0
  %2795 = vmatpush1.msra.mxu0 0.0
  %2796 = vmatprep.subr.mxu0 0.0
  %2797 = vmatpush1.msra.mxu0 0.0
  %2798 = vmatprep.subr.mxu0 0.0
  %2799 = vmatpush1.msra.mxu0 0.0
  %2800 = vmatprep.subr.mxu0 0.0
  %2801 = vmatpush1.msra.mxu0 0.0
  %2802 = vmatprep.subr.mxu0 0.0
  %2803 = vmatpush1.msra.mxu0 0.0
  %2804 = vmatprep.subr.mxu0 0.0
  %2805 = vmatpush1.msra.mxu0 0.0
  %2806 = vmatprep.subr.mxu0 0.0
  %2807 = vmatpush1.msra.mxu0 0.0
  %2808 = vmatprep.subr.mxu0 0.0
  %2809 = vmatpush1.msra.mxu0 0.0
  %2810 = vmatprep.subr.mxu0 0.0
  %2811 = vmatpush1.msra.mxu0 0.0
  %2812 = vmatprep.subr.mxu0 0.0
  %2813 = vmatpush1.msra.mxu0 0.0
  %2814 = vmatprep.subr.mxu0 0.0
  %2815 = vmatpush1.msra.mxu0 0.0
  %2816 = vmatprep.subr.mxu0 0.0
  %2817 = vmatpush1.msra.mxu0 0.0
  %2818 = vmatprep.mubr.f32.mxu0 0.0
  %2819 = vmatmul.mubr.f32.gmra.mrb[0].mxu0 %v2672
  %v2820 = vpop.f32.mrb[0].mxu0
  %v2821 = vadd.f32 0.0, %v2820
  %v2822 = vpop.f32.mrb[0].mxu0
  %v2823 = vadd.f32 0.0, %v2822
  %2824 = vmatprep.mubr.f32.mxu0 0.0
  %2825 = vmatmul.mubr.f32.gmra.mrb[0].mxu0 %v2675
  %v2826 = vpop.f32.mrb[0].mxu0
  %v2827 = vadd.f32 0.0, %v2826
  %v2828 = vpop.f32.mrb[0].mxu0
  %v2829 = vadd.f32 0.0, %v2828
  %2830 = vdwg.mxu0
  %v2831 = vadd.f32 %v2644, %v2744
  %v2832 = vadd.f32 %v2645, %v2746
  %v2833 = vadd.f32 %v2646, %v2821
  %v2834 = vadd.f32 %v2647, %v2823
  %v2835 = vadd.f32 %v2648, %v2750
  %v2836 = vadd.f32 %v2649, %v2752
  %v2837 = vadd.f32 %v2650, %v2827
  %v2838 = vadd.f32 %v2651, %v2829
  %s2839 = scalar_lea.vmem %s4, 96
  %v2840 = vld [vmem:[%s2839] sm:$0xff]
  %v2841 = vld [vmem:[%s2839 + $0x8] sm:$0xff]
  %2842 = vrot.lane.b32.xlu0 %v1746, 113
  %v2843 = vpop.permute.xlu0 %2842
  %2844 = vrot.lane.b32.xlu0 %v1747, 113
  %v2845 = vpop.permute.xlu0 %2844
  %2846 = vrot.lane.b32.xlu0 %v1748, 113
  %v2847 = vpop.permute.xlu0 %2846
  %2848 = vrot.lane.b32.xlu0 %v1749, 113
  %v2849 = vpop.permute.xlu0 %2848
  %v2850 = vsel %vm1139, %v2847, %v2849
  %v2851 = vsel %vm1139, %v2845, %v2847
  %v2852 = vsel %vm1139, %v2843, %v2845
  %v2853 = vsel %vm1139, %v2849, %v2843
  %v2854 = vmul.f32 %v2852, %v1150
  %v2855 = vmul.f32 %v2851, %v1154
  %v2856 = vmul.f32 %v2850, %v1158
  %v2857 = vmul.f32 %v2853, %v1162
  %v2859 = vsel %vm114, %v2840, 0
  %v2862 = vsel %vm114, %v2841, 0
  %2864 = vmatprep.subr.mxu0 %v2855
  %2865 = vmatpush1.msra.mxu0 %v2854
  %2866 = vmatprep.subr.mxu0 0.0
  %2867 = vmatpush1.msra.mxu0 0.0
  %2868 = vmatprep.subr.mxu0 0.0
  %2869 = vmatpush1.msra.mxu0 0.0
  %2870 = vmatprep.subr.mxu0 0.0
  %2871 = vmatpush1.msra.mxu0 0.0
  %2872 = vmatprep.subr.mxu0 0.0
  %2873 = vmatpush1.msra.mxu0 0.0
  %2874 = vmatprep.subr.mxu0 0.0
  %2875 = vmatpush1.msra.mxu0 0.0
  %2876 = vmatprep.subr.mxu0 0.0
  %2877 = vmatpush1.msra.mxu0 0.0
  %2878 = vmatprep.subr.mxu0 0.0
  %2879 = vmatpush1.msra.mxu0 0.0
  %2880 = vmatprep.subr.mxu0 0.0
  %2881 = vmatpush1.msra.mxu0 0.0
  %2882 = vmatprep.subr.mxu0 0.0
  %2883 = vmatpush1.msra.mxu0 0.0
  %2884 = vmatprep.subr.mxu0 0.0
  %2885 = vmatpush1.msra.mxu0 0.0
  %2886 = vmatprep.subr.mxu0 0.0
  %2887 = vmatpush1.msra.mxu0 0.0
  %2888 = vmatprep.subr.mxu0 0.0
  %2889 = vmatpush1.msra.mxu0 0.0
  %2890 = vmatprep.subr.mxu0 0.0
  %2891 = vmatpush1.msra.mxu0 0.0
  %2892 = vmatprep.subr.mxu0 0.0
  %2893 = vmatpush1.msra.mxu0 0.0
  %2894 = vmatprep.subr.mxu0 0.0
  %2895 = vmatpush1.msra.mxu0 0.0
  %2896 = vmatprep.subr.mxu0 0.0
  %2897 = vmatpush1.msra.mxu0 0.0
  %2898 = vmatprep.subr.mxu0 0.0
  %2899 = vmatpush1.msra.mxu0 0.0
  %2900 = vmatprep.subr.mxu0 0.0
  %2901 = vmatpush1.msra.mxu0 0.0
  %2902 = vmatprep.subr.mxu0 0.0
  %2903 = vmatpush1.msra.mxu0 0.0
  %2904 = vmatprep.subr.mxu0 0.0
  %2905 = vmatpush1.msra.mxu0 0.0
  %2906 = vmatprep.subr.mxu0 0.0
  %2907 = vmatpush1.msra.mxu0 0.0
  %2908 = vmatprep.subr.mxu0 0.0
  %2909 = vmatpush1.msra.mxu0 0.0
  %2910 = vmatprep.subr.mxu0 0.0
  %2911 = vmatpush1.msra.mxu0 0.0
  %2912 = vmatprep.subr.mxu0 0.0
  %2913 = vmatpush1.msra.mxu0 0.0
  %2914 = vmatprep.subr.mxu0 0.0
  %2915 = vmatpush1.msra.mxu0 0.0
  %2916 = vmatprep.subr.mxu0 0.0
  %2917 = vmatpush1.msra.mxu0 0.0
  %2918 = vmatprep.subr.mxu0 0.0
  %2919 = vmatpush1.msra.mxu0 0.0
  %2920 = vmatprep.subr.mxu0 0.0
  %2921 = vmatpush1.msra.mxu0 0.0
  %2922 = vmatprep.subr.mxu0 0.0
  %2923 = vmatpush1.msra.mxu0 0.0
  %2924 = vmatprep.subr.mxu0 0.0
  %2925 = vmatpush1.msra.mxu0 0.0
  %2926 = vmatprep.subr.mxu0 0.0
  %2927 = vmatpush1.msra.mxu0 0.0
  %2928 = vmatprep.mubr.f32.mxu0 0.0
  %2929 = vmatmul.mubr.f32.gmra.mrb[0].mxu0 %v2859
  %v2930 = vpop.f32.mrb[0].mxu0
  %v2931 = vadd.f32 0.0, %v2930
  %v2932 = vpop.f32.mrb[0].mxu0
  %v2933 = vadd.f32 0.0, %v2932
  %2934 = vmatprep.mubr.f32.mxu0 0.0
  %2935 = vmatmul.mubr.f32.gmra.mrb[0].mxu0 %v2862
  %v2936 = vpop.f32.mrb[0].mxu0
  %v2937 = vadd.f32 0.0, %v2936
  %v2938 = vpop.f32.mrb[0].mxu0
  %v2939 = vadd.f32 0.0, %v2938
  %2940 = vdwg.mxu0
  %2941 = vmatprep.subr.mxu0 %v2857
  %2942 = vmatpush1.msra.mxu0 %v2856
  %2943 = vmatprep.subr.mxu0 0.0
  %2944 = vmatpush1.msra.mxu0 0.0
  %2945 = vmatprep.subr.mxu0 0.0
  %2946 = vmatpush1.msra.mxu0 0.0
  %2947 = vmatprep.subr.mxu0 0.0
  %2948 = vmatpush1.msra.mxu0 0.0
  %2949 = vmatprep.subr.mxu0 0.0
  %2950 = vmatpush1.msra.mxu0 0.0
  %2951 = vmatprep.subr.mxu0 0.0
  %2952 = vmatpush1.msra.mxu0 0.0
  %2953 = vmatprep.subr.mxu0 0.0
  %2954 = vmatpush1.msra.mxu0 0.0
  %2955 = vmatprep.subr.mxu0 0.0
  %2956 = vmatpush1.msra.mxu0 0.0
  %2957 = vmatprep.subr.mxu0 0.0
  %2958 = vmatpush1.msra.mxu0 0.0
  %2959 = vmatprep.subr.mxu0 0.0
  %2960 = vmatpush1.msra.mxu0 0.0
  %2961 = vmatprep.subr.mxu0 0.0
  %2962 = vmatpush1.msra.mxu0 0.0
  %2963 = vmatprep.subr.mxu0 0.0
  %2964 = vmatpush1.msra.mxu0 0.0
  %2965 = vmatprep.subr.mxu0 0.0
  %2966 = vmatpush1.msra.mxu0 0.0
  %2967 = vmatprep.subr.mxu0 0.0
  %2968 = vmatpush1.msra.mxu0 0.0
  %2969 = vmatprep.subr.mxu0 0.0
  %2970 = vmatpush1.msra.mxu0 0.0
  %2971 = vmatprep.subr.mxu0 0.0
  %2972 = vmatpush1.msra.mxu0 0.0
  %2973 = vmatprep.subr.mxu0 0.0
  %2974 = vmatpush1.msra.mxu0 0.0
  %2975 = vmatprep.subr.mxu0 0.0
  %2976 = vmatpush1.msra.mxu0 0.0
  %2977 = vmatprep.subr.mxu0 0.0
  %2978 = vmatpush1.msra.mxu0 0.0
  %2979 = vmatprep.subr.mxu0 0.0
  %2980 = vmatpush1.msra.mxu0 0.0
  %2981 = vmatprep.subr.mxu0 0.0
  %2982 = vmatpush1.msra.mxu0 0.0
  %2983 = vmatprep.subr.mxu0 0.0
  %2984 = vmatpush1.msra.mxu0 0.0
  %2985 = vmatprep.subr.mxu0 0.0
  %2986 = vmatpush1.msra.mxu0 0.0
  %2987 = vmatprep.subr.mxu0 0.0
  %2988 = vmatpush1.msra.mxu0 0.0
  %2989 = vmatprep.subr.mxu0 0.0
  %2990 = vmatpush1.msra.mxu0 0.0
  %2991 = vmatprep.subr.mxu0 0.0
  %2992 = vmatpush1.msra.mxu0 0.0
  %2993 = vmatprep.subr.mxu0 0.0
  %2994 = vmatpush1.msra.mxu0 0.0
  %2995 = vmatprep.subr.mxu0 0.0
  %2996 = vmatpush1.msra.mxu0 0.0
  %2997 = vmatprep.subr.mxu0 0.0
  %2998 = vmatpush1.msra.mxu0 0.0
  %2999 = vmatprep.subr.mxu0 0.0
  %3000 = vmatpush1.msra.mxu0 0.0
  %3001 = vmatprep.subr.mxu0 0.0
  %3002 = vmatpush1.msra.mxu0 0.0
  %3003 = vmatprep.subr.mxu0 0.0
  %3004 = vmatpush1.msra.mxu0 0.0
  %3005 = vmatprep.mubr.f32.mxu0 0.0
  %3006 = vmatmul.mubr.f32.gmra.mrb[0].mxu0 %v2859
  %v3007 = vpop.f32.mrb[0].mxu0
  %v3008 = vadd.f32 0.0, %v3007
  %v3009 = vpop.f32.mrb[0].mxu0
  %v3010 = vadd.f32 0.0, %v3009
  %3011 = vmatprep.mubr.f32.mxu0 0.0
  %3012 = vmatmul.mubr.f32.gmra.mrb[0].mxu0 %v2862
  %v3013 = vpop.f32.mrb[0].mxu0
  %v3014 = vadd.f32 0.0, %v3013
  %v3015 = vpop.f32.mrb[0].mxu0
  %v3016 = vadd.f32 0.0, %v3015
  %3017 = vdwg.mxu0
  %v3018 = vadd.f32 %v2831, %v2931
  %v3019 = vadd.f32 %v2832, %v2933
  %v3020 = vadd.f32 %v2833, %v3008
  %v3021 = vadd.f32 %v2834, %v3010
  %v3022 = vadd.f32 %v2835, %v2937
  %v3023 = vadd.f32 %v2836, %v2939
  %v3024 = vadd.f32 %v2837, %v3014
  %v3025 = vadd.f32 %v2838, %v3016
  %s3026 = scalar_lea.vmem %s4, 112
  %v3027 = vld [vmem:[%s3026] sm:$0xff]
  %v3028 = vld [vmem:[%s3026 + $0x8] sm:$0xff]
  %3029 = vrot.lane.b32.xlu0 %v1746, 112
  %v3030 = vpop.permute.xlu0 %3029
  %3031 = vrot.lane.b32.xlu0 %v1747, 112
  %v3032 = vpop.permute.xlu0 %3031
  %3033 = vrot.lane.b32.xlu0 %v1748, 112
  %v3034 = vpop.permute.xlu0 %3033
  %3035 = vrot.lane.b32.xlu0 %v1749, 112
  %v3036 = vpop.permute.xlu0 %3035
  %v3037 = vsel %vm1330, %v3034, %v3036
  %v3038 = vsel %vm1330, %v3032, %v3034
  %v3039 = vsel %vm1330, %v3030, %v3032
  %v3040 = vsel %vm1330, %v3036, %v3030
  %v3041 = vmul.f32 %v3039, %v1341
  %v3042 = vmul.f32 %v3038, %v1345
  %v3043 = vmul.f32 %v3037, %v1349
  %v3044 = vmul.f32 %v3040, %v1353
  %v3046 = vsel %vm114, %v3027, 0
  %v3049 = vsel %vm114, %v3028, 0
  %3051 = vmatprep.subr.mxu0 %v3042
  %3052 = vmatpush1.msra.mxu0 %v3041
  %3053 = vmatprep.subr.mxu0 0.0
  %3054 = vmatpush1.msra.mxu0 0.0
  %3055 = vmatprep.subr.mxu0 0.0
  %3056 = vmatpush1.msra.mxu0 0.0
  %3057 = vmatprep.subr.mxu0 0.0
  %3058 = vmatpush1.msra.mxu0 0.0
  %3059 = vmatprep.subr.mxu0 0.0
  %3060 = vmatpush1.msra.mxu0 0.0
  %3061 = vmatprep.subr.mxu0 0.0
  %3062 = vmatpush1.msra.mxu0 0.0
  %3063 = vmatprep.subr.mxu0 0.0
  %3064 = vmatpush1.msra.mxu0 0.0
  %3065 = vmatprep.subr.mxu0 0.0
  %3066 = vmatpush1.msra.mxu0 0.0
  %3067 = vmatprep.subr.mxu0 0.0
  %3068 = vmatpush1.msra.mxu0 0.0
  %3069 = vmatprep.subr.mxu0 0.0
  %3070 = vmatpush1.msra.mxu0 0.0
  %3071 = vmatprep.subr.mxu0 0.0
  %3072 = vmatpush1.msra.mxu0 0.0
  %3073 = vmatprep.subr.mxu0 0.0
  %3074 = vmatpush1.msra.mxu0 0.0
  %3075 = vmatprep.subr.mxu0 0.0
  %3076 = vmatpush1.msra.mxu0 0.0
  %3077 = vmatprep.subr.mxu0 0.0
  %3078 = vmatpush1.msra.mxu0 0.0
  %3079 = vmatprep.subr.mxu0 0.0
  %3080 = vmatpush1.msra.mxu0 0.0
  %3081 = vmatprep.subr.mxu0 0.0
  %3082 = vmatpush1.msra.mxu0 0.0
  %3083 = vmatprep.subr.mxu0 0.0
  %3084 = vmatpush1.msra.mxu0 0.0
  %3085 = vmatprep.subr.mxu0 0.0
  %3086 = vmatpush1.msra.mxu0 0.0
  %3087 = vmatprep.subr.mxu0 0.0
  %3088 = vmatpush1.msra.mxu0 0.0
  %3089 = vmatprep.subr.mxu0 0.0
  %3090 = vmatpush1.msra.mxu0 0.0
  %3091 = vmatprep.subr.mxu0 0.0
  %3092 = vmatpush1.msra.mxu0 0.0
  %3093 = vmatprep.subr.mxu0 0.0
  %3094 = vmatpush1.msra.mxu0 0.0
  %3095 = vmatprep.subr.mxu0 0.0
  %3096 = vmatpush1.msra.mxu0 0.0
  %3097 = vmatprep.subr.mxu0 0.0
  %3098 = vmatpush1.msra.mxu0 0.0
  %3099 = vmatprep.subr.mxu0 0.0
  %3100 = vmatpush1.msra.mxu0 0.0
  %3101 = vmatprep.subr.mxu0 0.0
  %3102 = vmatpush1.msra.mxu0 0.0
  %3103 = vmatprep.subr.mxu0 0.0
  %3104 = vmatpush1.msra.mxu0 0.0
  %3105 = vmatprep.subr.mxu0 0.0
  %3106 = vmatpush1.msra.mxu0 0.0
  %3107 = vmatprep.subr.mxu0 0.0
  %3108 = vmatpush1.msra.mxu0 0.0
  %3109 = vmatprep.subr.mxu0 0.0
  %3110 = vmatpush1.msra.mxu0 0.0
  %3111 = vmatprep.subr.mxu0 0.0
  %3112 = vmatpush1.msra.mxu0 0.0
  %3113 = vmatprep.subr.mxu0 0.0
  %3114 = vmatpush1.msra.mxu0 0.0
  %3115 = vmatprep.mubr.f32.mxu0 0.0
  %3116 = vmatmul.mubr.f32.gmra.mrb[0].mxu0 %v3046
  %v3117 = vpop.f32.mrb[0].mxu0
  %v3118 = vadd.f32 0.0, %v3117
  %v3119 = vpop.f32.mrb[0].mxu0
  %v3120 = vadd.f32 0.0, %v3119
  %3121 = vmatprep.mubr.f32.mxu0 0.0
  %3122 = vmatmul.mubr.f32.gmra.mrb[0].mxu0 %v3049
  %v3123 = vpop.f32.mrb[0].mxu0
  %v3124 = vadd.f32 0.0, %v3123
  %v3125 = vpop.f32.mrb[0].mxu0
  %v3126 = vadd.f32 0.0, %v3125
  %3127 = vdwg.mxu0
  %3128 = vmatprep.subr.mxu0 %v3044
  %3129 = vmatpush1.msra.mxu0 %v3043
  %3130 = vmatprep.subr.mxu0 0.0
  %3131 = vmatpush1.msra.mxu0 0.0
  %3132 = vmatprep.subr.mxu0 0.0
  %3133 = vmatpush1.msra.mxu0 0.0
  %3134 = vmatprep.subr.mxu0 0.0
  %3135 = vmatpush1.msra.mxu0 0.0
  %3136 = vmatprep.subr.mxu0 0.0
  %3137 = vmatpush1.msra.mxu0 0.0
  %3138 = vmatprep.subr.mxu0 0.0
  %3139 = vmatpush1.msra.mxu0 0.0
  %3140 = vmatprep.subr.mxu0 0.0
  %3141 = vmatpush1.msra.mxu0 0.0
  %3142 = vmatprep.subr.mxu0 0.0
  %3143 = vmatpush1.msra.mxu0 0.0
  %3144 = vmatprep.subr.mxu0 0.0
  %3145 = vmatpush1.msra.mxu0 0.0
  %3146 = vmatprep.subr.mxu0 0.0
  %3147 = vmatpush1.msra.mxu0 0.0
  %3148 = vmatprep.subr.mxu0 0.0
  %3149 = vmatpush1.msra.mxu0 0.0
  %3150 = vmatprep.subr.mxu0 0.0
  %3151 = vmatpush1.msra.mxu0 0.0
  %3152 = vmatprep.subr.mxu0 0.0
  %3153 = vmatpush1.msra.mxu0 0.0
  %3154 = vmatprep.subr.mxu0 0.0
  %3155 = vmatpush1.msra.mxu0 0.0
  %3156 = vmatprep.subr.mxu0 0.0
  %3157 = vmatpush1.msra.mxu0 0.0
  %3158 = vmatprep.subr.mxu0 0.0
  %3159 = vmatpush1.msra.mxu0 0.0
  %3160 = vmatprep.subr.mxu0 0.0
  %3161 = vmatpush1.msra.mxu0 0.0
  %3162 = vmatprep.subr.mxu0 0.0
  %3163 = vmatpush1.msra.mxu0 0.0
  %3164 = vmatprep.subr.mxu0 0.0
  %3165 = vmatpush1.msra.mxu0 0.0
  %3166 = vmatprep.subr.mxu0 0.0
  %3167 = vmatpush1.msra.mxu0 0.0
  %3168 = vmatprep.subr.mxu0 0.0
  %3169 = vmatpush1.msra.mxu0 0.0
  %3170 = vmatprep.subr.mxu0 0.0
  %3171 = vmatpush1.msra.mxu0 0.0
  %3172 = vmatprep.subr.mxu0 0.0
  %3173 = vmatpush1.msra.mxu0 0.0
  %3174 = vmatprep.subr.mxu0 0.0
  %3175 = vmatpush1.msra.mxu0 0.0
  %3176 = vmatprep.subr.mxu0 0.0
  %3177 = vmatpush1.msra.mxu0 0.0
  %3178 = vmatprep.subr.mxu0 0.0
  %3179 = vmatpush1.msra.mxu0 0.0
  %3180 = vmatprep.subr.mxu0 0.0
  %3181 = vmatpush1.msra.mxu0 0.0
  %3182 = vmatprep.subr.mxu0 0.0
  %3183 = vmatpush1.msra.mxu0 0.0
  %3184 = vmatprep.subr.mxu0 0.0
  %3185 = vmatpush1.msra.mxu0 0.0
  %3186 = vmatprep.subr.mxu0 0.0
  %3187 = vmatpush1.msra.mxu0 0.0
  %3188 = vmatprep.subr.mxu0 0.0
  %3189 = vmatpush1.msra.mxu0 0.0
  %3190 = vmatprep.subr.mxu0 0.0
  %3191 = vmatpush1.msra.mxu0 0.0
  %3192 = vmatprep.mubr.f32.mxu0 0.0
  %3193 = vmatmul.mubr.f32.gmra.mrb[0].mxu0 %v3046
  %v3194 = vpop.f32.mrb[0].mxu0
  %v3195 = vadd.f32 0.0, %v3194
  %v3196 = vpop.f32.mrb[0].mxu0
  %v3197 = vadd.f32 0.0, %v3196
  %3198 = vmatprep.mubr.f32.mxu0 0.0
  %3199 = vmatmul.mubr.f32.gmra.mrb[0].mxu0 %v3049
  %v3200 = vpop.f32.mrb[0].mxu0
  %v3201 = vadd.f32 0.0, %v3200
  %v3202 = vpop.f32.mrb[0].mxu0
  %v3203 = vadd.f32 0.0, %v3202
  %3204 = vdwg.mxu0
  %v3205 = vadd.f32 %v3018, %v3118
  %v3206 = vadd.f32 %v3019, %v3120
  %v3207 = vadd.f32 %v3020, %v3195
  %v3208 = vadd.f32 %v3021, %v3197
  %v3209 = vadd.f32 %v3022, %v3124
  %v3210 = vadd.f32 %v3023, %v3126
  %v3211 = vadd.f32 %v3024, %v3201
  %v3212 = vadd.f32 %v3025, %v3203
  %s3213 = scalar_lea.vmem %s4, 128
  %v3214 = vld [vmem:[%s3213] sm:$0xff]
  %v3215 = vld [vmem:[%s3213 + $0x8] sm:$0xff]
  %3216 = vrot.lane.b32.xlu0 %v1746, 111
  %v3217 = vpop.permute.xlu0 %3216
  %3218 = vrot.lane.b32.xlu0 %v1747, 111
  %v3219 = vpop.permute.xlu0 %3218
  %3220 = vrot.lane.b32.xlu0 %v1748, 111
  %v3221 = vpop.permute.xlu0 %3220
  %3222 = vrot.lane.b32.xlu0 %v1749, 111
  %v3223 = vpop.permute.xlu0 %3222
  %v3224 = vsel %vm1521, %v3221, %v3223
  %v3225 = vsel %vm1521, %v3219, %v3221
  %v3226 = vsel %vm1521, %v3217, %v3219
  %v3227 = vsel %vm1521, %v3223, %v3217
  %v3228 = vmul.f32 %v3226, %v1532
  %v3229 = vmul.f32 %v3225, %v1536
  %v3230 = vmul.f32 %v3224, %v1540
  %v3231 = vmul.f32 %v3227, %v1544
  %v3233 = vsel %vm114, %v3214, 0
  %v3236 = vsel %vm114, %v3215, 0
  %3238 = vmatprep.subr.mxu0 %v3229
  %3239 = vmatpush1.msra.mxu0 %v3228
  %3240 = vmatprep.subr.mxu0 0.0
  %3241 = vmatpush1.msra.mxu0 0.0
  %3242 = vmatprep.subr.mxu0 0.0
  %3243 = vmatpush1.msra.mxu0 0.0
  %3244 = vmatprep.subr.mxu0 0.0
  %3245 = vmatpush1.msra.mxu0 0.0
  %3246 = vmatprep.subr.mxu0 0.0
  %3247 = vmatpush1.msra.mxu0 0.0
  %3248 = vmatprep.subr.mxu0 0.0
  %3249 = vmatpush1.msra.mxu0 0.0
  %3250 = vmatprep.subr.mxu0 0.0
  %3251 = vmatpush1.msra.mxu0 0.0
  %3252 = vmatprep.subr.mxu0 0.0
  %3253 = vmatpush1.msra.mxu0 0.0
  %3254 = vmatprep.subr.mxu0 0.0
  %3255 = vmatpush1.msra.mxu0 0.0
  %3256 = vmatprep.subr.mxu0 0.0
  %3257 = vmatpush1.msra.mxu0 0.0
  %3258 = vmatprep.subr.mxu0 0.0
  %3259 = vmatpush1.msra.mxu0 0.0
  %3260 = vmatprep.subr.mxu0 0.0
  %3261 = vmatpush1.msra.mxu0 0.0
  %3262 = vmatprep.subr.mxu0 0.0
  %3263 = vmatpush1.msra.mxu0 0.0
  %3264 = vmatprep.subr.mxu0 0.0
  %3265 = vmatpush1.msra.mxu0 0.0
  %3266 = vmatprep.subr.mxu0 0.0
  %3267 = vmatpush1.msra.mxu0 0.0
  %3268 = vmatprep.subr.mxu0 0.0
  %3269 = vmatpush1.msra.mxu0 0.0
  %3270 = vmatprep.subr.mxu0 0.0
  %3271 = vmatpush1.msra.mxu0 0.0
  %3272 = vmatprep.subr.mxu0 0.0
  %3273 = vmatpush1.msra.mxu0 0.0
  %3274 = vmatprep.subr.mxu0 0.0
  %3275 = vmatpush1.msra.mxu0 0.0
  %3276 = vmatprep.subr.mxu0 0.0
  %3277 = vmatpush1.msra.mxu0 0.0
  %3278 = vmatprep.subr.mxu0 0.0
  %3279 = vmatpush1.msra.mxu0 0.0
  %3280 = vmatprep.subr.mxu0 0.0
  %3281 = vmatpush1.msra.mxu0 0.0
  %3282 = vmatprep.subr.mxu0 0.0
  %3283 = vmatpush1.msra.mxu0 0.0
  %3284 = vmatprep.subr.mxu0 0.0
  %3285 = vmatpush1.msra.mxu0 0.0
  %3286 = vmatprep.subr.mxu0 0.0
  %3287 = vmatpush1.msra.mxu0 0.0
  %3288 = vmatprep.subr.mxu0 0.0
  %3289 = vmatpush1.msra.mxu0 0.0
  %3290 = vmatprep.subr.mxu0 0.0
  %3291 = vmatpush1.msra.mxu0 0.0
  %3292 = vmatprep.subr.mxu0 0.0
  %3293 = vmatpush1.msra.mxu0 0.0
  %3294 = vmatprep.subr.mxu0 0.0
  %3295 = vmatpush1.msra.mxu0 0.0
  %3296 = vmatprep.subr.mxu0 0.0
  %3297 = vmatpush1.msra.mxu0 0.0
  %3298 = vmatprep.subr.mxu0 0.0
  %3299 = vmatpush1.msra.mxu0 0.0
  %3300 = vmatprep.subr.mxu0 0.0
  %3301 = vmatpush1.msra.mxu0 0.0
  %3302 = vmatprep.mubr.f32.mxu0 0.0
  %3303 = vmatmul.mubr.f32.gmra.mrb[0].mxu0 %v3233
  %v3304 = vpop.f32.mrb[0].mxu0
  %v3305 = vadd.f32 0.0, %v3304
  %v3306 = vpop.f32.mrb[0].mxu0
  %v3307 = vadd.f32 0.0, %v3306
  %3308 = vmatprep.mubr.f32.mxu0 0.0
  %3309 = vmatmul.mubr.f32.gmra.mrb[0].mxu0 %v3236
  %v3310 = vpop.f32.mrb[0].mxu0
  %v3311 = vadd.f32 0.0, %v3310
  %v3312 = vpop.f32.mrb[0].mxu0
  %v3313 = vadd.f32 0.0, %v3312
  %3314 = vdwg.mxu0
  %3315 = vmatprep.subr.mxu0 %v3231
  %3316 = vmatpush1.msra.mxu0 %v3230
  %3317 = vmatprep.subr.mxu0 0.0
  %3318 = vmatpush1.msra.mxu0 0.0
  %3319 = vmatprep.subr.mxu0 0.0
  %3320 = vmatpush1.msra.mxu0 0.0
  %3321 = vmatprep.subr.mxu0 0.0
  %3322 = vmatpush1.msra.mxu0 0.0
  %3323 = vmatprep.subr.mxu0 0.0
  %3324 = vmatpush1.msra.mxu0 0.0
  %3325 = vmatprep.subr.mxu0 0.0
  %3326 = vmatpush1.msra.mxu0 0.0
  %3327 = vmatprep.subr.mxu0 0.0
  %3328 = vmatpush1.msra.mxu0 0.0
  %3329 = vmatprep.subr.mxu0 0.0
  %3330 = vmatpush1.msra.mxu0 0.0
  %3331 = vmatprep.subr.mxu0 0.0
  %3332 = vmatpush1.msra.mxu0 0.0
  %3333 = vmatprep.subr.mxu0 0.0
  %3334 = vmatpush1.msra.mxu0 0.0
  %3335 = vmatprep.subr.mxu0 0.0
  %3336 = vmatpush1.msra.mxu0 0.0
  %3337 = vmatprep.subr.mxu0 0.0
  %3338 = vmatpush1.msra.mxu0 0.0
  %3339 = vmatprep.subr.mxu0 0.0
  %3340 = vmatpush1.msra.mxu0 0.0
  %3341 = vmatprep.subr.mxu0 0.0
  %3342 = vmatpush1.msra.mxu0 0.0
  %3343 = vmatprep.subr.mxu0 0.0
  %3344 = vmatpush1.msra.mxu0 0.0
  %3345 = vmatprep.subr.mxu0 0.0
  %3346 = vmatpush1.msra.mxu0 0.0
  %3347 = vmatprep.subr.mxu0 0.0
  %3348 = vmatpush1.msra.mxu0 0.0
  %3349 = vmatprep.subr.mxu0 0.0
  %3350 = vmatpush1.msra.mxu0 0.0
  %3351 = vmatprep.subr.mxu0 0.0
  %3352 = vmatpush1.msra.mxu0 0.0
  %3353 = vmatprep.subr.mxu0 0.0
  %3354 = vmatpush1.msra.mxu0 0.0
  %3355 = vmatprep.subr.mxu0 0.0
  %3356 = vmatpush1.msra.mxu0 0.0
  %3357 = vmatprep.subr.mxu0 0.0
  %3358 = vmatpush1.msra.mxu0 0.0
  %3359 = vmatprep.subr.mxu0 0.0
  %3360 = vmatpush1.msra.mxu0 0.0
  %3361 = vmatprep.subr.mxu0 0.0
  %3362 = vmatpush1.msra.mxu0 0.0
  %3363 = vmatprep.subr.mxu0 0.0
  %3364 = vmatpush1.msra.mxu0 0.0
  %3365 = vmatprep.subr.mxu0 0.0
  %3366 = vmatpush1.msra.mxu0 0.0
  %3367 = vmatprep.subr.mxu0 0.0
  %3368 = vmatpush1.msra.mxu0 0.0
  %3369 = vmatprep.subr.mxu0 0.0
  %3370 = vmatpush1.msra.mxu0 0.0
  %3371 = vmatprep.subr.mxu0 0.0
  %3372 = vmatpush1.msra.mxu0 0.0
  %3373 = vmatprep.subr.mxu0 0.0
  %3374 = vmatpush1.msra.mxu0 0.0
  %3375 = vmatprep.subr.mxu0 0.0
  %3376 = vmatpush1.msra.mxu0 0.0
  %3377 = vmatprep.subr.mxu0 0.0
  %3378 = vmatpush1.msra.mxu0 0.0
  %3379 = vmatprep.mubr.f32.mxu0 0.0
  %3380 = vmatmul.mubr.f32.gmra.mrb[0].mxu0 %v3233
  %v3381 = vpop.f32.mrb[0].mxu0
  %v3382 = vadd.f32 0.0, %v3381
  %v3383 = vpop.f32.mrb[0].mxu0
  %v3384 = vadd.f32 0.0, %v3383
  %3385 = vmatprep.mubr.f32.mxu0 0.0
  %3386 = vmatmul.mubr.f32.gmra.mrb[0].mxu0 %v3236
  %v3387 = vpop.f32.mrb[0].mxu0
  %v3388 = vadd.f32 0.0, %v3387
  %v3389 = vpop.f32.mrb[0].mxu0
  %v3390 = vadd.f32 0.0, %v3389
  %3391 = vdwg.mxu0
  %v3392 = vadd.f32 %v3205, %v3305
  %v3393 = vadd.f32 %v3206, %v3307
  %v3394 = vadd.f32 %v3207, %v3382
  %v3395 = vadd.f32 %v3208, %v3384
  %v3396 = vadd.f32 %v3209, %v3311
  %v3397 = vadd.f32 %v3210, %v3313
  %v3398 = vadd.f32 %v3211, %v3388
  %v3399 = vadd.f32 %v3212, %v3390
  %v3400 = vld [vmem:[%s5] sm:$0xff]
  %v3401 = vld [vmem:[%s5 + $0x8] sm:$0xff]
  %3403 = vset.pattern.permute.xlu0 0
  %3404 = vperm.xlu0 %3403, %v3400
  %v3405 = vpop.permute.xlu0 %3404
  %3408 = vset.pattern.permute.xlu0 0
  %3409 = vperm.xlu0 %3408, %v3401
  %v3410 = vpop.permute.xlu0 %3409
  %v3412 = vadd.f32 %v3392, %v3405
  %v3413 = vadd.f32 %v3393, %v3405
  %v3414 = vadd.f32 %v3394, %v3405
  %v3415 = vadd.f32 %v3395, %v3405
  %v3416 = vadd.f32 %v3396, %v3410
  %v3417 = vadd.f32 %v3397, %v3410
  %v3418 = vadd.f32 %v3398, %v3410
  %v3419 = vadd.f32 %v3399, %v3410
  %3420 = vst [vmem:[%s7] sm:$0xff] %v3412
  %3421 = vst [vmem:[%s7 + $0x8] sm:$0xff] %v3413
  %3422 = vst [vmem:[%s7 + $0x10] sm:$0xff] %v3414
  %3423 = vst [vmem:[%s7 + $0x18] sm:$0xff] %v3415
  %3424 = vst [vmem:[%s7 + $0x20] sm:$0xff] %v3416
  %3425 = vst [vmem:[%s7 + $0x28] sm:$0xff] %v3417
  %3426 = vst [vmem:[%s7 + $0x30] sm:$0xff] %v3418
  %3427 = vst [vmem:[%s7 + $0x38] sm:$0xff] %v3419
  // Predicated region
  $region30: #{unpack_layer_conv3d.1} parent=0 // pred_check
    _
  $region31: #{unpack_layer_conv3d.1} parent=0 // pred_check_branch
    %3429 = sbr.rel (0) target = $region33
  $region32: #{unpack_layer_conv3d.1} parent=0 // pred_region
    _
  $region33: #{unpack_layer_conv3d.1} parent=0 // pred_fallthru
    _
  // Predicated region
  $region34: #{unpack_layer_conv3d.1} parent=0 // pred_check
    _
  $region35: #{unpack_layer_conv3d.1} parent=0 // pred_check_branch
    %3431 = sbr.rel (0) target = $region37
  $region36: #{unpack_layer_conv3d.1} parent=0 // pred_region
    _
  $region37: #{unpack_layer_conv3d.1} parent=0 // pred_fallthru
    _

</llo_original>
